<compile_context>
chip_gen: v5e
topology: v5e:2x2
jax: 0.10.0
libtpu: 0.0.40
codegen_flags: <defaults>
</compile_context>

<pallas_src>
import functools

import jax
import jax.numpy as jnp
from jax.experimental import pallas as pl
from jax.experimental.pallas import tpu as pltpu


def _fused_bilstm_cell(ic, h, c, w_hh, b, H2):
    """One fused (fwd+bwd) LSTM step.

    ic   : (B, 4*H2) fused input contribution, gate blocks [I|F|G|O], each of width
           H2 = 2H laid out as [gate_fwd | gate_bwd].
    h, c : (B, H2)   fused state, lanes [0:H] forward, [H:2H] backward.
    w_hh : (H2, 4*H2) block-diagonal recurrent weight (fwd rows feed only fwd lanes).
    b    : (1, 4*H2) fused bias (b_ih + b_hh).
    """
    gates = ic + jnp.dot(h, w_hh, preferred_element_type=jnp.float32) + b
    sig = jax.nn.sigmoid(gates)          # one pass over the full fused gate vector
    tnh = jnp.tanh(gates)
    i = sig[:, 0 * H2:1 * H2]
    f = sig[:, 1 * H2:2 * H2]
    g = tnh[:, 2 * H2:3 * H2]
    o = sig[:, 3 * H2:4 * H2]
    c_new = f * c + i * g
    h_new = o * jnp.tanh(c_new)
    return h_new, c_new


def _eeg_lstm_kernel(xcol_ref, w0_ref, whh0_ref, b0_ref,
                     w1_ref, whh1_ref, b1_ref,
                     fc1w_ref, fc1b_ref, fc2w_ref, fc2b_ref,
                     out_ref, l0_ref, *, batch, seq_len, hidden_dim):
    B, T, H = batch, seq_len, hidden_dim
    H2, H8 = 2 * H, 8 * H
    zeros = jnp.zeros((B, H2), jnp.float32)

    # ---- Layer 0 ------------------------------------------------------------------
    # Input size is 1, so the whole input projection (all timesteps, both directions)
    # is one hoisted broadcast multiply:
    #   proj0[t*B + b, 0:8H]   = x[b, t] * W_ih0_fwd (expanded to fused gate lanes)
    #   proj0[t*B + b, 8H:16H] = x[b, t] * W_ih0_bwd (expanded to fused gate lanes)
    proj0 = xcol_ref[...] * w0_ref[...]                       # (T*B, 16H)

    whh0 = whh0_ref[...]                                      # (2H, 8H), hoisted
    b0 = b0_ref[...]                                          # (1, 8H)

    h, c = zeros, zeros
    for t in range(T):                                        # fully unrolled
        rf = t * B                                            # forward consumes time t
        rb = (T - 1 - t) * B                                  # backward consumes T-1-t
        ic = proj0[rf:rf + B, 0:H8] + proj0[rb:rb + B, H8:2 * H8]
        h, c = _fused_bilstm_cell(ic, h, c, whh0, b0, H2)
        # Stash layer-0 outputs time-major into the merged scratch (lane-aligned).
        l0_ref[rf:rf + B, 0:H] = h[:, 0:H]                    # fwd output of time t
        l0_ref[rb:rb + B, H:H2] = h[:, H:H2]                  # bwd output of time T-1-t

    # ---- Layer 1 ------------------------------------------------------------------
    # Hoisted input projection for ALL timesteps & both directions as one MXU matmul.
    proj1 = jnp.dot(l0_ref[...], w1_ref[...],
                    preferred_element_type=jnp.float32)       # (T*B, 2H)@(2H,16H)

    whh1 = whh1_ref[...]
    b1 = b1_ref[...]

    h, c = zeros, zeros
    for t in range(T):                                        # fully unrolled
        rf = t * B
        rb = (T - 1 - t) * B
        ic = proj1[rf:rf + B, 0:H8] + proj1[rb:rb + B, H8:2 * H8]
        h, c = _fused_bilstm_cell(ic, h, c, whh1, b1, H2)

    # h == [h_fwd_final | h_bwd_final] == torch.cat((hidden[-2], hidden[-1]), dim=1)
    z = jnp.dot(h, fc1w_ref[...], preferred_element_type=jnp.float32) + fc1b_ref[...]
    z = jnp.maximum(z, 0.0)                                   # ReLU; dropout = identity (eval)
    out_ref[...] = (jnp.dot(z, fc2w_ref[...], preferred_element_type=jnp.float32)
                    + fc2b_ref[...])


def _interleave_gates(wf, wb, H):
    """Per-direction [i|f|g|o] (width 4H each) -> fused [i_f,i_b,f_f,f_b,g_f,g_b,o_f,o_b]."""
    parts = []
    for g in range(4):
        parts.append(wf[..., g * H:(g + 1) * H])
        parts.append(wb[..., g * H:(g + 1) * H])
    return jnp.concatenate(parts, axis=-1)


def prepare_kernel_params(params, hidden_dim):
    """Build fused / block-diagonal operands for the kernel from per-direction params."""
    H = hidden_dim
    z = jnp.zeros_like
    w_ih0, w_hh0, b0 = params["w_ih0"], params["w_hh0"], params["b0"]
    w_ih1, w_hh1, b1 = params["w_ih1"], params["w_hh1"], params["b1"]

    # Input-projection weights expanded so each direction lands in its fused gate lanes
    # (zeros elsewhere), then concatenated along the output axis -> one wide operand.
    w0_big = jnp.concatenate([_interleave_gates(w_ih0[0], z(w_ih0[0]), H),
                              _interleave_gates(z(w_ih0[1]), w_ih0[1], H)], axis=-1)  # (1, 16H)
    w1_big = jnp.concatenate([_interleave_gates(w_ih1[0], z(w_ih1[0]), H),
                              _interleave_gates(z(w_ih1[1]), w_ih1[1], H)], axis=-1)  # (2H, 16H)

    # Block-diagonal recurrent weights: fwd h rows feed only fwd lanes, bwd only bwd.
    whh0 = jnp.concatenate([_interleave_gates(w_hh0[0], z(w_hh0[0]), H),
                            _interleave_gates(z(w_hh0[1]), w_hh0[1], H)], axis=0)     # (2H, 8H)
    whh1 = jnp.concatenate([_interleave_gates(w_hh1[0], z(w_hh1[0]), H),
                            _interleave_gates(z(w_hh1[1]), w_hh1[1], H)], axis=0)     # (2H, 8H)

    return dict(w0_big=w0_big, whh0=whh0, b0=_interleave_gates(b0[0], b0[1], H),
                w1_big=w1_big, whh1=whh1, b1=_interleave_gates(b1[0], b1[1], H),
                fc1_w=params["fc1_w"], fc1_b=params["fc1_b"],
                fc2_w=params["fc2_w"], fc2_b=params["fc2_b"])


def eeg_lstm_forward(x, params, hidden_dim):
    B, T = x.shape
    H = hidden_dim
    kp = prepare_kernel_params(params, hidden_dim)
    num_classes = kp["fc2_w"].shape[1]
    x_col = x.T.reshape(T * B, 1)      # row t*B + b  <->  x[b, t]

    kernel = functools.partial(_eeg_lstm_kernel, batch=B, seq_len=T, hidden_dim=H)
    vmem = pl.BlockSpec(memory_space=pltpu.MemorySpace.VMEM)
    args = (x_col, kp["w0_big"], kp["whh0"], kp["b0"],
            kp["w1_big"], kp["whh1"], kp["b1"],
            kp["fc1_w"], kp["fc1_b"], kp["fc2_w"], kp["fc2_b"])
    # Grid-less single-block call: total VMEM footprint is a few hundred KiB, so no
    # tiling is needed on any TPU generation; for large batches the batch dim would be
    # tiled with a ("parallel",) grid axis (v7x 2nd TensorCore).
    return pl.pallas_call(
        kernel,
        out_shape=jax.ShapeDtypeStruct((B, num_classes), jnp.float32),
        in_specs=[vmem] * len(args),
        out_specs=vmem,
        scratch_shapes=[pltpu.VMEM((T * B, 2 * H), jnp.float32)],  # merged layer-0 outputs
    )(*args)


def init_params(key, hidden_dim, num_classes):
    """Deterministic synthetic params, PyTorch-style uniform init, pre-transposed (in, 4H)."""
    H = hidden_dim
    ks = jax.random.split(key, 12)
    kl = 1.0 / float(H) ** 0.5

    def u(k, shape, bound):
        return jax.random.uniform(k, shape, jnp.float32, -bound, bound)

    return dict(
        # direction axis first (0 = forward, 1 = backward); weights stored (in, 4H)
        w_ih0=u(ks[0], (2, 1, 4 * H), kl),
        w_hh0=u(ks[1], (2, H, 4 * H), kl),
        b0=u(ks[2], (2, 1, 4 * H), kl) + u(ks[3], (2, 1, 4 * H), kl),   # b_ih + b_hh
        w_ih1=u(ks[4], (2, 2 * H, 4 * H), kl),
        w_hh1=u(ks[5], (2, H, 4 * H), kl),
        b1=u(ks[6], (2, 1, 4 * H), kl) + u(ks[7], (2, 1, 4 * H), kl),
        fc1_w=u(ks[8], (2 * H, 64), 1.0 / float(2 * H) ** 0.5),
        fc1_b=u(ks[9], (1, 64), 1.0 / float(2 * H) ** 0.5),
        fc2_w=u(ks[10], (64, num_classes), 1.0 / 8.0),
        fc2_b=u(ks[11], (1, num_classes), 1.0 / 8.0),
    )


def reference_forward(x, params, hidden_dim):
    """Pure-JAX mirror of the PyTorch forward (eval mode) for correctness check."""
    H = hidden_dim
    B, T = x.shape

    def cell(xt, h, c, w_ih, w_hh, b):
        g = xt @ w_ih + h @ w_hh + b
        i = jax.nn.sigmoid(g[:, :H]); f = jax.nn.sigmoid(g[:, H:2 * H])
        gg = jnp.tanh(g[:, 2 * H:3 * H]); o = jax.nn.sigmoid(g[:, 3 * H:])
        c = f * c + i * gg
        return o * jnp.tanh(c), c

    def run_dir(seq, w_ih, w_hh, b, reverse):
        h = jnp.zeros((B, H), jnp.float32)
        c = jnp.zeros((B, H), jnp.float32)
        outs = [None] * T
        order = range(T - 1, -1, -1) if reverse else range(T)
        for t in order:
            h, c = cell(seq[t], h, c, w_ih, w_hh, b)
            outs[t] = h
        return jnp.stack(outs, 0), h

    seq0 = x.T[:, :, None]                                   # (T, B, 1)
    of, _ = run_dir(seq0, params["w_ih0"][0], params["w_hh0"][0], params["b0"][0], False)
    ob, _ = run_dir(seq0, params["w_ih0"][1], params["w_hh0"][1], params["b0"][1], True)
    seq1 = jnp.concatenate([of, ob], axis=-1)                # (T, B, 2H)
    _, hf = run_dir(seq1, params["w_ih1"][0], params["w_hh1"][0], params["b1"][0], False)
    _, hb = run_dir(seq1, params["w_ih1"][1], params["w_hh1"][1], params["b1"][1], True)
    hc = jnp.concatenate([hf, hb], axis=-1)                  # (B, 2H)
    z = jnp.maximum(hc @ params["fc1_w"] + params["fc1_b"], 0.0)
    return z @ params["fc2_w"] + params["fc2_b"]


if __name__ == "__main__":
    batch, input_dim, hidden_dim, num_classes = 2, 16, 32, 1
    key = jax.random.PRNGKey(0)
    kx, kp = jax.random.split(key)
    x = jax.random.normal(kx, (batch, input_dim), jnp.float32)
    params = init_params(kp, hidden_dim, num_classes)

    out = eeg_lstm_forward(x, params, hidden_dim)
    out = jax.block_until_ready(out)

    ref = reference_forward(x, params, hidden_dim)
    assert out.shape == (batch, num_classes), out.shape
    assert jnp.allclose(out, ref, atol=2e-4, rtol=2e-4), (out, ref)
    print("KERNEL_OK")
</pallas_src>

<mosaic_0001>
module attributes {stable_mosaic.version = 11 : i64} {
  func.func @_eeg_lstm_kernel(%arg0: memref<32x1xf32, #tpu.memory_space<vmem>>, %arg1: memref<1x512xf32, #tpu.memory_space<vmem>>, %arg2: memref<64x256xf32, #tpu.memory_space<vmem>>, %arg3: memref<1x256xf32, #tpu.memory_space<vmem>>, %arg4: memref<64x512xf32, #tpu.memory_space<vmem>>, %arg5: memref<64x256xf32, #tpu.memory_space<vmem>>, %arg6: memref<1x256xf32, #tpu.memory_space<vmem>>, %arg7: memref<64x64xf32, #tpu.memory_space<vmem>>, %arg8: memref<1x64xf32, #tpu.memory_space<vmem>>, %arg9: memref<64x1xf32, #tpu.memory_space<vmem>>, %arg10: memref<1x1xf32, #tpu.memory_space<vmem>>, %arg11: memref<2x1xf32, #tpu.memory_space<vmem>>, %arg12: memref<32x64xf32, #tpu.memory_space<vmem>>) attributes {dimension_semantics = [], scalar_prefetch = 0 : i64, scratch_operands = 1 : i64, tpu.core_type = #tpu.core_type<tc>} {
    %cst = arith.constant 0.000000e+00 : f32
    %0 = vector.broadcast %cst : f32 to vector<2x64xf32>
    %c0 = arith.constant 0 : index
    %c0_0 = arith.constant 0 : index
    %1 = vector.load %arg0[%c0, %c0_0] : memref<32x1xf32, #tpu.memory_space<vmem>>, vector<32x1xf32>
    %c0_1 = arith.constant 0 : index
    %c0_2 = arith.constant 0 : index
    %2 = vector.load %arg1[%c0_1, %c0_2] : memref<1x512xf32, #tpu.memory_space<vmem>>, vector<1x512xf32>
    %3 = vector.broadcast %1 : vector<32x1xf32> to vector<32x512xf32>
    %4 = vector.broadcast %2 : vector<1x512xf32> to vector<32x512xf32>
    %5 = arith.mulf %3, %4 : vector<32x512xf32>
    %c0_3 = arith.constant 0 : index
    %c0_4 = arith.constant 0 : index
    %6 = vector.load %arg2[%c0_3, %c0_4] : memref<64x256xf32, #tpu.memory_space<vmem>>, vector<64x256xf32>
    %c0_5 = arith.constant 0 : index
    %c0_6 = arith.constant 0 : index
    %7 = vector.load %arg3[%c0_5, %c0_6] : memref<1x256xf32, #tpu.memory_space<vmem>>, vector<1x256xf32>
    %8 = vector.extract_strided_slice %5 {offsets = [0, 0], sizes = [2, 256], strides = [1, 1]} : vector<32x512xf32> to vector<2x256xf32>
    %9 = vector.extract_strided_slice %5 {offsets = [30, 256], sizes = [2, 256], strides = [1, 1]} : vector<32x512xf32> to vector<2x256xf32>
    %10 = arith.addf %8, %9 : vector<2x256xf32>
    %cst_7 = arith.constant dense<0.000000e+00> : vector<2x256xf32>
    %11 = tpu.matmul %0, %6, %cst_7 {dimension_numbers = #tpu.dot_dimension_numbers<[1], [0], [0], [1], [0, 0, 1, 1], [], []>} : vector<2x64xf32>, vector<64x256xf32>, vector<2x256xf32> -> vector<2x256xf32>
    %12 = arith.addf %10, %11 : vector<2x256xf32>
    %13 = vector.broadcast %7 : vector<1x256xf32> to vector<2x256xf32>
    %14 = arith.addf %12, %13 : vector<2x256xf32>
    %15 = arith.negf %14 : vector<2x256xf32>
    %16 = math.exp %15 : vector<2x256xf32>
    %cst_8 = arith.constant 1.000000e+00 : f32
    %17 = vector.broadcast %cst_8 : f32 to vector<2x256xf32>
    %18 = arith.addf %17, %16 : vector<2x256xf32>
    %19 = arith.divf %17, %18 : vector<2x256xf32>
    %20 = math.tanh %14 : vector<2x256xf32>
    %21 = vector.extract_strided_slice %19 {offsets = [0, 0], sizes = [2, 64], strides = [1, 1]} : vector<2x256xf32> to vector<2x64xf32>
    %22 = vector.extract_strided_slice %19 {offsets = [0, 64], sizes = [2, 64], strides = [1, 1]} : vector<2x256xf32> to vector<2x64xf32>
    %23 = vector.extract_strided_slice %20 {offsets = [0, 128], sizes = [2, 64], strides = [1, 1]} : vector<2x256xf32> to vector<2x64xf32>
    %24 = vector.extract_strided_slice %19 {offsets = [0, 192], sizes = [2, 64], strides = [1, 1]} : vector<2x256xf32> to vector<2x64xf32>
    %25 = arith.mulf %22, %0 : vector<2x64xf32>
    %26 = arith.mulf %21, %23 : vector<2x64xf32>
    %27 = arith.addf %25, %26 : vector<2x64xf32>
    %28 = math.tanh %27 : vector<2x64xf32>
    %29 = arith.mulf %24, %28 : vector<2x64xf32>
    %30 = vector.extract_strided_slice %29 {offsets = [0, 0], sizes = [2, 32], strides = [1, 1]} : vector<2x64xf32> to vector<2x32xf32>
    %c0_9 = arith.constant 0 : index
    %c0_10 = arith.constant 0 : index
    %31 = vector.load %arg12[%c0_9, %c0_10] : memref<32x64xf32, #tpu.memory_space<vmem>>, vector<2x32xf32>
    tpu.vector_store %arg12[%c0_9, %c0_10], %30 {strides = array<i32>} : memref<32x64xf32, #tpu.memory_space<vmem>>, vector<2x32xf32>,
    %32 = vector.extract_strided_slice %29 {offsets = [0, 32], sizes = [2, 32], strides = [1, 1]} : vector<2x64xf32> to vector<2x32xf32>
    %c30 = arith.constant 30 : index
    %c32 = arith.constant 32 : index
    %33 = vector.load %arg12[%c30, %c32] : memref<32x64xf32, #tpu.memory_space<vmem>>, vector<2x32xf32>
    tpu.vector_store %arg12[%c30, %c32], %32 {strides = array<i32>} : memref<32x64xf32, #tpu.memory_space<vmem>>, vector<2x32xf32>,
    %34 = vector.extract_strided_slice %5 {offsets = [2, 0], sizes = [2, 256], strides = [1, 1]} : vector<32x512xf32> to vector<2x256xf32>
    %35 = vector.extract_strided_slice %5 {offsets = [28, 256], sizes = [2, 256], strides = [1, 1]} : vector<32x512xf32> to vector<2x256xf32>
    %36 = arith.addf %34, %35 : vector<2x256xf32>
    %cst_11 = arith.constant dense<0.000000e+00> : vector<2x256xf32>
    %37 = tpu.matmul %29, %6, %cst_11 {dimension_numbers = #tpu.dot_dimension_numbers<[1], [0], [0], [1], [0, 0, 1, 1], [], []>} : vector<2x64xf32>, vector<64x256xf32>, vector<2x256xf32> -> vector<2x256xf32>
    %38 = arith.addf %36, %37 : vector<2x256xf32>
    %39 = vector.broadcast %7 : vector<1x256xf32> to vector<2x256xf32>
    %40 = arith.addf %38, %39 : vector<2x256xf32>
    %41 = arith.negf %40 : vector<2x256xf32>
    %42 = math.exp %41 : vector<2x256xf32>
    %cst_12 = arith.constant 1.000000e+00 : f32
    %43 = vector.broadcast %cst_12 : f32 to vector<2x256xf32>
    %44 = arith.addf %43, %42 : vector<2x256xf32>
    %45 = arith.divf %43, %44 : vector<2x256xf32>
    %46 = math.tanh %40 : vector<2x256xf32>
    %47 = vector.extract_strided_slice %45 {offsets = [0, 0], sizes = [2, 64], strides = [1, 1]} : vector<2x256xf32> to vector<2x64xf32>
    %48 = vector.extract_strided_slice %45 {offsets = [0, 64], sizes = [2, 64], strides = [1, 1]} : vector<2x256xf32> to vector<2x64xf32>
    %49 = vector.extract_strided_slice %46 {offsets = [0, 128], sizes = [2, 64], strides = [1, 1]} : vector<2x256xf32> to vector<2x64xf32>
    %50 = vector.extract_strided_slice %45 {offsets = [0, 192], sizes = [2, 64], strides = [1, 1]} : vector<2x256xf32> to vector<2x64xf32>
    %51 = arith.mulf %48, %27 : vector<2x64xf32>
    %52 = arith.mulf %47, %49 : vector<2x64xf32>
    %53 = arith.addf %51, %52 : vector<2x64xf32>
    %54 = math.tanh %53 : vector<2x64xf32>
    %55 = arith.mulf %50, %54 : vector<2x64xf32>
    %56 = vector.extract_strided_slice %55 {offsets = [0, 0], sizes = [2, 32], strides = [1, 1]} : vector<2x64xf32> to vector<2x32xf32>
    %c2 = arith.constant 2 : index
    %c0_13 = arith.constant 0 : index
    %57 = vector.load %arg12[%c2, %c0_13] : memref<32x64xf32, #tpu.memory_space<vmem>>, vector<2x32xf32>
    tpu.vector_store %arg12[%c2, %c0_13], %56 {strides = array<i32>} : memref<32x64xf32, #tpu.memory_space<vmem>>, vector<2x32xf32>,
    %58 = vector.extract_strided_slice %55 {offsets = [0, 32], sizes = [2, 32], strides = [1, 1]} : vector<2x64xf32> to vector<2x32xf32>
    %c28 = arith.constant 28 : index
    %c32_14 = arith.constant 32 : index
    %59 = vector.load %arg12[%c28, %c32_14] : memref<32x64xf32, #tpu.memory_space<vmem>>, vector<2x32xf32>
    tpu.vector_store %arg12[%c28, %c32_14], %58 {strides = array<i32>} : memref<32x64xf32, #tpu.memory_space<vmem>>, vector<2x32xf32>,
    %60 = vector.extract_strided_slice %5 {offsets = [4, 0], sizes = [2, 256], strides = [1, 1]} : vector<32x512xf32> to vector<2x256xf32>
    %61 = vector.extract_strided_slice %5 {offsets = [26, 256], sizes = [2, 256], strides = [1, 1]} : vector<32x512xf32> to vector<2x256xf32>
    %62 = arith.addf %60, %61 : vector<2x256xf32>
    %cst_15 = arith.constant dense<0.000000e+00> : vector<2x256xf32>
    %63 = tpu.matmul %55, %6, %cst_15 {dimension_numbers = #tpu.dot_dimension_numbers<[1], [0], [0], [1], [0, 0, 1, 1], [], []>} : vector<2x64xf32>, vector<64x256xf32>, vector<2x256xf32> -> vector<2x256xf32>
    %64 = arith.addf %62, %63 : vector<2x256xf32>
    %65 = vector.broadcast %7 : vector<1x256xf32> to vector<2x256xf32>
    %66 = arith.addf %64, %65 : vector<2x256xf32>
    %67 = arith.negf %66 : vector<2x256xf32>
    %68 = math.exp %67 : vector<2x256xf32>
    %cst_16 = arith.constant 1.000000e+00 : f32
    %69 = vector.broadcast %cst_16 : f32 to vector<2x256xf32>
    %70 = arith.addf %69, %68 : vector<2x256xf32>
    %71 = arith.divf %69, %70 : vector<2x256xf32>
    %72 = math.tanh %66 : vector<2x256xf32>
    %73 = vector.extract_strided_slice %71 {offsets = [0, 0], sizes = [2, 64], strides = [1, 1]} : vector<2x256xf32> to vector<2x64xf32>
    %74 = vector.extract_strided_slice %71 {offsets = [0, 64], sizes = [2, 64], strides = [1, 1]} : vector<2x256xf32> to vector<2x64xf32>
    %75 = vector.extract_strided_slice %72 {offsets = [0, 128], sizes = [2, 64], strides = [1, 1]} : vector<2x256xf32> to vector<2x64xf32>
    %76 = vector.extract_strided_slice %71 {offsets = [0, 192], sizes = [2, 64], strides = [1, 1]} : vector<2x256xf32> to vector<2x64xf32>
    %77 = arith.mulf %74, %53 : vector<2x64xf32>
    %78 = arith.mulf %73, %75 : vector<2x64xf32>
    %79 = arith.addf %77, %78 : vector<2x64xf32>
    %80 = math.tanh %79 : vector<2x64xf32>
    %81 = arith.mulf %76, %80 : vector<2x64xf32>
    %82 = vector.extract_strided_slice %81 {offsets = [0, 0], sizes = [2, 32], strides = [1, 1]} : vector<2x64xf32> to vector<2x32xf32>
    %c4 = arith.constant 4 : index
    %c0_17 = arith.constant 0 : index
    %83 = vector.load %arg12[%c4, %c0_17] : memref<32x64xf32, #tpu.memory_space<vmem>>, vector<2x32xf32>
    tpu.vector_store %arg12[%c4, %c0_17], %82 {strides = array<i32>} : memref<32x64xf32, #tpu.memory_space<vmem>>, vector<2x32xf32>,
    %84 = vector.extract_strided_slice %81 {offsets = [0, 32], sizes = [2, 32], strides = [1, 1]} : vector<2x64xf32> to vector<2x32xf32>
    %c26 = arith.constant 26 : index
    %c32_18 = arith.constant 32 : index
    %85 = vector.load %arg12[%c26, %c32_18] : memref<32x64xf32, #tpu.memory_space<vmem>>, vector<2x32xf32>
    tpu.vector_store %arg12[%c26, %c32_18], %84 {strides = array<i32>} : memref<32x64xf32, #tpu.memory_space<vmem>>, vector<2x32xf32>,
    %86 = vector.extract_strided_slice %5 {offsets = [6, 0], sizes = [2, 256], strides = [1, 1]} : vector<32x512xf32> to vector<2x256xf32>
    %87 = vector.extract_strided_slice %5 {offsets = [24, 256], sizes = [2, 256], strides = [1, 1]} : vector<32x512xf32> to vector<2x256xf32>
    %88 = arith.addf %86, %87 : vector<2x256xf32>
    %cst_19 = arith.constant dense<0.000000e+00> : vector<2x256xf32>
    %89 = tpu.matmul %81, %6, %cst_19 {dimension_numbers = #tpu.dot_dimension_numbers<[1], [0], [0], [1], [0, 0, 1, 1], [], []>} : vector<2x64xf32>, vector<64x256xf32>, vector<2x256xf32> -> vector<2x256xf32>
    %90 = arith.addf %88, %89 : vector<2x256xf32>
    %91 = vector.broadcast %7 : vector<1x256xf32> to vector<2x256xf32>
    %92 = arith.addf %90, %91 : vector<2x256xf32>
    %93 = arith.negf %92 : vector<2x256xf32>
    %94 = math.exp %93 : vector<2x256xf32>
    %cst_20 = arith.constant 1.000000e+00 : f32
    %95 = vector.broadcast %cst_20 : f32 to vector<2x256xf32>
    %96 = arith.addf %95, %94 : vector<2x256xf32>
    %97 = arith.divf %95, %96 : vector<2x256xf32>
    %98 = math.tanh %92 : vector<2x256xf32>
    %99 = vector.extract_strided_slice %97 {offsets = [0, 0], sizes = [2, 64], strides = [1, 1]} : vector<2x256xf32> to vector<2x64xf32>
    %100 = vector.extract_strided_slice %97 {offsets = [0, 64], sizes = [2, 64], strides = [1, 1]} : vector<2x256xf32> to vector<2x64xf32>
    %101 = vector.extract_strided_slice %98 {offsets = [0, 128], sizes = [2, 64], strides = [1, 1]} : vector<2x256xf32> to vector<2x64xf32>
    %102 = vector.extract_strided_slice %97 {offsets = [0, 192], sizes = [2, 64], strides = [1, 1]} : vector<2x256xf32> to vector<2x64xf32>
    %103 = arith.mulf %100, %79 : vector<2x64xf32>
    %104 = arith.mulf %99, %101 : vector<2x64xf32>
    %105 = arith.addf %103, %104 : vector<2x64xf32>
    %106 = math.tanh %105 : vector<2x64xf32>
    %107 = arith.mulf %102, %106 : vector<2x64xf32>
    %108 = vector.extract_strided_slice %107 {offsets = [0, 0], sizes = [2, 32], strides = [1, 1]} : vector<2x64xf32> to vector<2x32xf32>
    %c6 = arith.constant 6 : index
    %c0_21 = arith.constant 0 : index
    %109 = vector.load %arg12[%c6, %c0_21] : memref<32x64xf32, #tpu.memory_space<vmem>>, vector<2x32xf32>
    tpu.vector_store %arg12[%c6, %c0_21], %108 {strides = array<i32>} : memref<32x64xf32, #tpu.memory_space<vmem>>, vector<2x32xf32>,
    %110 = vector.extract_strided_slice %107 {offsets = [0, 32], sizes = [2, 32], strides = [1, 1]} : vector<2x64xf32> to vector<2x32xf32>
    %c24 = arith.constant 24 : index
    %c32_22 = arith.constant 32 : index
    %111 = vector.load %arg12[%c24, %c32_22] : memref<32x64xf32, #tpu.memory_space<vmem>>, vector<2x32xf32>
    tpu.vector_store %arg12[%c24, %c32_22], %110 {strides = array<i32>} : memref<32x64xf32, #tpu.memory_space<vmem>>, vector<2x32xf32>,
    %112 = vector.extract_strided_slice %5 {offsets = [8, 0], sizes = [2, 256], strides = [1, 1]} : vector<32x512xf32> to vector<2x256xf32>
    %113 = vector.extract_strided_slice %5 {offsets = [22, 256], sizes = [2, 256], strides = [1, 1]} : vector<32x512xf32> to vector<2x256xf32>
    %114 = arith.addf %112, %113 : vector<2x256xf32>
    %cst_23 = arith.constant dense<0.000000e+00> : vector<2x256xf32>
    %115 = tpu.matmul %107, %6, %cst_23 {dimension_numbers = #tpu.dot_dimension_numbers<[1], [0], [0], [1], [0, 0, 1, 1], [], []>} : vector<2x64xf32>, vector<64x256xf32>, vector<2x256xf32> -> vector<2x256xf32>
    %116 = arith.addf %114, %115 : vector<2x256xf32>
    %117 = vector.broadcast %7 : vector<1x256xf32> to vector<2x256xf32>
    %118 = arith.addf %116, %117 : vector<2x256xf32>
    %119 = arith.negf %118 : vector<2x256xf32>
    %120 = math.exp %119 : vector<2x256xf32>
    %cst_24 = arith.constant 1.000000e+00 : f32
    %121 = vector.broadcast %cst_24 : f32 to vector<2x256xf32>
    %122 = arith.addf %121, %120 : vector<2x256xf32>
    %123 = arith.divf %121, %122 : vector<2x256xf32>
    %124 = math.tanh %118 : vector<2x256xf32>
    %125 = vector.extract_strided_slice %123 {offsets = [0, 0], sizes = [2, 64], strides = [1, 1]} : vector<2x256xf32> to vector<2x64xf32>
    %126 = vector.extract_strided_slice %123 {offsets = [0, 64], sizes = [2, 64], strides = [1, 1]} : vector<2x256xf32> to vector<2x64xf32>
    %127 = vector.extract_strided_slice %124 {offsets = [0, 128], sizes = [2, 64], strides = [1, 1]} : vector<2x256xf32> to vector<2x64xf32>
    %128 = vector.extract_strided_slice %123 {offsets = [0, 192], sizes = [2, 64], strides = [1, 1]} : vector<2x256xf32> to vector<2x64xf32>
    %129 = arith.mulf %126, %105 : vector<2x64xf32>
    %130 = arith.mulf %125, %127 : vector<2x64xf32>
    %131 = arith.addf %129, %130 : vector<2x64xf32>
    %132 = math.tanh %131 : vector<2x64xf32>
    %133 = arith.mulf %128, %132 : vector<2x64xf32>
    %134 = vector.extract_strided_slice %133 {offsets = [0, 0], sizes = [2, 32], strides = [1, 1]} : vector<2x64xf32> to vector<2x32xf32>
    %c8 = arith.constant 8 : index
    %c0_25 = arith.constant 0 : index
    %135 = vector.load %arg12[%c8, %c0_25] : memref<32x64xf32, #tpu.memory_space<vmem>>, vector<2x32xf32>
    tpu.vector_store %arg12[%c8, %c0_25], %134 {strides = array<i32>} : memref<32x64xf32, #tpu.memory_space<vmem>>, vector<2x32xf32>,
    %136 = vector.extract_strided_slice %133 {offsets = [0, 32], sizes = [2, 32], strides = [1, 1]} : vector<2x64xf32> to vector<2x32xf32>
    %c22 = arith.constant 22 : index
    %c32_26 = arith.constant 32 : index
    %137 = vector.load %arg12[%c22, %c32_26] : memref<32x64xf32, #tpu.memory_space<vmem>>, vector<2x32xf32>
    tpu.vector_store %arg12[%c22, %c32_26], %136 {strides = array<i32>} : memref<32x64xf32, #tpu.memory_space<vmem>>, vector<2x32xf32>,
    %138 = vector.extract_strided_slice %5 {offsets = [10, 0], sizes = [2, 256], strides = [1, 1]} : vector<32x512xf32> to vector<2x256xf32>
    %139 = vector.extract_strided_slice %5 {offsets = [20, 256], sizes = [2, 256], strides = [1, 1]} : vector<32x512xf32> to vector<2x256xf32>
    %140 = arith.addf %138, %139 : vector<2x256xf32>
    %cst_27 = arith.constant dense<0.000000e+00> : vector<2x256xf32>
    %141 = tpu.matmul %133, %6, %cst_27 {dimension_numbers = #tpu.dot_dimension_numbers<[1], [0], [0], [1], [0, 0, 1, 1], [], []>} : vector<2x64xf32>, vector<64x256xf32>, vector<2x256xf32> -> vector<2x256xf32>
    %142 = arith.addf %140, %141 : vector<2x256xf32>
    %143 = vector.broadcast %7 : vector<1x256xf32> to vector<2x256xf32>
    %144 = arith.addf %142, %143 : vector<2x256xf32>
    %145 = arith.negf %144 : vector<2x256xf32>
    %146 = math.exp %145 : vector<2x256xf32>
    %cst_28 = arith.constant 1.000000e+00 : f32
    %147 = vector.broadcast %cst_28 : f32 to vector<2x256xf32>
    %148 = arith.addf %147, %146 : vector<2x256xf32>
    %149 = arith.divf %147, %148 : vector<2x256xf32>
    %150 = math.tanh %144 : vector<2x256xf32>
    %151 = vector.extract_strided_slice %149 {offsets = [0, 0], sizes = [2, 64], strides = [1, 1]} : vector<2x256xf32> to vector<2x64xf32>
    %152 = vector.extract_strided_slice %149 {offsets = [0, 64], sizes = [2, 64], strides = [1, 1]} : vector<2x256xf32> to vector<2x64xf32>
    %153 = vector.extract_strided_slice %150 {offsets = [0, 128], sizes = [2, 64], strides = [1, 1]} : vector<2x256xf32> to vector<2x64xf32>
    %154 = vector.extract_strided_slice %149 {offsets = [0, 192], sizes = [2, 64], strides = [1, 1]} : vector<2x256xf32> to vector<2x64xf32>
    %155 = arith.mulf %152, %131 : vector<2x64xf32>
    %156 = arith.mulf %151, %153 : vector<2x64xf32>
    %157 = arith.addf %155, %156 : vector<2x64xf32>
    %158 = math.tanh %157 : vector<2x64xf32>
    %159 = arith.mulf %154, %158 : vector<2x64xf32>
    %160 = vector.extract_strided_slice %159 {offsets = [0, 0], sizes = [2, 32], strides = [1, 1]} : vector<2x64xf32> to vector<2x32xf32>
    %c10 = arith.constant 10 : index
    %c0_29 = arith.constant 0 : index
    %161 = vector.load %arg12[%c10, %c0_29] : memref<32x64xf32, #tpu.memory_space<vmem>>, vector<2x32xf32>
    tpu.vector_store %arg12[%c10, %c0_29], %160 {strides = array<i32>} : memref<32x64xf32, #tpu.memory_space<vmem>>, vector<2x32xf32>,
    %162 = vector.extract_strided_slice %159 {offsets = [0, 32], sizes = [2, 32], strides = [1, 1]} : vector<2x64xf32> to vector<2x32xf32>
    %c20 = arith.constant 20 : index
    %c32_30 = arith.constant 32 : index
    %163 = vector.load %arg12[%c20, %c32_30] : memref<32x64xf32, #tpu.memory_space<vmem>>, vector<2x32xf32>
    tpu.vector_store %arg12[%c20, %c32_30], %162 {strides = array<i32>} : memref<32x64xf32, #tpu.memory_space<vmem>>, vector<2x32xf32>,
    %164 = vector.extract_strided_slice %5 {offsets = [12, 0], sizes = [2, 256], strides = [1, 1]} : vector<32x512xf32> to vector<2x256xf32>
    %165 = vector.extract_strided_slice %5 {offsets = [18, 256], sizes = [2, 256], strides = [1, 1]} : vector<32x512xf32> to vector<2x256xf32>
    %166 = arith.addf %164, %165 : vector<2x256xf32>
    %cst_31 = arith.constant dense<0.000000e+00> : vector<2x256xf32>
    %167 = tpu.matmul %159, %6, %cst_31 {dimension_numbers = #tpu.dot_dimension_numbers<[1], [0], [0], [1], [0, 0, 1, 1], [], []>} : vector<2x64xf32>, vector<64x256xf32>, vector<2x256xf32> -> vector<2x256xf32>
    %168 = arith.addf %166, %167 : vector<2x256xf32>
    %169 = vector.broadcast %7 : vector<1x256xf32> to vector<2x256xf32>
    %170 = arith.addf %168, %169 : vector<2x256xf32>
    %171 = arith.negf %170 : vector<2x256xf32>
    %172 = math.exp %171 : vector<2x256xf32>
    %cst_32 = arith.constant 1.000000e+00 : f32
    %173 = vector.broadcast %cst_32 : f32 to vector<2x256xf32>
    %174 = arith.addf %173, %172 : vector<2x256xf32>
    %175 = arith.divf %173, %174 : vector<2x256xf32>
    %176 = math.tanh %170 : vector<2x256xf32>
    %177 = vector.extract_strided_slice %175 {offsets = [0, 0], sizes = [2, 64], strides = [1, 1]} : vector<2x256xf32> to vector<2x64xf32>
    %178 = vector.extract_strided_slice %175 {offsets = [0, 64], sizes = [2, 64], strides = [1, 1]} : vector<2x256xf32> to vector<2x64xf32>
    %179 = vector.extract_strided_slice %176 {offsets = [0, 128], sizes = [2, 64], strides = [1, 1]} : vector<2x256xf32> to vector<2x64xf32>
    %180 = vector.extract_strided_slice %175 {offsets = [0, 192], sizes = [2, 64], strides = [1, 1]} : vector<2x256xf32> to vector<2x64xf32>
    %181 = arith.mulf %178, %157 : vector<2x64xf32>
    %182 = arith.mulf %177, %179 : vector<2x64xf32>
    %183 = arith.addf %181, %182 : vector<2x64xf32>
    %184 = math.tanh %183 : vector<2x64xf32>
    %185 = arith.mulf %180, %184 : vector<2x64xf32>
    %186 = vector.extract_strided_slice %185 {offsets = [0, 0], sizes = [2, 32], strides = [1, 1]} : vector<2x64xf32> to vector<2x32xf32>
    %c12 = arith.constant 12 : index
    %c0_33 = arith.constant 0 : index
    %187 = vector.load %arg12[%c12, %c0_33] : memref<32x64xf32, #tpu.memory_space<vmem>>, vector<2x32xf32>
    tpu.vector_store %arg12[%c12, %c0_33], %186 {strides = array<i32>} : memref<32x64xf32, #tpu.memory_space<vmem>>, vector<2x32xf32>,
    %188 = vector.extract_strided_slice %185 {offsets = [0, 32], sizes = [2, 32], strides = [1, 1]} : vector<2x64xf32> to vector<2x32xf32>
    %c18 = arith.constant 18 : index
    %c32_34 = arith.constant 32 : index
    %189 = vector.load %arg12[%c18, %c32_34] : memref<32x64xf32, #tpu.memory_space<vmem>>, vector<2x32xf32>
    tpu.vector_store %arg12[%c18, %c32_34], %188 {strides = array<i32>} : memref<32x64xf32, #tpu.memory_space<vmem>>, vector<2x32xf32>,
    %190 = vector.extract_strided_slice %5 {offsets = [14, 0], sizes = [2, 256], strides = [1, 1]} : vector<32x512xf32> to vector<2x256xf32>
    %191 = vector.extract_strided_slice %5 {offsets = [16, 256], sizes = [2, 256], strides = [1, 1]} : vector<32x512xf32> to vector<2x256xf32>
    %192 = arith.addf %190, %191 : vector<2x256xf32>
    %cst_35 = arith.constant dense<0.000000e+00> : vector<2x256xf32>
    %193 = tpu.matmul %185, %6, %cst_35 {dimension_numbers = #tpu.dot_dimension_numbers<[1], [0], [0], [1], [0, 0, 1, 1], [], []>} : vector<2x64xf32>, vector<64x256xf32>, vector<2x256xf32> -> vector<2x256xf32>
    %194 = arith.addf %192, %193 : vector<2x256xf32>
    %195 = vector.broadcast %7 : vector<1x256xf32> to vector<2x256xf32>
    %196 = arith.addf %194, %195 : vector<2x256xf32>
    %197 = arith.negf %196 : vector<2x256xf32>
    %198 = math.exp %197 : vector<2x256xf32>
    %cst_36 = arith.constant 1.000000e+00 : f32
    %199 = vector.broadcast %cst_36 : f32 to vector<2x256xf32>
    %200 = arith.addf %199, %198 : vector<2x256xf32>
    %201 = arith.divf %199, %200 : vector<2x256xf32>
    %202 = math.tanh %196 : vector<2x256xf32>
    %203 = vector.extract_strided_slice %201 {offsets = [0, 0], sizes = [2, 64], strides = [1, 1]} : vector<2x256xf32> to vector<2x64xf32>
    %204 = vector.extract_strided_slice %201 {offsets = [0, 64], sizes = [2, 64], strides = [1, 1]} : vector<2x256xf32> to vector<2x64xf32>
    %205 = vector.extract_strided_slice %202 {offsets = [0, 128], sizes = [2, 64], strides = [1, 1]} : vector<2x256xf32> to vector<2x64xf32>
    %206 = vector.extract_strided_slice %201 {offsets = [0, 192], sizes = [2, 64], strides = [1, 1]} : vector<2x256xf32> to vector<2x64xf32>
    %207 = arith.mulf %204, %183 : vector<2x64xf32>
    %208 = arith.mulf %203, %205 : vector<2x64xf32>
    %209 = arith.addf %207, %208 : vector<2x64xf32>
    %210 = math.tanh %209 : vector<2x64xf32>
    %211 = arith.mulf %206, %210 : vector<2x64xf32>
    %212 = vector.extract_strided_slice %211 {offsets = [0, 0], sizes = [2, 32], strides = [1, 1]} : vector<2x64xf32> to vector<2x32xf32>
    %c14 = arith.constant 14 : index
    %c0_37 = arith.constant 0 : index
    %213 = vector.load %arg12[%c14, %c0_37] : memref<32x64xf32, #tpu.memory_space<vmem>>, vector<2x32xf32>
    tpu.vector_store %arg12[%c14, %c0_37], %212 {strides = array<i32>} : memref<32x64xf32, #tpu.memory_space<vmem>>, vector<2x32xf32>,
    %214 = vector.extract_strided_slice %211 {offsets = [0, 32], sizes = [2, 32], strides = [1, 1]} : vector<2x64xf32> to vector<2x32xf32>
    %c16 = arith.constant 16 : index
    %c32_38 = arith.constant 32 : index
    %215 = vector.load %arg12[%c16, %c32_38] : memref<32x64xf32, #tpu.memory_space<vmem>>, vector<2x32xf32>
    tpu.vector_store %arg12[%c16, %c32_38], %214 {strides = array<i32>} : memref<32x64xf32, #tpu.memory_space<vmem>>, vector<2x32xf32>,
    %216 = vector.extract_strided_slice %5 {offsets = [16, 0], sizes = [2, 256], strides = [1, 1]} : vector<32x512xf32> to vector<2x256xf32>
    %217 = vector.extract_strided_slice %5 {offsets = [14, 256], sizes = [2, 256], strides = [1, 1]} : vector<32x512xf32> to vector<2x256xf32>
    %218 = arith.addf %216, %217 : vector<2x256xf32>
    %cst_39 = arith.constant dense<0.000000e+00> : vector<2x256xf32>
    %219 = tpu.matmul %211, %6, %cst_39 {dimension_numbers = #tpu.dot_dimension_numbers<[1], [0], [0], [1], [0, 0, 1, 1], [], []>} : vector<2x64xf32>, vector<64x256xf32>, vector<2x256xf32> -> vector<2x256xf32>
    %220 = arith.addf %218, %219 : vector<2x256xf32>
    %221 = vector.broadcast %7 : vector<1x256xf32> to vector<2x256xf32>
    %222 = arith.addf %220, %221 : vector<2x256xf32>
    %223 = arith.negf %222 : vector<2x256xf32>
    %224 = math.exp %223 : vector<2x256xf32>
    %cst_40 = arith.constant 1.000000e+00 : f32
    %225 = vector.broadcast %cst_40 : f32 to vector<2x256xf32>
    %226 = arith.addf %225, %224 : vector<2x256xf32>
    %227 = arith.divf %225, %226 : vector<2x256xf32>
    %228 = math.tanh %222 : vector<2x256xf32>
    %229 = vector.extract_strided_slice %227 {offsets = [0, 0], sizes = [2, 64], strides = [1, 1]} : vector<2x256xf32> to vector<2x64xf32>
    %230 = vector.extract_strided_slice %227 {offsets = [0, 64], sizes = [2, 64], strides = [1, 1]} : vector<2x256xf32> to vector<2x64xf32>
    %231 = vector.extract_strided_slice %228 {offsets = [0, 128], sizes = [2, 64], strides = [1, 1]} : vector<2x256xf32> to vector<2x64xf32>
    %232 = vector.extract_strided_slice %227 {offsets = [0, 192], sizes = [2, 64], strides = [1, 1]} : vector<2x256xf32> to vector<2x64xf32>
    %233 = arith.mulf %230, %209 : vector<2x64xf32>
    %234 = arith.mulf %229, %231 : vector<2x64xf32>
    %235 = arith.addf %233, %234 : vector<2x64xf32>
    %236 = math.tanh %235 : vector<2x64xf32>
    %237 = arith.mulf %232, %236 : vector<2x64xf32>
    %238 = vector.extract_strided_slice %237 {offsets = [0, 0], sizes = [2, 32], strides = [1, 1]} : vector<2x64xf32> to vector<2x32xf32>
    %c16_41 = arith.constant 16 : index
    %c0_42 = arith.constant 0 : index
    %239 = vector.load %arg12[%c16_41, %c0_42] : memref<32x64xf32, #tpu.memory_space<vmem>>, vector<2x32xf32>
    tpu.vector_store %arg12[%c16_41, %c0_42], %238 {strides = array<i32>} : memref<32x64xf32, #tpu.memory_space<vmem>>, vector<2x32xf32>,
    %240 = vector.extract_strided_slice %237 {offsets = [0, 32], sizes = [2, 32], strides = [1, 1]} : vector<2x64xf32> to vector<2x32xf32>
    %c14_43 = arith.constant 14 : index
    %c32_44 = arith.constant 32 : index
    %241 = vector.load %arg12[%c14_43, %c32_44] : memref<32x64xf32, #tpu.memory_space<vmem>>, vector<2x32xf32>
    tpu.vector_store %arg12[%c14_43, %c32_44], %240 {strides = array<i32>} : memref<32x64xf32, #tpu.memory_space<vmem>>, vector<2x32xf32>,
    %242 = vector.extract_strided_slice %5 {offsets = [18, 0], sizes = [2, 256], strides = [1, 1]} : vector<32x512xf32> to vector<2x256xf32>
    %243 = vector.extract_strided_slice %5 {offsets = [12, 256], sizes = [2, 256], strides = [1, 1]} : vector<32x512xf32> to vector<2x256xf32>
    %244 = arith.addf %242, %243 : vector<2x256xf32>
    %cst_45 = arith.constant dense<0.000000e+00> : vector<2x256xf32>
    %245 = tpu.matmul %237, %6, %cst_45 {dimension_numbers = #tpu.dot_dimension_numbers<[1], [0], [0], [1], [0, 0, 1, 1], [], []>} : vector<2x64xf32>, vector<64x256xf32>, vector<2x256xf32> -> vector<2x256xf32>
    %246 = arith.addf %244, %245 : vector<2x256xf32>
    %247 = vector.broadcast %7 : vector<1x256xf32> to vector<2x256xf32>
    %248 = arith.addf %246, %247 : vector<2x256xf32>
    %249 = arith.negf %248 : vector<2x256xf32>
    %250 = math.exp %249 : vector<2x256xf32>
    %cst_46 = arith.constant 1.000000e+00 : f32
    %251 = vector.broadcast %cst_46 : f32 to vector<2x256xf32>
    %252 = arith.addf %251, %250 : vector<2x256xf32>
    %253 = arith.divf %251, %252 : vector<2x256xf32>
    %254 = math.tanh %248 : vector<2x256xf32>
    %255 = vector.extract_strided_slice %253 {offsets = [0, 0], sizes = [2, 64], strides = [1, 1]} : vector<2x256xf32> to vector<2x64xf32>
    %256 = vector.extract_strided_slice %253 {offsets = [0, 64], sizes = [2, 64], strides = [1, 1]} : vector<2x256xf32> to vector<2x64xf32>
    %257 = vector.extract_strided_slice %254 {offsets = [0, 128], sizes = [2, 64], strides = [1, 1]} : vector<2x256xf32> to vector<2x64xf32>
    %258 = vector.extract_strided_slice %253 {offsets = [0, 192], sizes = [2, 64], strides = [1, 1]} : vector<2x256xf32> to vector<2x64xf32>
    %259 = arith.mulf %256, %235 : vector<2x64xf32>
    %260 = arith.mulf %255, %257 : vector<2x64xf32>
    %261 = arith.addf %259, %260 : vector<2x64xf32>
    %262 = math.tanh %261 : vector<2x64xf32>
    %263 = arith.mulf %258, %262 : vector<2x64xf32>
    %264 = vector.extract_strided_slice %263 {offsets = [0, 0], sizes = [2, 32], strides = [1, 1]} : vector<2x64xf32> to vector<2x32xf32>
    %c18_47 = arith.constant 18 : index
    %c0_48 = arith.constant 0 : index
    %265 = vector.load %arg12[%c18_47, %c0_48] : memref<32x64xf32, #tpu.memory_space<vmem>>, vector<2x32xf32>
    tpu.vector_store %arg12[%c18_47, %c0_48], %264 {strides = array<i32>} : memref<32x64xf32, #tpu.memory_space<vmem>>, vector<2x32xf32>,
    %266 = vector.extract_strided_slice %263 {offsets = [0, 32], sizes = [2, 32], strides = [1, 1]} : vector<2x64xf32> to vector<2x32xf32>
    %c12_49 = arith.constant 12 : index
    %c32_50 = arith.constant 32 : index
    %267 = vector.load %arg12[%c12_49, %c32_50] : memref<32x64xf32, #tpu.memory_space<vmem>>, vector<2x32xf32>
    tpu.vector_store %arg12[%c12_49, %c32_50], %266 {strides = array<i32>} : memref<32x64xf32, #tpu.memory_space<vmem>>, vector<2x32xf32>,
    %268 = vector.extract_strided_slice %5 {offsets = [20, 0], sizes = [2, 256], strides = [1, 1]} : vector<32x512xf32> to vector<2x256xf32>
    %269 = vector.extract_strided_slice %5 {offsets = [10, 256], sizes = [2, 256], strides = [1, 1]} : vector<32x512xf32> to vector<2x256xf32>
    %270 = arith.addf %268, %269 : vector<2x256xf32>
    %cst_51 = arith.constant dense<0.000000e+00> : vector<2x256xf32>
    %271 = tpu.matmul %263, %6, %cst_51 {dimension_numbers = #tpu.dot_dimension_numbers<[1], [0], [0], [1], [0, 0, 1, 1], [], []>} : vector<2x64xf32>, vector<64x256xf32>, vector<2x256xf32> -> vector<2x256xf32>
    %272 = arith.addf %270, %271 : vector<2x256xf32>
    %273 = vector.broadcast %7 : vector<1x256xf32> to vector<2x256xf32>
    %274 = arith.addf %272, %273 : vector<2x256xf32>
    %275 = arith.negf %274 : vector<2x256xf32>
    %276 = math.exp %275 : vector<2x256xf32>
    %cst_52 = arith.constant 1.000000e+00 : f32
    %277 = vector.broadcast %cst_52 : f32 to vector<2x256xf32>
    %278 = arith.addf %277, %276 : vector<2x256xf32>
    %279 = arith.divf %277, %278 : vector<2x256xf32>
    %280 = math.tanh %274 : vector<2x256xf32>
    %281 = vector.extract_strided_slice %279 {offsets = [0, 0], sizes = [2, 64], strides = [1, 1]} : vector<2x256xf32> to vector<2x64xf32>
    %282 = vector.extract_strided_slice %279 {offsets = [0, 64], sizes = [2, 64], strides = [1, 1]} : vector<2x256xf32> to vector<2x64xf32>
    %283 = vector.extract_strided_slice %280 {offsets = [0, 128], sizes = [2, 64], strides = [1, 1]} : vector<2x256xf32> to vector<2x64xf32>
    %284 = vector.extract_strided_slice %279 {offsets = [0, 192], sizes = [2, 64], strides = [1, 1]} : vector<2x256xf32> to vector<2x64xf32>
    %285 = arith.mulf %282, %261 : vector<2x64xf32>
    %286 = arith.mulf %281, %283 : vector<2x64xf32>
    %287 = arith.addf %285, %286 : vector<2x64xf32>
    %288 = math.tanh %287 : vector<2x64xf32>
    %289 = arith.mulf %284, %288 : vector<2x64xf32>
    %290 = vector.extract_strided_slice %289 {offsets = [0, 0], sizes = [2, 32], strides = [1, 1]} : vector<2x64xf32> to vector<2x32xf32>
    %c20_53 = arith.constant 20 : index
    %c0_54 = arith.constant 0 : index
    %291 = vector.load %arg12[%c20_53, %c0_54] : memref<32x64xf32, #tpu.memory_space<vmem>>, vector<2x32xf32>
    tpu.vector_store %arg12[%c20_53, %c0_54], %290 {strides = array<i32>} : memref<32x64xf32, #tpu.memory_space<vmem>>, vector<2x32xf32>,
    %292 = vector.extract_strided_slice %289 {offsets = [0, 32], sizes = [2, 32], strides = [1, 1]} : vector<2x64xf32> to vector<2x32xf32>
    %c10_55 = arith.constant 10 : index
    %c32_56 = arith.constant 32 : index
    %293 = vector.load %arg12[%c10_55, %c32_56] : memref<32x64xf32, #tpu.memory_space<vmem>>, vector<2x32xf32>
    tpu.vector_store %arg12[%c10_55, %c32_56], %292 {strides = array<i32>} : memref<32x64xf32, #tpu.memory_space<vmem>>, vector<2x32xf32>,
    %294 = vector.extract_strided_slice %5 {offsets = [22, 0], sizes = [2, 256], strides = [1, 1]} : vector<32x512xf32> to vector<2x256xf32>
    %295 = vector.extract_strided_slice %5 {offsets = [8, 256], sizes = [2, 256], strides = [1, 1]} : vector<32x512xf32> to vector<2x256xf32>
    %296 = arith.addf %294, %295 : vector<2x256xf32>
    %cst_57 = arith.constant dense<0.000000e+00> : vector<2x256xf32>
    %297 = tpu.matmul %289, %6, %cst_57 {dimension_numbers = #tpu.dot_dimension_numbers<[1], [0], [0], [1], [0, 0, 1, 1], [], []>} : vector<2x64xf32>, vector<64x256xf32>, vector<2x256xf32> -> vector<2x256xf32>
    %298 = arith.addf %296, %297 : vector<2x256xf32>
    %299 = vector.broadcast %7 : vector<1x256xf32> to vector<2x256xf32>
    %300 = arith.addf %298, %299 : vector<2x256xf32>
    %301 = arith.negf %300 : vector<2x256xf32>
    %302 = math.exp %301 : vector<2x256xf32>
    %cst_58 = arith.constant 1.000000e+00 : f32
    %303 = vector.broadcast %cst_58 : f32 to vector<2x256xf32>
    %304 = arith.addf %303, %302 : vector<2x256xf32>
    %305 = arith.divf %303, %304 : vector<2x256xf32>
    %306 = math.tanh %300 : vector<2x256xf32>
    %307 = vector.extract_strided_slice %305 {offsets = [0, 0], sizes = [2, 64], strides = [1, 1]} : vector<2x256xf32> to vector<2x64xf32>
    %308 = vector.extract_strided_slice %305 {offsets = [0, 64], sizes = [2, 64], strides = [1, 1]} : vector<2x256xf32> to vector<2x64xf32>
    %309 = vector.extract_strided_slice %306 {offsets = [0, 128], sizes = [2, 64], strides = [1, 1]} : vector<2x256xf32> to vector<2x64xf32>
    %310 = vector.extract_strided_slice %305 {offsets = [0, 192], sizes = [2, 64], strides = [1, 1]} : vector<2x256xf32> to vector<2x64xf32>
    %311 = arith.mulf %308, %287 : vector<2x64xf32>
    %312 = arith.mulf %307, %309 : vector<2x64xf32>
    %313 = arith.addf %311, %312 : vector<2x64xf32>
    %314 = math.tanh %313 : vector<2x64xf32>
    %315 = arith.mulf %310, %314 : vector<2x64xf32>
    %316 = vector.extract_strided_slice %315 {offsets = [0, 0], sizes = [2, 32], strides = [1, 1]} : vector<2x64xf32> to vector<2x32xf32>
    %c22_59 = arith.constant 22 : index
    %c0_60 = arith.constant 0 : index
    %317 = vector.load %arg12[%c22_59, %c0_60] : memref<32x64xf32, #tpu.memory_space<vmem>>, vector<2x32xf32>
    tpu.vector_store %arg12[%c22_59, %c0_60], %316 {strides = array<i32>} : memref<32x64xf32, #tpu.memory_space<vmem>>, vector<2x32xf32>,
    %318 = vector.extract_strided_slice %315 {offsets = [0, 32], sizes = [2, 32], strides = [1, 1]} : vector<2x64xf32> to vector<2x32xf32>
    %c8_61 = arith.constant 8 : index
    %c32_62 = arith.constant 32 : index
    %319 = vector.load %arg12[%c8_61, %c32_62] : memref<32x64xf32, #tpu.memory_space<vmem>>, vector<2x32xf32>
    tpu.vector_store %arg12[%c8_61, %c32_62], %318 {strides = array<i32>} : memref<32x64xf32, #tpu.memory_space<vmem>>, vector<2x32xf32>,
    %320 = vector.extract_strided_slice %5 {offsets = [24, 0], sizes = [2, 256], strides = [1, 1]} : vector<32x512xf32> to vector<2x256xf32>
    %321 = vector.extract_strided_slice %5 {offsets = [6, 256], sizes = [2, 256], strides = [1, 1]} : vector<32x512xf32> to vector<2x256xf32>
    %322 = arith.addf %320, %321 : vector<2x256xf32>
    %cst_63 = arith.constant dense<0.000000e+00> : vector<2x256xf32>
    %323 = tpu.matmul %315, %6, %cst_63 {dimension_numbers = #tpu.dot_dimension_numbers<[1], [0], [0], [1], [0, 0, 1, 1], [], []>} : vector<2x64xf32>, vector<64x256xf32>, vector<2x256xf32> -> vector<2x256xf32>
    %324 = arith.addf %322, %323 : vector<2x256xf32>
    %325 = vector.broadcast %7 : vector<1x256xf32> to vector<2x256xf32>
    %326 = arith.addf %324, %325 : vector<2x256xf32>
    %327 = arith.negf %326 : vector<2x256xf32>
    %328 = math.exp %327 : vector<2x256xf32>
    %cst_64 = arith.constant 1.000000e+00 : f32
    %329 = vector.broadcast %cst_64 : f32 to vector<2x256xf32>
    %330 = arith.addf %329, %328 : vector<2x256xf32>
    %331 = arith.divf %329, %330 : vector<2x256xf32>
    %332 = math.tanh %326 : vector<2x256xf32>
    %333 = vector.extract_strided_slice %331 {offsets = [0, 0], sizes = [2, 64], strides = [1, 1]} : vector<2x256xf32> to vector<2x64xf32>
    %334 = vector.extract_strided_slice %331 {offsets = [0, 64], sizes = [2, 64], strides = [1, 1]} : vector<2x256xf32> to vector<2x64xf32>
    %335 = vector.extract_strided_slice %332 {offsets = [0, 128], sizes = [2, 64], strides = [1, 1]} : vector<2x256xf32> to vector<2x64xf32>
    %336 = vector.extract_strided_slice %331 {offsets = [0, 192], sizes = [2, 64], strides = [1, 1]} : vector<2x256xf32> to vector<2x64xf32>
    %337 = arith.mulf %334, %313 : vector<2x64xf32>
    %338 = arith.mulf %333, %335 : vector<2x64xf32>
    %339 = arith.addf %337, %338 : vector<2x64xf32>
    %340 = math.tanh %339 : vector<2x64xf32>
    %341 = arith.mulf %336, %340 : vector<2x64xf32>
    %342 = vector.extract_strided_slice %341 {offsets = [0, 0], sizes = [2, 32], strides = [1, 1]} : vector<2x64xf32> to vector<2x32xf32>
    %c24_65 = arith.constant 24 : index
    %c0_66 = arith.constant 0 : index
    %343 = vector.load %arg12[%c24_65, %c0_66] : memref<32x64xf32, #tpu.memory_space<vmem>>, vector<2x32xf32>
    tpu.vector_store %arg12[%c24_65, %c0_66], %342 {strides = array<i32>} : memref<32x64xf32, #tpu.memory_space<vmem>>, vector<2x32xf32>,
    %344 = vector.extract_strided_slice %341 {offsets = [0, 32], sizes = [2, 32], strides = [1, 1]} : vector<2x64xf32> to vector<2x32xf32>
    %c6_67 = arith.constant 6 : index
    %c32_68 = arith.constant 32 : index
    %345 = vector.load %arg12[%c6_67, %c32_68] : memref<32x64xf32, #tpu.memory_space<vmem>>, vector<2x32xf32>
    tpu.vector_store %arg12[%c6_67, %c32_68], %344 {strides = array<i32>} : memref<32x64xf32, #tpu.memory_space<vmem>>, vector<2x32xf32>,
    %346 = vector.extract_strided_slice %5 {offsets = [26, 0], sizes = [2, 256], strides = [1, 1]} : vector<32x512xf32> to vector<2x256xf32>
    %347 = vector.extract_strided_slice %5 {offsets = [4, 256], sizes = [2, 256], strides = [1, 1]} : vector<32x512xf32> to vector<2x256xf32>
    %348 = arith.addf %346, %347 : vector<2x256xf32>
    %cst_69 = arith.constant dense<0.000000e+00> : vector<2x256xf32>
    %349 = tpu.matmul %341, %6, %cst_69 {dimension_numbers = #tpu.dot_dimension_numbers<[1], [0], [0], [1], [0, 0, 1, 1], [], []>} : vector<2x64xf32>, vector<64x256xf32>, vector<2x256xf32> -> vector<2x256xf32>
    %350 = arith.addf %348, %349 : vector<2x256xf32>
    %351 = vector.broadcast %7 : vector<1x256xf32> to vector<2x256xf32>
    %352 = arith.addf %350, %351 : vector<2x256xf32>
    %353 = arith.negf %352 : vector<2x256xf32>
    %354 = math.exp %353 : vector<2x256xf32>
    %cst_70 = arith.constant 1.000000e+00 : f32
    %355 = vector.broadcast %cst_70 : f32 to vector<2x256xf32>
    %356 = arith.addf %355, %354 : vector<2x256xf32>
    %357 = arith.divf %355, %356 : vector<2x256xf32>
    %358 = math.tanh %352 : vector<2x256xf32>
    %359 = vector.extract_strided_slice %357 {offsets = [0, 0], sizes = [2, 64], strides = [1, 1]} : vector<2x256xf32> to vector<2x64xf32>
    %360 = vector.extract_strided_slice %357 {offsets = [0, 64], sizes = [2, 64], strides = [1, 1]} : vector<2x256xf32> to vector<2x64xf32>
    %361 = vector.extract_strided_slice %358 {offsets = [0, 128], sizes = [2, 64], strides = [1, 1]} : vector<2x256xf32> to vector<2x64xf32>
    %362 = vector.extract_strided_slice %357 {offsets = [0, 192], sizes = [2, 64], strides = [1, 1]} : vector<2x256xf32> to vector<2x64xf32>
    %363 = arith.mulf %360, %339 : vector<2x64xf32>
    %364 = arith.mulf %359, %361 : vector<2x64xf32>
    %365 = arith.addf %363, %364 : vector<2x64xf32>
    %366 = math.tanh %365 : vector<2x64xf32>
    %367 = arith.mulf %362, %366 : vector<2x64xf32>
    %368 = vector.extract_strided_slice %367 {offsets = [0, 0], sizes = [2, 32], strides = [1, 1]} : vector<2x64xf32> to vector<2x32xf32>
    %c26_71 = arith.constant 26 : index
    %c0_72 = arith.constant 0 : index
    %369 = vector.load %arg12[%c26_71, %c0_72] : memref<32x64xf32, #tpu.memory_space<vmem>>, vector<2x32xf32>
    tpu.vector_store %arg12[%c26_71, %c0_72], %368 {strides = array<i32>} : memref<32x64xf32, #tpu.memory_space<vmem>>, vector<2x32xf32>,
    %370 = vector.extract_strided_slice %367 {offsets = [0, 32], sizes = [2, 32], strides = [1, 1]} : vector<2x64xf32> to vector<2x32xf32>
    %c4_73 = arith.constant 4 : index
    %c32_74 = arith.constant 32 : index
    %371 = vector.load %arg12[%c4_73, %c32_74] : memref<32x64xf32, #tpu.memory_space<vmem>>, vector<2x32xf32>
    tpu.vector_store %arg12[%c4_73, %c32_74], %370 {strides = array<i32>} : memref<32x64xf32, #tpu.memory_space<vmem>>, vector<2x32xf32>,
    %372 = vector.extract_strided_slice %5 {offsets = [28, 0], sizes = [2, 256], strides = [1, 1]} : vector<32x512xf32> to vector<2x256xf32>
    %373 = vector.extract_strided_slice %5 {offsets = [2, 256], sizes = [2, 256], strides = [1, 1]} : vector<32x512xf32> to vector<2x256xf32>
    %374 = arith.addf %372, %373 : vector<2x256xf32>
    %cst_75 = arith.constant dense<0.000000e+00> : vector<2x256xf32>
    %375 = tpu.matmul %367, %6, %cst_75 {dimension_numbers = #tpu.dot_dimension_numbers<[1], [0], [0], [1], [0, 0, 1, 1], [], []>} : vector<2x64xf32>, vector<64x256xf32>, vector<2x256xf32> -> vector<2x256xf32>
    %376 = arith.addf %374, %375 : vector<2x256xf32>
    %377 = vector.broadcast %7 : vector<1x256xf32> to vector<2x256xf32>
    %378 = arith.addf %376, %377 : vector<2x256xf32>
    %379 = arith.negf %378 : vector<2x256xf32>
    %380 = math.exp %379 : vector<2x256xf32>
    %cst_76 = arith.constant 1.000000e+00 : f32
    %381 = vector.broadcast %cst_76 : f32 to vector<2x256xf32>
    %382 = arith.addf %381, %380 : vector<2x256xf32>
    %383 = arith.divf %381, %382 : vector<2x256xf32>
    %384 = math.tanh %378 : vector<2x256xf32>
    %385 = vector.extract_strided_slice %383 {offsets = [0, 0], sizes = [2, 64], strides = [1, 1]} : vector<2x256xf32> to vector<2x64xf32>
    %386 = vector.extract_strided_slice %383 {offsets = [0, 64], sizes = [2, 64], strides = [1, 1]} : vector<2x256xf32> to vector<2x64xf32>
    %387 = vector.extract_strided_slice %384 {offsets = [0, 128], sizes = [2, 64], strides = [1, 1]} : vector<2x256xf32> to vector<2x64xf32>
    %388 = vector.extract_strided_slice %383 {offsets = [0, 192], sizes = [2, 64], strides = [1, 1]} : vector<2x256xf32> to vector<2x64xf32>
    %389 = arith.mulf %386, %365 : vector<2x64xf32>
    %390 = arith.mulf %385, %387 : vector<2x64xf32>
    %391 = arith.addf %389, %390 : vector<2x64xf32>
    %392 = math.tanh %391 : vector<2x64xf32>
    %393 = arith.mulf %388, %392 : vector<2x64xf32>
    %394 = vector.extract_strided_slice %393 {offsets = [0, 0], sizes = [2, 32], strides = [1, 1]} : vector<2x64xf32> to vector<2x32xf32>
    %c28_77 = arith.constant 28 : index
    %c0_78 = arith.constant 0 : index
    %395 = vector.load %arg12[%c28_77, %c0_78] : memref<32x64xf32, #tpu.memory_space<vmem>>, vector<2x32xf32>
    tpu.vector_store %arg12[%c28_77, %c0_78], %394 {strides = array<i32>} : memref<32x64xf32, #tpu.memory_space<vmem>>, vector<2x32xf32>,
    %396 = vector.extract_strided_slice %393 {offsets = [0, 32], sizes = [2, 32], strides = [1, 1]} : vector<2x64xf32> to vector<2x32xf32>
    %c2_79 = arith.constant 2 : index
    %c32_80 = arith.constant 32 : index
    %397 = vector.load %arg12[%c2_79, %c32_80] : memref<32x64xf32, #tpu.memory_space<vmem>>, vector<2x32xf32>
    tpu.vector_store %arg12[%c2_79, %c32_80], %396 {strides = array<i32>} : memref<32x64xf32, #tpu.memory_space<vmem>>, vector<2x32xf32>,
    %398 = vector.extract_strided_slice %5 {offsets = [30, 0], sizes = [2, 256], strides = [1, 1]} : vector<32x512xf32> to vector<2x256xf32>
    %399 = vector.extract_strided_slice %5 {offsets = [0, 256], sizes = [2, 256], strides = [1, 1]} : vector<32x512xf32> to vector<2x256xf32>
    %400 = arith.addf %398, %399 : vector<2x256xf32>
    %cst_81 = arith.constant dense<0.000000e+00> : vector<2x256xf32>
    %401 = tpu.matmul %393, %6, %cst_81 {dimension_numbers = #tpu.dot_dimension_numbers<[1], [0], [0], [1], [0, 0, 1, 1], [], []>} : vector<2x64xf32>, vector<64x256xf32>, vector<2x256xf32> -> vector<2x256xf32>
    %402 = arith.addf %400, %401 : vector<2x256xf32>
    %403 = vector.broadcast %7 : vector<1x256xf32> to vector<2x256xf32>
    %404 = arith.addf %402, %403 : vector<2x256xf32>
    %405 = arith.negf %404 : vector<2x256xf32>
    %406 = math.exp %405 : vector<2x256xf32>
    %cst_82 = arith.constant 1.000000e+00 : f32
    %407 = vector.broadcast %cst_82 : f32 to vector<2x256xf32>
    %408 = arith.addf %407, %406 : vector<2x256xf32>
    %409 = arith.divf %407, %408 : vector<2x256xf32>
    %410 = math.tanh %404 : vector<2x256xf32>
    %411 = vector.extract_strided_slice %409 {offsets = [0, 0], sizes = [2, 64], strides = [1, 1]} : vector<2x256xf32> to vector<2x64xf32>
    %412 = vector.extract_strided_slice %409 {offsets = [0, 64], sizes = [2, 64], strides = [1, 1]} : vector<2x256xf32> to vector<2x64xf32>
    %413 = vector.extract_strided_slice %410 {offsets = [0, 128], sizes = [2, 64], strides = [1, 1]} : vector<2x256xf32> to vector<2x64xf32>
    %414 = vector.extract_strided_slice %409 {offsets = [0, 192], sizes = [2, 64], strides = [1, 1]} : vector<2x256xf32> to vector<2x64xf32>
    %415 = arith.mulf %412, %391 : vector<2x64xf32>
    %416 = arith.mulf %411, %413 : vector<2x64xf32>
    %417 = arith.addf %415, %416 : vector<2x64xf32>
    %418 = math.tanh %417 : vector<2x64xf32>
    %419 = arith.mulf %414, %418 : vector<2x64xf32>
    %420 = vector.extract_strided_slice %419 {offsets = [0, 0], sizes = [2, 32], strides = [1, 1]} : vector<2x64xf32> to vector<2x32xf32>
    %c30_83 = arith.constant 30 : index
    %c0_84 = arith.constant 0 : index
    %421 = vector.load %arg12[%c30_83, %c0_84] : memref<32x64xf32, #tpu.memory_space<vmem>>, vector<2x32xf32>
    tpu.vector_store %arg12[%c30_83, %c0_84], %420 {strides = array<i32>} : memref<32x64xf32, #tpu.memory_space<vmem>>, vector<2x32xf32>,
    %422 = vector.extract_strided_slice %419 {offsets = [0, 32], sizes = [2, 32], strides = [1, 1]} : vector<2x64xf32> to vector<2x32xf32>
    %c0_85 = arith.constant 0 : index
    %c32_86 = arith.constant 32 : index
    %423 = vector.load %arg12[%c0_85, %c32_86] : memref<32x64xf32, #tpu.memory_space<vmem>>, vector<2x32xf32>
    tpu.vector_store %arg12[%c0_85, %c32_86], %422 {strides = array<i32>} : memref<32x64xf32, #tpu.memory_space<vmem>>, vector<2x32xf32>,
    %c0_87 = arith.constant 0 : index
    %c0_88 = arith.constant 0 : index
    %424 = vector.load %arg12[%c0_87, %c0_88] : memref<32x64xf32, #tpu.memory_space<vmem>>, vector<32x64xf32>
    %c0_89 = arith.constant 0 : index
    %c0_90 = arith.constant 0 : index
    %425 = vector.load %arg4[%c0_89, %c0_90] : memref<64x512xf32, #tpu.memory_space<vmem>>, vector<64x512xf32>
    %cst_91 = arith.constant dense<0.000000e+00> : vector<32x512xf32>
    %426 = tpu.matmul %424, %425, %cst_91 {dimension_numbers = #tpu.dot_dimension_numbers<[1], [0], [0], [1], [0, 0, 1, 1], [], []>} : vector<32x64xf32>, vector<64x512xf32>, vector<32x512xf32> -> vector<32x512xf32>
    %c0_92 = arith.constant 0 : index
    %c0_93 = arith.constant 0 : index
    %427 = vector.load %arg5[%c0_92, %c0_93] : memref<64x256xf32, #tpu.memory_space<vmem>>, vector<64x256xf32>
    %c0_94 = arith.constant 0 : index
    %c0_95 = arith.constant 0 : index
    %428 = vector.load %arg6[%c0_94, %c0_95] : memref<1x256xf32, #tpu.memory_space<vmem>>, vector<1x256xf32>
    %429 = vector.extract_strided_slice %426 {offsets = [0, 0], sizes = [2, 256], strides = [1, 1]} : vector<32x512xf32> to vector<2x256xf32>
    %430 = vector.extract_strided_slice %426 {offsets = [30, 256], sizes = [2, 256], strides = [1, 1]} : vector<32x512xf32> to vector<2x256xf32>
    %431 = arith.addf %429, %430 : vector<2x256xf32>
    %cst_96 = arith.constant dense<0.000000e+00> : vector<2x256xf32>
    %432 = tpu.matmul %0, %427, %cst_96 {dimension_numbers = #tpu.dot_dimension_numbers<[1], [0], [0], [1], [0, 0, 1, 1], [], []>} : vector<2x64xf32>, vector<64x256xf32>, vector<2x256xf32> -> vector<2x256xf32>
    %433 = arith.addf %431, %432 : vector<2x256xf32>
    %434 = vector.broadcast %428 : vector<1x256xf32> to vector<2x256xf32>
    %435 = arith.addf %433, %434 : vector<2x256xf32>
    %436 = arith.negf %435 : vector<2x256xf32>
    %437 = math.exp %436 : vector<2x256xf32>
    %cst_97 = arith.constant 1.000000e+00 : f32
    %438 = vector.broadcast %cst_97 : f32 to vector<2x256xf32>
    %439 = arith.addf %438, %437 : vector<2x256xf32>
    %440 = arith.divf %438, %439 : vector<2x256xf32>
    %441 = math.tanh %435 : vector<2x256xf32>
    %442 = vector.extract_strided_slice %440 {offsets = [0, 0], sizes = [2, 64], strides = [1, 1]} : vector<2x256xf32> to vector<2x64xf32>
    %443 = vector.extract_strided_slice %440 {offsets = [0, 64], sizes = [2, 64], strides = [1, 1]} : vector<2x256xf32> to vector<2x64xf32>
    %444 = vector.extract_strided_slice %441 {offsets = [0, 128], sizes = [2, 64], strides = [1, 1]} : vector<2x256xf32> to vector<2x64xf32>
    %445 = vector.extract_strided_slice %440 {offsets = [0, 192], sizes = [2, 64], strides = [1, 1]} : vector<2x256xf32> to vector<2x64xf32>
    %446 = arith.mulf %443, %0 : vector<2x64xf32>
    %447 = arith.mulf %442, %444 : vector<2x64xf32>
    %448 = arith.addf %446, %447 : vector<2x64xf32>
    %449 = math.tanh %448 : vector<2x64xf32>
    %450 = arith.mulf %445, %449 : vector<2x64xf32>
    %451 = vector.extract_strided_slice %426 {offsets = [2, 0], sizes = [2, 256], strides = [1, 1]} : vector<32x512xf32> to vector<2x256xf32>
    %452 = vector.extract_strided_slice %426 {offsets = [28, 256], sizes = [2, 256], strides = [1, 1]} : vector<32x512xf32> to vector<2x256xf32>
    %453 = arith.addf %451, %452 : vector<2x256xf32>
    %cst_98 = arith.constant dense<0.000000e+00> : vector<2x256xf32>
    %454 = tpu.matmul %450, %427, %cst_98 {dimension_numbers = #tpu.dot_dimension_numbers<[1], [0], [0], [1], [0, 0, 1, 1], [], []>} : vector<2x64xf32>, vector<64x256xf32>, vector<2x256xf32> -> vector<2x256xf32>
    %455 = arith.addf %453, %454 : vector<2x256xf32>
    %456 = vector.broadcast %428 : vector<1x256xf32> to vector<2x256xf32>
    %457 = arith.addf %455, %456 : vector<2x256xf32>
    %458 = arith.negf %457 : vector<2x256xf32>
    %459 = math.exp %458 : vector<2x256xf32>
    %cst_99 = arith.constant 1.000000e+00 : f32
    %460 = vector.broadcast %cst_99 : f32 to vector<2x256xf32>
    %461 = arith.addf %460, %459 : vector<2x256xf32>
    %462 = arith.divf %460, %461 : vector<2x256xf32>
    %463 = math.tanh %457 : vector<2x256xf32>
    %464 = vector.extract_strided_slice %462 {offsets = [0, 0], sizes = [2, 64], strides = [1, 1]} : vector<2x256xf32> to vector<2x64xf32>
    %465 = vector.extract_strided_slice %462 {offsets = [0, 64], sizes = [2, 64], strides = [1, 1]} : vector<2x256xf32> to vector<2x64xf32>
    %466 = vector.extract_strided_slice %463 {offsets = [0, 128], sizes = [2, 64], strides = [1, 1]} : vector<2x256xf32> to vector<2x64xf32>
    %467 = vector.extract_strided_slice %462 {offsets = [0, 192], sizes = [2, 64], strides = [1, 1]} : vector<2x256xf32> to vector<2x64xf32>
    %468 = arith.mulf %465, %448 : vector<2x64xf32>
    %469 = arith.mulf %464, %466 : vector<2x64xf32>
    %470 = arith.addf %468, %469 : vector<2x64xf32>
    %471 = math.tanh %470 : vector<2x64xf32>
    %472 = arith.mulf %467, %471 : vector<2x64xf32>
    %473 = vector.extract_strided_slice %426 {offsets = [4, 0], sizes = [2, 256], strides = [1, 1]} : vector<32x512xf32> to vector<2x256xf32>
    %474 = vector.extract_strided_slice %426 {offsets = [26, 256], sizes = [2, 256], strides = [1, 1]} : vector<32x512xf32> to vector<2x256xf32>
    %475 = arith.addf %473, %474 : vector<2x256xf32>
    %cst_100 = arith.constant dense<0.000000e+00> : vector<2x256xf32>
    %476 = tpu.matmul %472, %427, %cst_100 {dimension_numbers = #tpu.dot_dimension_numbers<[1], [0], [0], [1], [0, 0, 1, 1], [], []>} : vector<2x64xf32>, vector<64x256xf32>, vector<2x256xf32> -> vector<2x256xf32>
    %477 = arith.addf %475, %476 : vector<2x256xf32>
    %478 = vector.broadcast %428 : vector<1x256xf32> to vector<2x256xf32>
    %479 = arith.addf %477, %478 : vector<2x256xf32>
    %480 = arith.negf %479 : vector<2x256xf32>
    %481 = math.exp %480 : vector<2x256xf32>
    %cst_101 = arith.constant 1.000000e+00 : f32
    %482 = vector.broadcast %cst_101 : f32 to vector<2x256xf32>
    %483 = arith.addf %482, %481 : vector<2x256xf32>
    %484 = arith.divf %482, %483 : vector<2x256xf32>
    %485 = math.tanh %479 : vector<2x256xf32>
    %486 = vector.extract_strided_slice %484 {offsets = [0, 0], sizes = [2, 64], strides = [1, 1]} : vector<2x256xf32> to vector<2x64xf32>
    %487 = vector.extract_strided_slice %484 {offsets = [0, 64], sizes = [2, 64], strides = [1, 1]} : vector<2x256xf32> to vector<2x64xf32>
    %488 = vector.extract_strided_slice %485 {offsets = [0, 128], sizes = [2, 64], strides = [1, 1]} : vector<2x256xf32> to vector<2x64xf32>
    %489 = vector.extract_strided_slice %484 {offsets = [0, 192], sizes = [2, 64], strides = [1, 1]} : vector<2x256xf32> to vector<2x64xf32>
    %490 = arith.mulf %487, %470 : vector<2x64xf32>
    %491 = arith.mulf %486, %488 : vector<2x64xf32>
    %492 = arith.addf %490, %491 : vector<2x64xf32>
    %493 = math.tanh %492 : vector<2x64xf32>
    %494 = arith.mulf %489, %493 : vector<2x64xf32>
    %495 = vector.extract_strided_slice %426 {offsets = [6, 0], sizes = [2, 256], strides = [1, 1]} : vector<32x512xf32> to vector<2x256xf32>
    %496 = vector.extract_strided_slice %426 {offsets = [24, 256], sizes = [2, 256], strides = [1, 1]} : vector<32x512xf32> to vector<2x256xf32>
    %497 = arith.addf %495, %496 : vector<2x256xf32>
    %cst_102 = arith.constant dense<0.000000e+00> : vector<2x256xf32>
    %498 = tpu.matmul %494, %427, %cst_102 {dimension_numbers = #tpu.dot_dimension_numbers<[1], [0], [0], [1], [0, 0, 1, 1], [], []>} : vector<2x64xf32>, vector<64x256xf32>, vector<2x256xf32> -> vector<2x256xf32>
    %499 = arith.addf %497, %498 : vector<2x256xf32>
    %500 = vector.broadcast %428 : vector<1x256xf32> to vector<2x256xf32>
    %501 = arith.addf %499, %500 : vector<2x256xf32>
    %502 = arith.negf %501 : vector<2x256xf32>
    %503 = math.exp %502 : vector<2x256xf32>
    %cst_103 = arith.constant 1.000000e+00 : f32
    %504 = vector.broadcast %cst_103 : f32 to vector<2x256xf32>
    %505 = arith.addf %504, %503 : vector<2x256xf32>
    %506 = arith.divf %504, %505 : vector<2x256xf32>
    %507 = math.tanh %501 : vector<2x256xf32>
    %508 = vector.extract_strided_slice %506 {offsets = [0, 0], sizes = [2, 64], strides = [1, 1]} : vector<2x256xf32> to vector<2x64xf32>
    %509 = vector.extract_strided_slice %506 {offsets = [0, 64], sizes = [2, 64], strides = [1, 1]} : vector<2x256xf32> to vector<2x64xf32>
    %510 = vector.extract_strided_slice %507 {offsets = [0, 128], sizes = [2, 64], strides = [1, 1]} : vector<2x256xf32> to vector<2x64xf32>
    %511 = vector.extract_strided_slice %506 {offsets = [0, 192], sizes = [2, 64], strides = [1, 1]} : vector<2x256xf32> to vector<2x64xf32>
    %512 = arith.mulf %509, %492 : vector<2x64xf32>
    %513 = arith.mulf %508, %510 : vector<2x64xf32>
    %514 = arith.addf %512, %513 : vector<2x64xf32>
    %515 = math.tanh %514 : vector<2x64xf32>
    %516 = arith.mulf %511, %515 : vector<2x64xf32>
    %517 = vector.extract_strided_slice %426 {offsets = [8, 0], sizes = [2, 256], strides = [1, 1]} : vector<32x512xf32> to vector<2x256xf32>
    %518 = vector.extract_strided_slice %426 {offsets = [22, 256], sizes = [2, 256], strides = [1, 1]} : vector<32x512xf32> to vector<2x256xf32>
    %519 = arith.addf %517, %518 : vector<2x256xf32>
    %cst_104 = arith.constant dense<0.000000e+00> : vector<2x256xf32>
    %520 = tpu.matmul %516, %427, %cst_104 {dimension_numbers = #tpu.dot_dimension_numbers<[1], [0], [0], [1], [0, 0, 1, 1], [], []>} : vector<2x64xf32>, vector<64x256xf32>, vector<2x256xf32> -> vector<2x256xf32>
    %521 = arith.addf %519, %520 : vector<2x256xf32>
    %522 = vector.broadcast %428 : vector<1x256xf32> to vector<2x256xf32>
    %523 = arith.addf %521, %522 : vector<2x256xf32>
    %524 = arith.negf %523 : vector<2x256xf32>
    %525 = math.exp %524 : vector<2x256xf32>
    %cst_105 = arith.constant 1.000000e+00 : f32
    %526 = vector.broadcast %cst_105 : f32 to vector<2x256xf32>
    %527 = arith.addf %526, %525 : vector<2x256xf32>
    %528 = arith.divf %526, %527 : vector<2x256xf32>
    %529 = math.tanh %523 : vector<2x256xf32>
    %530 = vector.extract_strided_slice %528 {offsets = [0, 0], sizes = [2, 64], strides = [1, 1]} : vector<2x256xf32> to vector<2x64xf32>
    %531 = vector.extract_strided_slice %528 {offsets = [0, 64], sizes = [2, 64], strides = [1, 1]} : vector<2x256xf32> to vector<2x64xf32>
    %532 = vector.extract_strided_slice %529 {offsets = [0, 128], sizes = [2, 64], strides = [1, 1]} : vector<2x256xf32> to vector<2x64xf32>
    %533 = vector.extract_strided_slice %528 {offsets = [0, 192], sizes = [2, 64], strides = [1, 1]} : vector<2x256xf32> to vector<2x64xf32>
    %534 = arith.mulf %531, %514 : vector<2x64xf32>
    %535 = arith.mulf %530, %532 : vector<2x64xf32>
    %536 = arith.addf %534, %535 : vector<2x64xf32>
    %537 = math.tanh %536 : vector<2x64xf32>
    %538 = arith.mulf %533, %537 : vector<2x64xf32>
    %539 = vector.extract_strided_slice %426 {offsets = [10, 0], sizes = [2, 256], strides = [1, 1]} : vector<32x512xf32> to vector<2x256xf32>
    %540 = vector.extract_strided_slice %426 {offsets = [20, 256], sizes = [2, 256], strides = [1, 1]} : vector<32x512xf32> to vector<2x256xf32>
    %541 = arith.addf %539, %540 : vector<2x256xf32>
    %cst_106 = arith.constant dense<0.000000e+00> : vector<2x256xf32>
    %542 = tpu.matmul %538, %427, %cst_106 {dimension_numbers = #tpu.dot_dimension_numbers<[1], [0], [0], [1], [0, 0, 1, 1], [], []>} : vector<2x64xf32>, vector<64x256xf32>, vector<2x256xf32> -> vector<2x256xf32>
    %543 = arith.addf %541, %542 : vector<2x256xf32>
    %544 = vector.broadcast %428 : vector<1x256xf32> to vector<2x256xf32>
    %545 = arith.addf %543, %544 : vector<2x256xf32>
    %546 = arith.negf %545 : vector<2x256xf32>
    %547 = math.exp %546 : vector<2x256xf32>
    %cst_107 = arith.constant 1.000000e+00 : f32
    %548 = vector.broadcast %cst_107 : f32 to vector<2x256xf32>
    %549 = arith.addf %548, %547 : vector<2x256xf32>
    %550 = arith.divf %548, %549 : vector<2x256xf32>
    %551 = math.tanh %545 : vector<2x256xf32>
    %552 = vector.extract_strided_slice %550 {offsets = [0, 0], sizes = [2, 64], strides = [1, 1]} : vector<2x256xf32> to vector<2x64xf32>
    %553 = vector.extract_strided_slice %550 {offsets = [0, 64], sizes = [2, 64], strides = [1, 1]} : vector<2x256xf32> to vector<2x64xf32>
    %554 = vector.extract_strided_slice %551 {offsets = [0, 128], sizes = [2, 64], strides = [1, 1]} : vector<2x256xf32> to vector<2x64xf32>
    %555 = vector.extract_strided_slice %550 {offsets = [0, 192], sizes = [2, 64], strides = [1, 1]} : vector<2x256xf32> to vector<2x64xf32>
    %556 = arith.mulf %553, %536 : vector<2x64xf32>
    %557 = arith.mulf %552, %554 : vector<2x64xf32>
    %558 = arith.addf %556, %557 : vector<2x64xf32>
    %559 = math.tanh %558 : vector<2x64xf32>
    %560 = arith.mulf %555, %559 : vector<2x64xf32>
    %561 = vector.extract_strided_slice %426 {offsets = [12, 0], sizes = [2, 256], strides = [1, 1]} : vector<32x512xf32> to vector<2x256xf32>
    %562 = vector.extract_strided_slice %426 {offsets = [18, 256], sizes = [2, 256], strides = [1, 1]} : vector<32x512xf32> to vector<2x256xf32>
    %563 = arith.addf %561, %562 : vector<2x256xf32>
    %cst_108 = arith.constant dense<0.000000e+00> : vector<2x256xf32>
    %564 = tpu.matmul %560, %427, %cst_108 {dimension_numbers = #tpu.dot_dimension_numbers<[1], [0], [0], [1], [0, 0, 1, 1], [], []>} : vector<2x64xf32>, vector<64x256xf32>, vector<2x256xf32> -> vector<2x256xf32>
    %565 = arith.addf %563, %564 : vector<2x256xf32>
    %566 = vector.broadcast %428 : vector<1x256xf32> to vector<2x256xf32>
    %567 = arith.addf %565, %566 : vector<2x256xf32>
    %568 = arith.negf %567 : vector<2x256xf32>
    %569 = math.exp %568 : vector<2x256xf32>
    %cst_109 = arith.constant 1.000000e+00 : f32
    %570 = vector.broadcast %cst_109 : f32 to vector<2x256xf32>
    %571 = arith.addf %570, %569 : vector<2x256xf32>
    %572 = arith.divf %570, %571 : vector<2x256xf32>
    %573 = math.tanh %567 : vector<2x256xf32>
    %574 = vector.extract_strided_slice %572 {offsets = [0, 0], sizes = [2, 64], strides = [1, 1]} : vector<2x256xf32> to vector<2x64xf32>
    %575 = vector.extract_strided_slice %572 {offsets = [0, 64], sizes = [2, 64], strides = [1, 1]} : vector<2x256xf32> to vector<2x64xf32>
    %576 = vector.extract_strided_slice %573 {offsets = [0, 128], sizes = [2, 64], strides = [1, 1]} : vector<2x256xf32> to vector<2x64xf32>
    %577 = vector.extract_strided_slice %572 {offsets = [0, 192], sizes = [2, 64], strides = [1, 1]} : vector<2x256xf32> to vector<2x64xf32>
    %578 = arith.mulf %575, %558 : vector<2x64xf32>
    %579 = arith.mulf %574, %576 : vector<2x64xf32>
    %580 = arith.addf %578, %579 : vector<2x64xf32>
    %581 = math.tanh %580 : vector<2x64xf32>
    %582 = arith.mulf %577, %581 : vector<2x64xf32>
    %583 = vector.extract_strided_slice %426 {offsets = [14, 0], sizes = [2, 256], strides = [1, 1]} : vector<32x512xf32> to vector<2x256xf32>
    %584 = vector.extract_strided_slice %426 {offsets = [16, 256], sizes = [2, 256], strides = [1, 1]} : vector<32x512xf32> to vector<2x256xf32>
    %585 = arith.addf %583, %584 : vector<2x256xf32>
    %cst_110 = arith.constant dense<0.000000e+00> : vector<2x256xf32>
    %586 = tpu.matmul %582, %427, %cst_110 {dimension_numbers = #tpu.dot_dimension_numbers<[1], [0], [0], [1], [0, 0, 1, 1], [], []>} : vector<2x64xf32>, vector<64x256xf32>, vector<2x256xf32> -> vector<2x256xf32>
    %587 = arith.addf %585, %586 : vector<2x256xf32>
    %588 = vector.broadcast %428 : vector<1x256xf32> to vector<2x256xf32>
    %589 = arith.addf %587, %588 : vector<2x256xf32>
    %590 = arith.negf %589 : vector<2x256xf32>
    %591 = math.exp %590 : vector<2x256xf32>
    %cst_111 = arith.constant 1.000000e+00 : f32
    %592 = vector.broadcast %cst_111 : f32 to vector<2x256xf32>
    %593 = arith.addf %592, %591 : vector<2x256xf32>
    %594 = arith.divf %592, %593 : vector<2x256xf32>
    %595 = math.tanh %589 : vector<2x256xf32>
    %596 = vector.extract_strided_slice %594 {offsets = [0, 0], sizes = [2, 64], strides = [1, 1]} : vector<2x256xf32> to vector<2x64xf32>
    %597 = vector.extract_strided_slice %594 {offsets = [0, 64], sizes = [2, 64], strides = [1, 1]} : vector<2x256xf32> to vector<2x64xf32>
    %598 = vector.extract_strided_slice %595 {offsets = [0, 128], sizes = [2, 64], strides = [1, 1]} : vector<2x256xf32> to vector<2x64xf32>
    %599 = vector.extract_strided_slice %594 {offsets = [0, 192], sizes = [2, 64], strides = [1, 1]} : vector<2x256xf32> to vector<2x64xf32>
    %600 = arith.mulf %597, %580 : vector<2x64xf32>
    %601 = arith.mulf %596, %598 : vector<2x64xf32>
    %602 = arith.addf %600, %601 : vector<2x64xf32>
    %603 = math.tanh %602 : vector<2x64xf32>
    %604 = arith.mulf %599, %603 : vector<2x64xf32>
    %605 = vector.extract_strided_slice %426 {offsets = [16, 0], sizes = [2, 256], strides = [1, 1]} : vector<32x512xf32> to vector<2x256xf32>
    %606 = vector.extract_strided_slice %426 {offsets = [14, 256], sizes = [2, 256], strides = [1, 1]} : vector<32x512xf32> to vector<2x256xf32>
    %607 = arith.addf %605, %606 : vector<2x256xf32>
    %cst_112 = arith.constant dense<0.000000e+00> : vector<2x256xf32>
    %608 = tpu.matmul %604, %427, %cst_112 {dimension_numbers = #tpu.dot_dimension_numbers<[1], [0], [0], [1], [0, 0, 1, 1], [], []>} : vector<2x64xf32>, vector<64x256xf32>, vector<2x256xf32> -> vector<2x256xf32>
    %609 = arith.addf %607, %608 : vector<2x256xf32>
    %610 = vector.broadcast %428 : vector<1x256xf32> to vector<2x256xf32>
    %611 = arith.addf %609, %610 : vector<2x256xf32>
    %612 = arith.negf %611 : vector<2x256xf32>
    %613 = math.exp %612 : vector<2x256xf32>
    %cst_113 = arith.constant 1.000000e+00 : f32
    %614 = vector.broadcast %cst_113 : f32 to vector<2x256xf32>
    %615 = arith.addf %614, %613 : vector<2x256xf32>
    %616 = arith.divf %614, %615 : vector<2x256xf32>
    %617 = math.tanh %611 : vector<2x256xf32>
    %618 = vector.extract_strided_slice %616 {offsets = [0, 0], sizes = [2, 64], strides = [1, 1]} : vector<2x256xf32> to vector<2x64xf32>
    %619 = vector.extract_strided_slice %616 {offsets = [0, 64], sizes = [2, 64], strides = [1, 1]} : vector<2x256xf32> to vector<2x64xf32>
    %620 = vector.extract_strided_slice %617 {offsets = [0, 128], sizes = [2, 64], strides = [1, 1]} : vector<2x256xf32> to vector<2x64xf32>
    %621 = vector.extract_strided_slice %616 {offsets = [0, 192], sizes = [2, 64], strides = [1, 1]} : vector<2x256xf32> to vector<2x64xf32>
    %622 = arith.mulf %619, %602 : vector<2x64xf32>
    %623 = arith.mulf %618, %620 : vector<2x64xf32>
    %624 = arith.addf %622, %623 : vector<2x64xf32>
    %625 = math.tanh %624 : vector<2x64xf32>
    %626 = arith.mulf %621, %625 : vector<2x64xf32>
    %627 = vector.extract_strided_slice %426 {offsets = [18, 0], sizes = [2, 256], strides = [1, 1]} : vector<32x512xf32> to vector<2x256xf32>
    %628 = vector.extract_strided_slice %426 {offsets = [12, 256], sizes = [2, 256], strides = [1, 1]} : vector<32x512xf32> to vector<2x256xf32>
    %629 = arith.addf %627, %628 : vector<2x256xf32>
    %cst_114 = arith.constant dense<0.000000e+00> : vector<2x256xf32>
    %630 = tpu.matmul %626, %427, %cst_114 {dimension_numbers = #tpu.dot_dimension_numbers<[1], [0], [0], [1], [0, 0, 1, 1], [], []>} : vector<2x64xf32>, vector<64x256xf32>, vector<2x256xf32> -> vector<2x256xf32>
    %631 = arith.addf %629, %630 : vector<2x256xf32>
    %632 = vector.broadcast %428 : vector<1x256xf32> to vector<2x256xf32>
    %633 = arith.addf %631, %632 : vector<2x256xf32>
    %634 = arith.negf %633 : vector<2x256xf32>
    %635 = math.exp %634 : vector<2x256xf32>
    %cst_115 = arith.constant 1.000000e+00 : f32
    %636 = vector.broadcast %cst_115 : f32 to vector<2x256xf32>
    %637 = arith.addf %636, %635 : vector<2x256xf32>
    %638 = arith.divf %636, %637 : vector<2x256xf32>
    %639 = math.tanh %633 : vector<2x256xf32>
    %640 = vector.extract_strided_slice %638 {offsets = [0, 0], sizes = [2, 64], strides = [1, 1]} : vector<2x256xf32> to vector<2x64xf32>
    %641 = vector.extract_strided_slice %638 {offsets = [0, 64], sizes = [2, 64], strides = [1, 1]} : vector<2x256xf32> to vector<2x64xf32>
    %642 = vector.extract_strided_slice %639 {offsets = [0, 128], sizes = [2, 64], strides = [1, 1]} : vector<2x256xf32> to vector<2x64xf32>
    %643 = vector.extract_strided_slice %638 {offsets = [0, 192], sizes = [2, 64], strides = [1, 1]} : vector<2x256xf32> to vector<2x64xf32>
    %644 = arith.mulf %641, %624 : vector<2x64xf32>
    %645 = arith.mulf %640, %642 : vector<2x64xf32>
    %646 = arith.addf %644, %645 : vector<2x64xf32>
    %647 = math.tanh %646 : vector<2x64xf32>
    %648 = arith.mulf %643, %647 : vector<2x64xf32>
    %649 = vector.extract_strided_slice %426 {offsets = [20, 0], sizes = [2, 256], strides = [1, 1]} : vector<32x512xf32> to vector<2x256xf32>
    %650 = vector.extract_strided_slice %426 {offsets = [10, 256], sizes = [2, 256], strides = [1, 1]} : vector<32x512xf32> to vector<2x256xf32>
    %651 = arith.addf %649, %650 : vector<2x256xf32>
    %cst_116 = arith.constant dense<0.000000e+00> : vector<2x256xf32>
    %652 = tpu.matmul %648, %427, %cst_116 {dimension_numbers = #tpu.dot_dimension_numbers<[1], [0], [0], [1], [0, 0, 1, 1], [], []>} : vector<2x64xf32>, vector<64x256xf32>, vector<2x256xf32> -> vector<2x256xf32>
    %653 = arith.addf %651, %652 : vector<2x256xf32>
    %654 = vector.broadcast %428 : vector<1x256xf32> to vector<2x256xf32>
    %655 = arith.addf %653, %654 : vector<2x256xf32>
    %656 = arith.negf %655 : vector<2x256xf32>
    %657 = math.exp %656 : vector<2x256xf32>
    %cst_117 = arith.constant 1.000000e+00 : f32
    %658 = vector.broadcast %cst_117 : f32 to vector<2x256xf32>
    %659 = arith.addf %658, %657 : vector<2x256xf32>
    %660 = arith.divf %658, %659 : vector<2x256xf32>
    %661 = math.tanh %655 : vector<2x256xf32>
    %662 = vector.extract_strided_slice %660 {offsets = [0, 0], sizes = [2, 64], strides = [1, 1]} : vector<2x256xf32> to vector<2x64xf32>
    %663 = vector.extract_strided_slice %660 {offsets = [0, 64], sizes = [2, 64], strides = [1, 1]} : vector<2x256xf32> to vector<2x64xf32>
    %664 = vector.extract_strided_slice %661 {offsets = [0, 128], sizes = [2, 64], strides = [1, 1]} : vector<2x256xf32> to vector<2x64xf32>
    %665 = vector.extract_strided_slice %660 {offsets = [0, 192], sizes = [2, 64], strides = [1, 1]} : vector<2x256xf32> to vector<2x64xf32>
    %666 = arith.mulf %663, %646 : vector<2x64xf32>
    %667 = arith.mulf %662, %664 : vector<2x64xf32>
    %668 = arith.addf %666, %667 : vector<2x64xf32>
    %669 = math.tanh %668 : vector<2x64xf32>
    %670 = arith.mulf %665, %669 : vector<2x64xf32>
    %671 = vector.extract_strided_slice %426 {offsets = [22, 0], sizes = [2, 256], strides = [1, 1]} : vector<32x512xf32> to vector<2x256xf32>
    %672 = vector.extract_strided_slice %426 {offsets = [8, 256], sizes = [2, 256], strides = [1, 1]} : vector<32x512xf32> to vector<2x256xf32>
    %673 = arith.addf %671, %672 : vector<2x256xf32>
    %cst_118 = arith.constant dense<0.000000e+00> : vector<2x256xf32>
    %674 = tpu.matmul %670, %427, %cst_118 {dimension_numbers = #tpu.dot_dimension_numbers<[1], [0], [0], [1], [0, 0, 1, 1], [], []>} : vector<2x64xf32>, vector<64x256xf32>, vector<2x256xf32> -> vector<2x256xf32>
    %675 = arith.addf %673, %674 : vector<2x256xf32>
    %676 = vector.broadcast %428 : vector<1x256xf32> to vector<2x256xf32>
    %677 = arith.addf %675, %676 : vector<2x256xf32>
    %678 = arith.negf %677 : vector<2x256xf32>
    %679 = math.exp %678 : vector<2x256xf32>
    %cst_119 = arith.constant 1.000000e+00 : f32
    %680 = vector.broadcast %cst_119 : f32 to vector<2x256xf32>
    %681 = arith.addf %680, %679 : vector<2x256xf32>
    %682 = arith.divf %680, %681 : vector<2x256xf32>
    %683 = math.tanh %677 : vector<2x256xf32>
    %684 = vector.extract_strided_slice %682 {offsets = [0, 0], sizes = [2, 64], strides = [1, 1]} : vector<2x256xf32> to vector<2x64xf32>
    %685 = vector.extract_strided_slice %682 {offsets = [0, 64], sizes = [2, 64], strides = [1, 1]} : vector<2x256xf32> to vector<2x64xf32>
    %686 = vector.extract_strided_slice %683 {offsets = [0, 128], sizes = [2, 64], strides = [1, 1]} : vector<2x256xf32> to vector<2x64xf32>
    %687 = vector.extract_strided_slice %682 {offsets = [0, 192], sizes = [2, 64], strides = [1, 1]} : vector<2x256xf32> to vector<2x64xf32>
    %688 = arith.mulf %685, %668 : vector<2x64xf32>
    %689 = arith.mulf %684, %686 : vector<2x64xf32>
    %690 = arith.addf %688, %689 : vector<2x64xf32>
    %691 = math.tanh %690 : vector<2x64xf32>
    %692 = arith.mulf %687, %691 : vector<2x64xf32>
    %693 = vector.extract_strided_slice %426 {offsets = [24, 0], sizes = [2, 256], strides = [1, 1]} : vector<32x512xf32> to vector<2x256xf32>
    %694 = vector.extract_strided_slice %426 {offsets = [6, 256], sizes = [2, 256], strides = [1, 1]} : vector<32x512xf32> to vector<2x256xf32>
    %695 = arith.addf %693, %694 : vector<2x256xf32>
    %cst_120 = arith.constant dense<0.000000e+00> : vector<2x256xf32>
    %696 = tpu.matmul %692, %427, %cst_120 {dimension_numbers = #tpu.dot_dimension_numbers<[1], [0], [0], [1], [0, 0, 1, 1], [], []>} : vector<2x64xf32>, vector<64x256xf32>, vector<2x256xf32> -> vector<2x256xf32>
    %697 = arith.addf %695, %696 : vector<2x256xf32>
    %698 = vector.broadcast %428 : vector<1x256xf32> to vector<2x256xf32>
    %699 = arith.addf %697, %698 : vector<2x256xf32>
    %700 = arith.negf %699 : vector<2x256xf32>
    %701 = math.exp %700 : vector<2x256xf32>
    %cst_121 = arith.constant 1.000000e+00 : f32
    %702 = vector.broadcast %cst_121 : f32 to vector<2x256xf32>
    %703 = arith.addf %702, %701 : vector<2x256xf32>
    %704 = arith.divf %702, %703 : vector<2x256xf32>
    %705 = math.tanh %699 : vector<2x256xf32>
    %706 = vector.extract_strided_slice %704 {offsets = [0, 0], sizes = [2, 64], strides = [1, 1]} : vector<2x256xf32> to vector<2x64xf32>
    %707 = vector.extract_strided_slice %704 {offsets = [0, 64], sizes = [2, 64], strides = [1, 1]} : vector<2x256xf32> to vector<2x64xf32>
    %708 = vector.extract_strided_slice %705 {offsets = [0, 128], sizes = [2, 64], strides = [1, 1]} : vector<2x256xf32> to vector<2x64xf32>
    %709 = vector.extract_strided_slice %704 {offsets = [0, 192], sizes = [2, 64], strides = [1, 1]} : vector<2x256xf32> to vector<2x64xf32>
    %710 = arith.mulf %707, %690 : vector<2x64xf32>
    %711 = arith.mulf %706, %708 : vector<2x64xf32>
    %712 = arith.addf %710, %711 : vector<2x64xf32>
    %713 = math.tanh %712 : vector<2x64xf32>
    %714 = arith.mulf %709, %713 : vector<2x64xf32>
    %715 = vector.extract_strided_slice %426 {offsets = [26, 0], sizes = [2, 256], strides = [1, 1]} : vector<32x512xf32> to vector<2x256xf32>
    %716 = vector.extract_strided_slice %426 {offsets = [4, 256], sizes = [2, 256], strides = [1, 1]} : vector<32x512xf32> to vector<2x256xf32>
    %717 = arith.addf %715, %716 : vector<2x256xf32>
    %cst_122 = arith.constant dense<0.000000e+00> : vector<2x256xf32>
    %718 = tpu.matmul %714, %427, %cst_122 {dimension_numbers = #tpu.dot_dimension_numbers<[1], [0], [0], [1], [0, 0, 1, 1], [], []>} : vector<2x64xf32>, vector<64x256xf32>, vector<2x256xf32> -> vector<2x256xf32>
    %719 = arith.addf %717, %718 : vector<2x256xf32>
    %720 = vector.broadcast %428 : vector<1x256xf32> to vector<2x256xf32>
    %721 = arith.addf %719, %720 : vector<2x256xf32>
    %722 = arith.negf %721 : vector<2x256xf32>
    %723 = math.exp %722 : vector<2x256xf32>
    %cst_123 = arith.constant 1.000000e+00 : f32
    %724 = vector.broadcast %cst_123 : f32 to vector<2x256xf32>
    %725 = arith.addf %724, %723 : vector<2x256xf32>
    %726 = arith.divf %724, %725 : vector<2x256xf32>
    %727 = math.tanh %721 : vector<2x256xf32>
    %728 = vector.extract_strided_slice %726 {offsets = [0, 0], sizes = [2, 64], strides = [1, 1]} : vector<2x256xf32> to vector<2x64xf32>
    %729 = vector.extract_strided_slice %726 {offsets = [0, 64], sizes = [2, 64], strides = [1, 1]} : vector<2x256xf32> to vector<2x64xf32>
    %730 = vector.extract_strided_slice %727 {offsets = [0, 128], sizes = [2, 64], strides = [1, 1]} : vector<2x256xf32> to vector<2x64xf32>
    %731 = vector.extract_strided_slice %726 {offsets = [0, 192], sizes = [2, 64], strides = [1, 1]} : vector<2x256xf32> to vector<2x64xf32>
    %732 = arith.mulf %729, %712 : vector<2x64xf32>
    %733 = arith.mulf %728, %730 : vector<2x64xf32>
    %734 = arith.addf %732, %733 : vector<2x64xf32>
    %735 = math.tanh %734 : vector<2x64xf32>
    %736 = arith.mulf %731, %735 : vector<2x64xf32>
    %737 = vector.extract_strided_slice %426 {offsets = [28, 0], sizes = [2, 256], strides = [1, 1]} : vector<32x512xf32> to vector<2x256xf32>
    %738 = vector.extract_strided_slice %426 {offsets = [2, 256], sizes = [2, 256], strides = [1, 1]} : vector<32x512xf32> to vector<2x256xf32>
    %739 = arith.addf %737, %738 : vector<2x256xf32>
    %cst_124 = arith.constant dense<0.000000e+00> : vector<2x256xf32>
    %740 = tpu.matmul %736, %427, %cst_124 {dimension_numbers = #tpu.dot_dimension_numbers<[1], [0], [0], [1], [0, 0, 1, 1], [], []>} : vector<2x64xf32>, vector<64x256xf32>, vector<2x256xf32> -> vector<2x256xf32>
    %741 = arith.addf %739, %740 : vector<2x256xf32>
    %742 = vector.broadcast %428 : vector<1x256xf32> to vector<2x256xf32>
    %743 = arith.addf %741, %742 : vector<2x256xf32>
    %744 = arith.negf %743 : vector<2x256xf32>
    %745 = math.exp %744 : vector<2x256xf32>
    %cst_125 = arith.constant 1.000000e+00 : f32
    %746 = vector.broadcast %cst_125 : f32 to vector<2x256xf32>
    %747 = arith.addf %746, %745 : vector<2x256xf32>
    %748 = arith.divf %746, %747 : vector<2x256xf32>
    %749 = math.tanh %743 : vector<2x256xf32>
    %750 = vector.extract_strided_slice %748 {offsets = [0, 0], sizes = [2, 64], strides = [1, 1]} : vector<2x256xf32> to vector<2x64xf32>
    %751 = vector.extract_strided_slice %748 {offsets = [0, 64], sizes = [2, 64], strides = [1, 1]} : vector<2x256xf32> to vector<2x64xf32>
    %752 = vector.extract_strided_slice %749 {offsets = [0, 128], sizes = [2, 64], strides = [1, 1]} : vector<2x256xf32> to vector<2x64xf32>
    %753 = vector.extract_strided_slice %748 {offsets = [0, 192], sizes = [2, 64], strides = [1, 1]} : vector<2x256xf32> to vector<2x64xf32>
    %754 = arith.mulf %751, %734 : vector<2x64xf32>
    %755 = arith.mulf %750, %752 : vector<2x64xf32>
    %756 = arith.addf %754, %755 : vector<2x64xf32>
    %757 = math.tanh %756 : vector<2x64xf32>
    %758 = arith.mulf %753, %757 : vector<2x64xf32>
    %759 = vector.extract_strided_slice %426 {offsets = [30, 0], sizes = [2, 256], strides = [1, 1]} : vector<32x512xf32> to vector<2x256xf32>
    %760 = vector.extract_strided_slice %426 {offsets = [0, 256], sizes = [2, 256], strides = [1, 1]} : vector<32x512xf32> to vector<2x256xf32>
    %761 = arith.addf %759, %760 : vector<2x256xf32>
    %cst_126 = arith.constant dense<0.000000e+00> : vector<2x256xf32>
    %762 = tpu.matmul %758, %427, %cst_126 {dimension_numbers = #tpu.dot_dimension_numbers<[1], [0], [0], [1], [0, 0, 1, 1], [], []>} : vector<2x64xf32>, vector<64x256xf32>, vector<2x256xf32> -> vector<2x256xf32>
    %763 = arith.addf %761, %762 : vector<2x256xf32>
    %764 = vector.broadcast %428 : vector<1x256xf32> to vector<2x256xf32>
    %765 = arith.addf %763, %764 : vector<2x256xf32>
    %766 = arith.negf %765 : vector<2x256xf32>
    %767 = math.exp %766 : vector<2x256xf32>
    %cst_127 = arith.constant 1.000000e+00 : f32
    %768 = vector.broadcast %cst_127 : f32 to vector<2x256xf32>
    %769 = arith.addf %768, %767 : vector<2x256xf32>
    %770 = arith.divf %768, %769 : vector<2x256xf32>
    %771 = math.tanh %765 : vector<2x256xf32>
    %772 = vector.extract_strided_slice %770 {offsets = [0, 0], sizes = [2, 64], strides = [1, 1]} : vector<2x256xf32> to vector<2x64xf32>
    %773 = vector.extract_strided_slice %770 {offsets = [0, 64], sizes = [2, 64], strides = [1, 1]} : vector<2x256xf32> to vector<2x64xf32>
    %774 = vector.extract_strided_slice %771 {offsets = [0, 128], sizes = [2, 64], strides = [1, 1]} : vector<2x256xf32> to vector<2x64xf32>
    %775 = vector.extract_strided_slice %770 {offsets = [0, 192], sizes = [2, 64], strides = [1, 1]} : vector<2x256xf32> to vector<2x64xf32>
    %776 = arith.mulf %773, %756 : vector<2x64xf32>
    %777 = arith.mulf %772, %774 : vector<2x64xf32>
    %778 = arith.addf %776, %777 : vector<2x64xf32>
    %779 = math.tanh %778 : vector<2x64xf32>
    %780 = arith.mulf %775, %779 : vector<2x64xf32>
    %c0_128 = arith.constant 0 : index
    %c0_129 = arith.constant 0 : index
    %781 = vector.load %arg7[%c0_128, %c0_129] : memref<64x64xf32, #tpu.memory_space<vmem>>, vector<64x64xf32>
    %cst_130 = arith.constant dense<0.000000e+00> : vector<2x64xf32>
    %782 = tpu.matmul %780, %781, %cst_130 {dimension_numbers = #tpu.dot_dimension_numbers<[1], [0], [0], [1], [0, 0, 1, 1], [], []>} : vector<2x64xf32>, vector<64x64xf32>, vector<2x64xf32> -> vector<2x64xf32>
    %c0_131 = arith.constant 0 : index
    %c0_132 = arith.constant 0 : index
    %783 = vector.load %arg8[%c0_131, %c0_132] : memref<1x64xf32, #tpu.memory_space<vmem>>, vector<1x64xf32>
    %784 = vector.broadcast %783 : vector<1x64xf32> to vector<2x64xf32>
    %785 = arith.addf %782, %784 : vector<2x64xf32>
    %cst_133 = arith.constant 0.000000e+00 : f32
    %786 = vector.broadcast %cst_133 : f32 to vector<2x64xf32>
    %787 = arith.maximumf %785, %786 : vector<2x64xf32>
    %c0_134 = arith.constant 0 : index
    %c0_135 = arith.constant 0 : index
    %788 = vector.load %arg9[%c0_134, %c0_135] : memref<64x1xf32, #tpu.memory_space<vmem>>, vector<64x1xf32>
    %cst_136 = arith.constant dense<0.000000e+00> : vector<2x1xf32>
    %789 = tpu.matmul %787, %788, %cst_136 {dimension_numbers = #tpu.dot_dimension_numbers<[1], [0], [0], [1], [0, 0, 1, 1], [], []>} : vector<2x64xf32>, vector<64x1xf32>, vector<2x1xf32> -> vector<2x1xf32>
    %c0_137 = arith.constant 0 : index
    %c0_138 = arith.constant 0 : index
    %790 = vector.load %arg10[%c0_137, %c0_138] : memref<1x1xf32, #tpu.memory_space<vmem>>, vector<1x1xf32>
    %791 = vector.broadcast %790 : vector<1x1xf32> to vector<2x1xf32>
    %792 = arith.addf %789, %791 : vector<2x1xf32>
    %c0_139 = arith.constant 0 : index
    %c0_140 = arith.constant 0 : index
    %793 = vector.load %arg11[%c0_139, %c0_140] : memref<2x1xf32, #tpu.memory_space<vmem>>, vector<2x1xf32>
    tpu.vector_store %arg11[%c0_139, %c0_140], %792 {strides = array<i32>} : memref<2x1xf32, #tpu.memory_space<vmem>>, vector<2x1xf32>,
    return
  }
}

</mosaic_0001>

<llo_original>
// kernel: tpu_custom_call.1
$region0: #{tpu_custom_call.1}
  #allocation0 [shape = 'u32[]', space=smem, size = 0x4, offset = 0x4, fixed_abs, tag = 'smem constant byte address 0x4 - core index']
  #allocation1 [shape = 'u32[72,128]{1,0:T(1,128)}', space=vmem, size = 0x9000, scoped, tag = 'internal scratch']
  #allocation2 [shape = 'f32[32,64]{1,0:T(8,128)}', space=vmem, size = 0x4000, scoped, tag = 'scratch operand']
  #allocation3 [shape = 'f32[1,1]{1,0:T(1,128)S(1)}', space=vmem, size = 0x200, scoped, tag = 'scoped memory for tpu_custom_call.1']
  %s0 = inlined_call_operand.vmem [shape: f32[32,1], index: 0, kind: input, shape index: {}]
  %s1 = inlined_call_operand.vmem [shape: f32[1,512], index: 1, kind: input, shape index: {}]
  %s2 = inlined_call_operand.hbm [shape: f32[64,256], index: 2, kind: input, shape index: {}]
  %s3 = inlined_call_operand.vmem [shape: f32[1,256], index: 3, kind: input, shape index: {}]
  %s4 = inlined_call_operand.hbm [shape: f32[64,512], index: 4, kind: input, shape index: {}]
  %s5 = inlined_call_operand.hbm [shape: f32[64,256], index: 5, kind: input, shape index: {}]
  %s6 = inlined_call_operand.vmem [shape: f32[1,256], index: 6, kind: input, shape index: {}]
  %s7 = inlined_call_operand.vmem [shape: f32[64,64], index: 7, kind: input, shape index: {}]
  %s8 = inlined_call_operand.vmem [shape: f32[1,64], index: 8, kind: input, shape index: {}]
  %s9 = inlined_call_operand.vmem [shape: f32[64,1], index: 9, kind: input, shape index: {}]
  %s10 = inlined_call_operand.<no memory space> [shape: f32[1,1], index: 10, kind: input, shape index: {}]
  %s11 = inlined_call_operand.vmem [shape: f32[2,1], index: 11, kind: output, shape index: {}]
  %s12 = sld [smem:[#allocation0]]
  $region66: #{tpu_custom_call.1} parent=0
    _
  %s14 = ssub.s32 1, %s12
  %s15 = scalar_select 0, %s14, %s12
  %v16 = vstv %s10
  %17 = vst [vmem:[#allocation3] sm:$0x1] %v16
  $region1: #{tpu_custom_call.1} parent=0
    #allocation4 [shape = 'u8[65536]{0}', space=vmem, size = 0x10000, scoped, tag = 'input window, operand 2, single buffered']
    #allocation5 [shape = 's32[1]{0}', space=sflag, size = 0x4, scoped, tag = 'scoped memory for tpu_custom_call.1']
    #allocation6 [shape = 'u8[131072]{0}', space=vmem, size = 0x20000, scoped, tag = 'input window, operand 4, single buffered']
    #allocation7 [shape = 's32[1]{0}', space=sflag, size = 0x4, scoped, tag = 'scoped memory for tpu_custom_call.1']
    #allocation8 [shape = 'u8[65536]{0}', space=vmem, size = 0x10000, scoped, tag = 'input window, operand 5, single buffered']
    %18 = vsyncpa [#allocation5], 0
    %19 = vsyncpa [#allocation7], 0
    // Predicated region
    $region2: #{tpu_custom_call.1} parent=1 // pred_check
      _
    $region3: #{tpu_custom_call.1} parent=1 // pred_check_branch
      %21 = sbr.rel (0) target = $region5
    $region4: #{tpu_custom_call.1} parent=1 // pred_region
      _
    $region5: #{tpu_custom_call.1} parent=1 // pred_fallthru
      _
    // Predicated region
    $region6: #{tpu_custom_call.1} parent=1 // pred_check
      _
    $region7: #{tpu_custom_call.1} parent=1 // pred_check_branch
      %23 = sbr.rel (0) target = $region9
    $region8: #{tpu_custom_call.1} parent=1 // pred_region
      _
    $region9: #{tpu_custom_call.1} parent=1 // pred_fallthru
      _
    // Predicated region
    $region10: #{tpu_custom_call.1} parent=1 // pred_check
      _
    $region11: #{tpu_custom_call.1} parent=1 // pred_check_branch
      %25 = sbr.rel (0) target = $region13
    $region12: #{tpu_custom_call.1} parent=1 // pred_region
      %27 = vsyncadd [#allocation5], 0
      %s28 = sshll.u32 %s2, 4
      %s29 = int_to_ptr.hbm [resolvable:$true] %s28
      %s30 = sshll.u32 [#allocation4], 4
      %s31 = int_to_ptr.vmem [resolvable:$true] %s30
      %36 = dma.hbm_to_vmem [thread:$0]  %s29, 2048, %s31, [#allocation5], 256, 256, 16
    $region13: #{tpu_custom_call.1} parent=1 // pred_fallthru
      _
    // Predicated region
    $region14: #{tpu_custom_call.1} parent=1 // pred_check
      _
    $region15: #{tpu_custom_call.1} parent=1 // pred_check_branch
      %38 = sbr.rel (0) target = $region17
    $region16: #{tpu_custom_call.1} parent=1 // pred_region
      _
    $region17: #{tpu_custom_call.1} parent=1 // pred_fallthru
      _
    // Predicated region
    $region18: #{tpu_custom_call.1} parent=1 // pred_check
      _
    $region19: #{tpu_custom_call.1} parent=1 // pred_check_branch
      %40 = sbr.rel (0) target = $region21
    $region20: #{tpu_custom_call.1} parent=1 // pred_region
      %42 = vsyncadd [#allocation7], 0
      %s43 = sshll.u32 %s4, 4
      %s44 = int_to_ptr.hbm [resolvable:$true] %s43
      %s45 = sshll.u32 [#allocation6], 4
      %s46 = int_to_ptr.vmem [resolvable:$true] %s45
      %51 = dma.hbm_to_vmem [thread:$0]  %s44, 4096, %s46, [#allocation7], 512, 512, 32
    $region21: #{tpu_custom_call.1} parent=1 // pred_fallthru
      _
    // Predicated region
    $region22: #{tpu_custom_call.1} parent=1 // pred_check
      _
    $region23: #{tpu_custom_call.1} parent=1 // pred_check_branch
      %53 = sbr.rel (0) target = $region25
    $region24: #{tpu_custom_call.1} parent=1 // pred_region
      %55 = vsyncadd [#allocation7], 0
      %s56 = sshll.u32 %s5, 4
      %s57 = int_to_ptr.hbm [resolvable:$true] %s56
      %s58 = sshll.u32 [#allocation8], 4
      %s59 = int_to_ptr.vmem [resolvable:$true] %s58
      %64 = dma.hbm_to_vmem [thread:$0]  %s57, 2048, %s59, [#allocation7], 256, 256, 16
    $region25: #{tpu_custom_call.1} parent=1 // pred_fallthru
      _
    // Predicated region
    $region26: #{tpu_custom_call.1} parent=1 // pred_check
      _
    $region27: #{tpu_custom_call.1} parent=1 // pred_check_branch
      %66 = sbr.rel (0) target = $region29
    $region28: #{tpu_custom_call.1} parent=1 // pred_region
      _
    $region29: #{tpu_custom_call.1} parent=1 // pred_fallthru
      _
    // Predicated region
    $region30: #{tpu_custom_call.1} parent=1 // pred_check
      _
    $region31: #{tpu_custom_call.1} parent=1 // pred_check_branch
      %68 = sbr.rel (0) target = $region33
    $region32: #{tpu_custom_call.1} parent=1 // pred_region
      _
    $region33: #{tpu_custom_call.1} parent=1 // pred_fallthru
      _
    // Predicated region
    $region34: #{tpu_custom_call.1} parent=1 // pred_check
      _
    $region35: #{tpu_custom_call.1} parent=1 // pred_check_branch
      %70 = sbr.rel (0) target = $region37
    $region36: #{tpu_custom_call.1} parent=1 // pred_region
      _
    $region37: #{tpu_custom_call.1} parent=1 // pred_fallthru
      _
    // Predicated region
    $region38: #{tpu_custom_call.1} parent=1 // pred_check
      _
    $region39: #{tpu_custom_call.1} parent=1 // pred_check_branch
      %72 = sbr.rel (0) target = $region41
    $region40: #{tpu_custom_call.1} parent=1 // pred_region
      _
    $region41: #{tpu_custom_call.1} parent=1 // pred_fallthru
      _
    // Predicated region
    $region42: #{tpu_custom_call.1} parent=1 // pred_check
      _
    $region43: #{tpu_custom_call.1} parent=1 // pred_check_branch
      %74 = sbr.rel (0) target = $region45
    $region44: #{tpu_custom_call.1} parent=1 // pred_region
      _
    $region45: #{tpu_custom_call.1} parent=1 // pred_fallthru
      _
    // Predicated region
    $region46: #{tpu_custom_call.1} parent=1 // pred_check
      _
    $region47: #{tpu_custom_call.1} parent=1 // pred_check_branch
      %76 = sbr.rel (0) target = $region49
    $region48: #{tpu_custom_call.1} parent=1 // pred_region
      %78 = dma.done [#allocation5], 2048
    $region49: #{tpu_custom_call.1} parent=1 // pred_fallthru
      _
    // Predicated region
    $region50: #{tpu_custom_call.1} parent=1 // pred_check
      _
    $region51: #{tpu_custom_call.1} parent=1 // pred_check_branch
      %80 = sbr.rel (0) target = $region53
    $region52: #{tpu_custom_call.1} parent=1 // pred_region
      %82 = dma.done [#allocation7], 4096
    $region53: #{tpu_custom_call.1} parent=1 // pred_fallthru
      _
    // Predicated region
    $region54: #{tpu_custom_call.1} parent=1 // pred_check
      _
    $region55: #{tpu_custom_call.1} parent=1 // pred_check_branch
      %84 = sbr.rel (0) target = $region57
    $region56: #{tpu_custom_call.1} parent=1 // pred_region
      %86 = dma.done [#allocation7], 2048
    $region57: #{tpu_custom_call.1} parent=1 // pred_fallthru
      _
    %v87 = vld [vmem:[%s0] sm:$0xff]
    %v88 = vld [vmem:[%s0 + $0x8] sm:$0xff]
    %v89 = vld [vmem:[%s0 + $0x10] sm:$0xff]
    %v90 = vld [vmem:[%s0 + $0x18] sm:$0xff]
    %v91 = vld [vmem:[%s1] sm:$0xf]
    %93 = vset.pattern.permute.xlu0 0
    %94 = vperm.xlu0 %93, %v87
    %v95 = vpop.permute.xlu0 %94
    %98 = vset.pattern.permute.xlu0 0
    %99 = vperm.xlu0 %98, %v88
    %v100 = vpop.permute.xlu0 %99
    %103 = vset.pattern.permute.xlu0 0
    %104 = vperm.xlu0 %103, %v89
    %v105 = vpop.permute.xlu0 %104
    %108 = vset.pattern.permute.xlu0 0
    %109 = vperm.xlu0 %108, %v90
    %v110 = vpop.permute.xlu0 %109
    %v113 = vperm.slane %v91, 0
    %v114 = vperm.slane %v91, 1
    %v115 = vperm.slane %v91, 2
    %v116 = vperm.slane %v91, 3
    %v121 = vmul.f32 %v95, %v113
    %v122 = vmul.f32 %v95, %v114
    %v123 = vmul.f32 %v95, %v115
    %v124 = vmul.f32 %v95, %v116
    %v125 = vmul.f32 %v100, %v113
    %v126 = vmul.f32 %v100, %v114
    %v127 = vmul.f32 %v100, %v115
    %v128 = vmul.f32 %v100, %v116
    %v129 = vmul.f32 %v105, %v113
    %v130 = vmul.f32 %v105, %v114
    %v131 = vmul.f32 %v105, %v115
    %v132 = vmul.f32 %v105, %v116
    %v133 = vmul.f32 %v110, %v113
    %v134 = vmul.f32 %v110, %v114
    %v135 = vmul.f32 %v110, %v115
    %v136 = vmul.f32 %v110, %v116
    %v137 = vld [vmem:[#allocation4] sm:$0xff]
    %v138 = vld [vmem:[#allocation4 + $0x8] sm:$0xff]
    %v139 = vld [vmem:[#allocation4 + $0x10] sm:$0xff]
    %v140 = vld [vmem:[#allocation4 + $0x18] sm:$0xff]
    %v141 = vld [vmem:[#allocation4 + $0x20] sm:$0xff]
    %v142 = vld [vmem:[#allocation4 + $0x28] sm:$0xff]
    %v143 = vld [vmem:[#allocation4 + $0x30] sm:$0xff]
    %v144 = vld [vmem:[#allocation4 + $0x38] sm:$0xff]
    %v145 = vld [vmem:[#allocation4 + $0x40] sm:$0xff]
    %v146 = vld [vmem:[#allocation4 + $0x48] sm:$0xff]
    %v147 = vld [vmem:[#allocation4 + $0x50] sm:$0xff]
    %v148 = vld [vmem:[#allocation4 + $0x58] sm:$0xff]
    %v149 = vld [vmem:[#allocation4 + $0x60] sm:$0xff]
    %v150 = vld [vmem:[#allocation4 + $0x68] sm:$0xff]
    %v151 = vld [vmem:[#allocation4 + $0x70] sm:$0xff]
    %v152 = vld [vmem:[#allocation4 + $0x78] sm:$0xff]
    %v153 = vld [vmem:[%s3] sm:$0x3]
    %v156 = vrot.slane %v135, 6
    %v157 = vrot.slane %v136, 6
    %v160 = vadd.f32 %v121, %v156
    %v161 = vadd.f32 %v122, %v157
    %vm162 = vcmask 523264
    %v164 = vsel %vm162, 0.0, 0
    %166 = vmatpush.msra.mxu0 0.0
    %167 = vmatpush.msra.mxu0 0.0
    %168 = vmatpush.msra.mxu0 0.0
    %169 = vmatpush.msra.mxu0 0.0
    %170 = vmatpush.msra.mxu0 0.0
    %171 = vmatpush.msra.mxu0 0.0
    %172 = vmatpush.msra.mxu0 0.0
    %173 = vmatpush.msra.mxu0 0.0
    %174 = vmatpush.msra.mxu0 %v151
    %175 = vmatpush.msra.mxu0 %v149
    %176 = vmatpush.msra.mxu0 %v147
    %177 = vmatpush.msra.mxu0 %v145
    %178 = vmatpush.msra.mxu0 %v143
    %179 = vmatpush.msra.mxu0 %v141
    %180 = vmatpush.msra.mxu0 %v139
    %181 = vmatpush.msra.mxu0 %v137
    %182 = vmatmul.f32.gmra.mxu0 %v164
    %v183 = vpop.f32.mrf.mxu0
    %v184 = vadd.f32 0.0, %v183
    %185 = vdwg.mxu0
    %186 = vmatpush.msra.mxu0 0.0
    %187 = vmatpush.msra.mxu0 0.0
    %188 = vmatpush.msra.mxu0 0.0
    %189 = vmatpush.msra.mxu0 0.0
    %190 = vmatpush.msra.mxu0 0.0
    %191 = vmatpush.msra.mxu0 0.0
    %192 = vmatpush.msra.mxu0 0.0
    %193 = vmatpush.msra.mxu0 0.0
    %194 = vmatpush.msra.mxu0 %v152
    %195 = vmatpush.msra.mxu0 %v150
    %196 = vmatpush.msra.mxu0 %v148
    %197 = vmatpush.msra.mxu0 %v146
    %198 = vmatpush.msra.mxu0 %v144
    %199 = vmatpush.msra.mxu0 %v142
    %200 = vmatpush.msra.mxu0 %v140
    %201 = vmatpush.msra.mxu0 %v138
    %202 = vmatmul.f32.gmra.mxu0 %v164
    %v203 = vpop.f32.mrf.mxu0
    %v204 = vadd.f32 0.0, %v203
    %205 = vdwg.mxu0
    %v206 = vadd.f32 %v160, %v184
    %v207 = vadd.f32 %v161, %v204
    %v209 = vperm.slane %v153, 0
    %v210 = vperm.slane %v153, 1
    %v213 = vadd.f32 %v206, %v209
    %v214 = vadd.f32 %v207, %v210
    %v215 = vxor.u32 %v213, 2147483648
    %v216 = vxor.u32 %v214, 2147483648
    %v217 = vmul.f32 %v215, 1.442695
    %v218 = vpow.pop %v217
    %v219 = vmul.f32 %v216, 1.442695
    %v220 = vpow.pop %v219
    %v221 = vadd.f32 %v218, 1.0
    %v222 = vadd.f32 %v220, 1.0
    %v223 = vrcp.pop %v221
    %v224 = vmul.f32 %v221, %v223
    %v225 = vsub.f32 1.0, %v224
    %v226 = vmul.f32 %v223, %v225
    %v227 = vadd.f32 %v223, %v226
    %vm228 = vweird.f32 %v221
    %vm229 = vweird.f32 %v223
    %vm230 = vmor %vm228, %vm229
    %v231 = vsel %vm230, %v223, %v227
    %v232 = vand.u32 2147483647, %v221
    %vm233 = vcmp.eq.f32.partialorder %v232, 8.507059e+37
    %v234 = vand.u32 %v221, 2147483648
    %v235 = vor.u32 1.1754944e-38, %v234
    %v236 = vsel %vm233, %v235, %v231
    %v237 = vmul.f32 1.0, %v236
    %v238 = vrcp.pop %v222
    %v239 = vmul.f32 %v222, %v238
    %v240 = vsub.f32 1.0, %v239
    %v241 = vmul.f32 %v238, %v240
    %v242 = vadd.f32 %v238, %v241
    %vm243 = vweird.f32 %v222
    %vm244 = vweird.f32 %v238
    %vm245 = vmor %vm243, %vm244
    %v246 = vsel %vm245, %v238, %v242
    %v247 = vand.u32 2147483647, %v222
    %vm248 = vcmp.eq.f32.partialorder %v247, 8.507059e+37
    %v249 = vand.u32 %v222, 2147483648
    %v250 = vor.u32 1.1754944e-38, %v249
    %v251 = vsel %vm248, %v250, %v246
    %v252 = vmul.f32 1.0, %v251
    %v253 = vtanh.pop %v214
    %v254 = vmul.f32 %v237, 0.0
    %v255 = vmul.f32 %v237, %v253
    %257 = vrot.lane.b32.xlu0 %v255, 64
    %v258 = vpop.permute.xlu0 %257
    %v260 = vadd.f32 %v254, %v258
    %v261 = vtanh.pop %v260
    %v262 = vmul.f32 %v252, %v261
    %264 = vrot.lane.b32.xlu0 %v262, 64
    %v265 = vpop.permute.xlu0 %264
    %vm267 = vcmask 254976
    %268 = vst.msk [vmem:[#allocation2] sm:$0x3] %vm267, %v265
    %vm269 = vcmask 517376
    %270 = vst.msk [vmem:[#allocation2 + $0x1e] sm:$0x3] %vm269, %v265
    %v271 = vrot.slane %v135, 2
    %v272 = vrot.slane %v136, 2
    %v275 = vadd.f32 %v121, %v271
    %v276 = vadd.f32 %v122, %v272
    %v277 = vsel %vm162, %v265, 0
    %279 = vmatpush.msra.mxu0 0.0
    %280 = vmatpush.msra.mxu0 0.0
    %281 = vmatpush.msra.mxu0 0.0
    %282 = vmatpush.msra.mxu0 0.0
    %283 = vmatpush.msra.mxu0 0.0
    %284 = vmatpush.msra.mxu0 0.0
    %285 = vmatpush.msra.mxu0 0.0
    %286 = vmatpush.msra.mxu0 0.0
    %287 = vmatpush.msra.mxu0 %v151
    %288 = vmatpush.msra.mxu0 %v149
    %289 = vmatpush.msra.mxu0 %v147
    %290 = vmatpush.msra.mxu0 %v145
    %291 = vmatpush.msra.mxu0 %v143
    %292 = vmatpush.msra.mxu0 %v141
    %293 = vmatpush.msra.mxu0 %v139
    %294 = vmatpush.msra.mxu0 %v137
    %295 = vmatmul.f32.gmra.mxu0 %v277
    %v296 = vpop.f32.mrf.mxu0
    %v297 = vadd.f32 0.0, %v296
    %298 = vdwg.mxu0
    %299 = vmatpush.msra.mxu0 0.0
    %300 = vmatpush.msra.mxu0 0.0
    %301 = vmatpush.msra.mxu0 0.0
    %302 = vmatpush.msra.mxu0 0.0
    %303 = vmatpush.msra.mxu0 0.0
    %304 = vmatpush.msra.mxu0 0.0
    %305 = vmatpush.msra.mxu0 0.0
    %306 = vmatpush.msra.mxu0 0.0
    %307 = vmatpush.msra.mxu0 %v152
    %308 = vmatpush.msra.mxu0 %v150
    %309 = vmatpush.msra.mxu0 %v148
    %310 = vmatpush.msra.mxu0 %v146
    %311 = vmatpush.msra.mxu0 %v144
    %312 = vmatpush.msra.mxu0 %v142
    %313 = vmatpush.msra.mxu0 %v140
    %314 = vmatpush.msra.mxu0 %v138
    %315 = vmatmul.f32.gmra.mxu0 %v277
    %v316 = vpop.f32.mrf.mxu0
    %v317 = vadd.f32 0.0, %v316
    %318 = vdwg.mxu0
    %v321 = vrot.slane %v297, 6
    %v322 = vrot.slane %v317, 6
    %v325 = vadd.f32 %v275, %v321
    %v326 = vadd.f32 %v276, %v322
    %v327 = vadd.f32 %v325, %v209
    %v328 = vadd.f32 %v326, %v210
    %v329 = vxor.u32 %v327, 2147483648
    %v330 = vxor.u32 %v328, 2147483648
    %v331 = vmul.f32 %v329, 1.442695
    %v332 = vpow.pop %v331
    %v333 = vmul.f32 %v330, 1.442695
    %v334 = vpow.pop %v333
    %v335 = vadd.f32 %v332, 1.0
    %v336 = vadd.f32 %v334, 1.0
    %v337 = vrcp.pop %v335
    %v338 = vmul.f32 %v335, %v337
    %v339 = vsub.f32 1.0, %v338
    %v340 = vmul.f32 %v337, %v339
    %v341 = vadd.f32 %v337, %v340
    %vm342 = vweird.f32 %v335
    %vm343 = vweird.f32 %v337
    %vm344 = vmor %vm342, %vm343
    %v345 = vsel %vm344, %v337, %v341
    %v346 = vand.u32 2147483647, %v335
    %vm347 = vcmp.eq.f32.partialorder %v346, 8.507059e+37
    %v348 = vand.u32 %v335, 2147483648
    %v349 = vor.u32 1.1754944e-38, %v348
    %v350 = vsel %vm347, %v349, %v345
    %v351 = vmul.f32 1.0, %v350
    %v352 = vrcp.pop %v336
    %v353 = vmul.f32 %v336, %v352
    %v354 = vsub.f32 1.0, %v353
    %v355 = vmul.f32 %v352, %v354
    %v356 = vadd.f32 %v352, %v355
    %vm357 = vweird.f32 %v336
    %vm358 = vweird.f32 %v352
    %vm359 = vmor %vm357, %vm358
    %v360 = vsel %vm359, %v352, %v356
    %v361 = vand.u32 2147483647, %v336
    %vm362 = vcmp.eq.f32.partialorder %v361, 8.507059e+37
    %v363 = vand.u32 %v336, 2147483648
    %v364 = vor.u32 1.1754944e-38, %v363
    %v365 = vsel %vm362, %v364, %v360
    %v366 = vmul.f32 1.0, %v365
    %v367 = vtanh.pop %v328
    %v369 = vrot.slane %v260, 6
    %v371 = vmul.f32 %v351, %v369
    %v372 = vmul.f32 %v351, %v367
    %374 = vrot.lane.b32.xlu0 %v372, 64
    %v375 = vpop.permute.xlu0 %374
    %v377 = vadd.f32 %v371, %v375
    %v378 = vtanh.pop %v377
    %v379 = vmul.f32 %v366, %v378
    %381 = vrot.lane.b32.xlu0 %v379, 64
    %v382 = vpop.permute.xlu0 %381
    %vm384 = vcmask 257026
    %385 = vst.msk [vmem:[#allocation2] sm:$0xc] %vm384, %v382
    %vm386 = vcmask 519426
    %387 = vst.msk [vmem:[#allocation2 + $0x1a] sm:$0xc] %vm386, %v382
    %v388 = vrot.slane %v379, 2
    %389 = vrot.lane.b32.xlu0 %v388, 64
    %v390 = vpop.permute.xlu0 %389
    %v391 = vsel %vm162, %v390, 0
    %393 = vmatpush.msra.mxu0 0.0
    %394 = vmatpush.msra.mxu0 0.0
    %395 = vmatpush.msra.mxu0 0.0
    %396 = vmatpush.msra.mxu0 0.0
    %397 = vmatpush.msra.mxu0 0.0
    %398 = vmatpush.msra.mxu0 0.0
    %399 = vmatpush.msra.mxu0 0.0
    %400 = vmatpush.msra.mxu0 0.0
    %401 = vmatpush.msra.mxu0 %v151
    %402 = vmatpush.msra.mxu0 %v149
    %403 = vmatpush.msra.mxu0 %v147
    %404 = vmatpush.msra.mxu0 %v145
    %405 = vmatpush.msra.mxu0 %v143
    %406 = vmatpush.msra.mxu0 %v141
    %407 = vmatpush.msra.mxu0 %v139
    %408 = vmatpush.msra.mxu0 %v137
    %409 = vmatmul.f32.gmra.mxu0 %v391
    %v410 = vpop.f32.mrf.mxu0
    %v411 = vadd.f32 0.0, %v410
    %412 = vdwg.mxu0
    %413 = vmatpush.msra.mxu0 0.0
    %414 = vmatpush.msra.mxu0 0.0
    %415 = vmatpush.msra.mxu0 0.0
    %416 = vmatpush.msra.mxu0 0.0
    %417 = vmatpush.msra.mxu0 0.0
    %418 = vmatpush.msra.mxu0 0.0
    %419 = vmatpush.msra.mxu0 0.0
    %420 = vmatpush.msra.mxu0 0.0
    %421 = vmatpush.msra.mxu0 %v152
    %422 = vmatpush.msra.mxu0 %v150
    %423 = vmatpush.msra.mxu0 %v148
    %424 = vmatpush.msra.mxu0 %v146
    %425 = vmatpush.msra.mxu0 %v144
    %426 = vmatpush.msra.mxu0 %v142
    %427 = vmatpush.msra.mxu0 %v140
    %428 = vmatpush.msra.mxu0 %v138
    %429 = vmatmul.f32.gmra.mxu0 %v391
    %v430 = vpop.f32.mrf.mxu0
    %v431 = vadd.f32 0.0, %v430
    %432 = vdwg.mxu0
    %v435 = vrot.slane %v411, 4
    %v436 = vrot.slane %v431, 4
    %v439 = vadd.f32 %v160, %v435
    %v440 = vadd.f32 %v161, %v436
    %v441 = vadd.f32 %v439, %v209
    %v442 = vadd.f32 %v440, %v210
    %v443 = vxor.u32 %v441, 2147483648
    %v444 = vxor.u32 %v442, 2147483648
    %v445 = vmul.f32 %v443, 1.442695
    %v446 = vpow.pop %v445
    %v447 = vmul.f32 %v444, 1.442695
    %v448 = vpow.pop %v447
    %v449 = vadd.f32 %v446, 1.0
    %v450 = vadd.f32 %v448, 1.0
    %v451 = vrcp.pop %v449
    %v452 = vmul.f32 %v449, %v451
    %v453 = vsub.f32 1.0, %v452
    %v454 = vmul.f32 %v451, %v453
    %v455 = vadd.f32 %v451, %v454
    %vm456 = vweird.f32 %v449
    %vm457 = vweird.f32 %v451
    %vm458 = vmor %vm456, %vm457
    %v459 = vsel %vm458, %v451, %v455
    %v460 = vand.u32 2147483647, %v449
    %vm461 = vcmp.eq.f32.partialorder %v460, 8.507059e+37
    %v462 = vand.u32 %v449, 2147483648
    %v463 = vor.u32 1.1754944e-38, %v462
    %v464 = vsel %vm461, %v463, %v459
    %v465 = vmul.f32 1.0, %v464
    %v466 = vrcp.pop %v450
    %v467 = vmul.f32 %v450, %v466
    %v468 = vsub.f32 1.0, %v467
    %v469 = vmul.f32 %v466, %v468
    %v470 = vadd.f32 %v466, %v469
    %vm471 = vweird.f32 %v450
    %vm472 = vweird.f32 %v466
    %vm473 = vmor %vm471, %vm472
    %v474 = vsel %vm473, %v466, %v470
    %v475 = vand.u32 2147483647, %v450
    %vm476 = vcmp.eq.f32.partialorder %v475, 8.507059e+37
    %v477 = vand.u32 %v450, 2147483648
    %v478 = vor.u32 1.1754944e-38, %v477
    %v479 = vsel %vm476, %v478, %v474
    %v480 = vmul.f32 1.0, %v479
    %v481 = vtanh.pop %v442
    %v483 = vrot.slane %v377, 6
    %v485 = vmul.f32 %v465, %v483
    %v486 = vmul.f32 %v465, %v481
    %488 = vrot.lane.b32.xlu0 %v486, 64
    %v489 = vpop.permute.xlu0 %488
    %v491 = vadd.f32 %v485, %v489
    %v492 = vtanh.pop %v491
    %v493 = vmul.f32 %v480, %v492
    %495 = vrot.lane.b32.xlu0 %v493, 64
    %v496 = vpop.permute.xlu0 %495
    %vm498 = vcmask 259076
    %499 = vst.msk [vmem:[#allocation2] sm:$0x30] %vm498, %v496
    %vm500 = vcmask 521476
    %501 = vst.msk [vmem:[#allocation2 + $0x16] sm:$0x30] %vm500, %v496
    %v502 = vrot.slane %v493, 4
    %503 = vrot.lane.b32.xlu0 %v502, 64
    %v504 = vpop.permute.xlu0 %503
    %v505 = vsel %vm162, %v504, 0
    %507 = vmatpush.msra.mxu0 0.0
    %508 = vmatpush.msra.mxu0 0.0
    %509 = vmatpush.msra.mxu0 0.0
    %510 = vmatpush.msra.mxu0 0.0
    %511 = vmatpush.msra.mxu0 0.0
    %512 = vmatpush.msra.mxu0 0.0
    %513 = vmatpush.msra.mxu0 0.0
    %514 = vmatpush.msra.mxu0 0.0
    %515 = vmatpush.msra.mxu0 %v151
    %516 = vmatpush.msra.mxu0 %v149
    %517 = vmatpush.msra.mxu0 %v147
    %518 = vmatpush.msra.mxu0 %v145
    %519 = vmatpush.msra.mxu0 %v143
    %520 = vmatpush.msra.mxu0 %v141
    %521 = vmatpush.msra.mxu0 %v139
    %522 = vmatpush.msra.mxu0 %v137
    %523 = vmatmul.f32.gmra.mxu0 %v505
    %v524 = vpop.f32.mrf.mxu0
    %v525 = vadd.f32 0.0, %v524
    %526 = vdwg.mxu0
    %527 = vmatpush.msra.mxu0 0.0
    %528 = vmatpush.msra.mxu0 0.0
    %529 = vmatpush.msra.mxu0 0.0
    %530 = vmatpush.msra.mxu0 0.0
    %531 = vmatpush.msra.mxu0 0.0
    %532 = vmatpush.msra.mxu0 0.0
    %533 = vmatpush.msra.mxu0 0.0
    %534 = vmatpush.msra.mxu0 0.0
    %535 = vmatpush.msra.mxu0 %v152
    %536 = vmatpush.msra.mxu0 %v150
    %537 = vmatpush.msra.mxu0 %v148
    %538 = vmatpush.msra.mxu0 %v146
    %539 = vmatpush.msra.mxu0 %v144
    %540 = vmatpush.msra.mxu0 %v142
    %541 = vmatpush.msra.mxu0 %v140
    %542 = vmatpush.msra.mxu0 %v138
    %543 = vmatmul.f32.gmra.mxu0 %v505
    %v544 = vpop.f32.mrf.mxu0
    %v545 = vadd.f32 0.0, %v544
    %546 = vdwg.mxu0
    %v549 = vrot.slane %v525, 2
    %v550 = vrot.slane %v545, 2
    %v553 = vadd.f32 %v275, %v549
    %v554 = vadd.f32 %v276, %v550
    %v555 = vadd.f32 %v553, %v209
    %v556 = vadd.f32 %v554, %v210
    %v557 = vxor.u32 %v555, 2147483648
    %v558 = vxor.u32 %v556, 2147483648
    %v559 = vmul.f32 %v557, 1.442695
    %v560 = vpow.pop %v559
    %v561 = vmul.f32 %v558, 1.442695
    %v562 = vpow.pop %v561
    %v563 = vadd.f32 %v560, 1.0
    %v564 = vadd.f32 %v562, 1.0
    %v565 = vrcp.pop %v563
    %v566 = vmul.f32 %v563, %v565
    %v567 = vsub.f32 1.0, %v566
    %v568 = vmul.f32 %v565, %v567
    %v569 = vadd.f32 %v565, %v568
    %vm570 = vweird.f32 %v563
    %vm571 = vweird.f32 %v565
    %vm572 = vmor %vm570, %vm571
    %v573 = vsel %vm572, %v565, %v569
    %v574 = vand.u32 2147483647, %v563
    %vm575 = vcmp.eq.f32.partialorder %v574, 8.507059e+37
    %v576 = vand.u32 %v563, 2147483648
    %v577 = vor.u32 1.1754944e-38, %v576
    %v578 = vsel %vm575, %v577, %v573
    %v579 = vmul.f32 1.0, %v578
    %v580 = vrcp.pop %v564
    %v581 = vmul.f32 %v564, %v580
    %v582 = vsub.f32 1.0, %v581
    %v583 = vmul.f32 %v580, %v582
    %v584 = vadd.f32 %v580, %v583
    %vm585 = vweird.f32 %v564
    %vm586 = vweird.f32 %v580
    %vm587 = vmor %vm585, %vm586
    %v588 = vsel %vm587, %v580, %v584
    %v589 = vand.u32 2147483647, %v564
    %vm590 = vcmp.eq.f32.partialorder %v589, 8.507059e+37
    %v591 = vand.u32 %v564, 2147483648
    %v592 = vor.u32 1.1754944e-38, %v591
    %v593 = vsel %vm590, %v592, %v588
    %v594 = vmul.f32 1.0, %v593
    %v595 = vtanh.pop %v556
    %v597 = vrot.slane %v491, 6
    %v599 = vmul.f32 %v579, %v597
    %v600 = vmul.f32 %v579, %v595
    %602 = vrot.lane.b32.xlu0 %v600, 64
    %v603 = vpop.permute.xlu0 %602
    %v605 = vadd.f32 %v599, %v603
    %v606 = vtanh.pop %v605
    %v607 = vmul.f32 %v594, %v606
    %609 = vrot.lane.b32.xlu0 %v607, 64
    %v610 = vpop.permute.xlu0 %609
    %vm612 = vcmask 261126
    %613 = vst.msk [vmem:[#allocation2] sm:$0xc0] %vm612, %v610
    %vm614 = vcmask 523526
    %615 = vst.msk [vmem:[#allocation2 + $0x12] sm:$0xc0] %vm614, %v610
    %v618 = vrot.slane %v131, 6
    %v619 = vrot.slane %v132, 6
    %v622 = vadd.f32 %v125, %v618
    %v623 = vadd.f32 %v126, %v619
    %v624 = vrot.slane %v607, 6
    %625 = vrot.lane.b32.xlu0 %v624, 64
    %v626 = vpop.permute.xlu0 %625
    %v627 = vsel %vm162, %v626, 0
    %629 = vmatpush.msra.mxu0 0.0
    %630 = vmatpush.msra.mxu0 0.0
    %631 = vmatpush.msra.mxu0 0.0
    %632 = vmatpush.msra.mxu0 0.0
    %633 = vmatpush.msra.mxu0 0.0
    %634 = vmatpush.msra.mxu0 0.0
    %635 = vmatpush.msra.mxu0 0.0
    %636 = vmatpush.msra.mxu0 0.0
    %637 = vmatpush.msra.mxu0 %v151
    %638 = vmatpush.msra.mxu0 %v149
    %639 = vmatpush.msra.mxu0 %v147
    %640 = vmatpush.msra.mxu0 %v145
    %641 = vmatpush.msra.mxu0 %v143
    %642 = vmatpush.msra.mxu0 %v141
    %643 = vmatpush.msra.mxu0 %v139
    %644 = vmatpush.msra.mxu0 %v137
    %645 = vmatmul.f32.gmra.mxu0 %v627
    %v646 = vpop.f32.mrf.mxu0
    %v647 = vadd.f32 0.0, %v646
    %648 = vdwg.mxu0
    %649 = vmatpush.msra.mxu0 0.0
    %650 = vmatpush.msra.mxu0 0.0
    %651 = vmatpush.msra.mxu0 0.0
    %652 = vmatpush.msra.mxu0 0.0
    %653 = vmatpush.msra.mxu0 0.0
    %654 = vmatpush.msra.mxu0 0.0
    %655 = vmatpush.msra.mxu0 0.0
    %656 = vmatpush.msra.mxu0 0.0
    %657 = vmatpush.msra.mxu0 %v152
    %658 = vmatpush.msra.mxu0 %v150
    %659 = vmatpush.msra.mxu0 %v148
    %660 = vmatpush.msra.mxu0 %v146
    %661 = vmatpush.msra.mxu0 %v144
    %662 = vmatpush.msra.mxu0 %v142
    %663 = vmatpush.msra.mxu0 %v140
    %664 = vmatpush.msra.mxu0 %v138
    %665 = vmatmul.f32.gmra.mxu0 %v627
    %v666 = vpop.f32.mrf.mxu0
    %v667 = vadd.f32 0.0, %v666
    %668 = vdwg.mxu0
    %v669 = vadd.f32 %v622, %v647
    %v670 = vadd.f32 %v623, %v667
    %v671 = vadd.f32 %v669, %v209
    %v672 = vadd.f32 %v670, %v210
    %v673 = vxor.u32 %v671, 2147483648
    %v674 = vxor.u32 %v672, 2147483648
    %v675 = vmul.f32 %v673, 1.442695
    %v676 = vpow.pop %v675
    %v677 = vmul.f32 %v674, 1.442695
    %v678 = vpow.pop %v677
    %v679 = vadd.f32 %v676, 1.0
    %v680 = vadd.f32 %v678, 1.0
    %v681 = vrcp.pop %v679
    %v682 = vmul.f32 %v679, %v681
    %v683 = vsub.f32 1.0, %v682
    %v684 = vmul.f32 %v681, %v683
    %v685 = vadd.f32 %v681, %v684
    %vm686 = vweird.f32 %v679
    %vm687 = vweird.f32 %v681
    %vm688 = vmor %vm686, %vm687
    %v689 = vsel %vm688, %v681, %v685
    %v690 = vand.u32 2147483647, %v679
    %vm691 = vcmp.eq.f32.partialorder %v690, 8.507059e+37
    %v692 = vand.u32 %v679, 2147483648
    %v693 = vor.u32 1.1754944e-38, %v692
    %v694 = vsel %vm691, %v693, %v689
    %v695 = vmul.f32 1.0, %v694
    %v696 = vrcp.pop %v680
    %v697 = vmul.f32 %v680, %v696
    %v698 = vsub.f32 1.0, %v697
    %v699 = vmul.f32 %v696, %v698
    %v700 = vadd.f32 %v696, %v699
    %vm701 = vweird.f32 %v680
    %vm702 = vweird.f32 %v696
    %vm703 = vmor %vm701, %vm702
    %v704 = vsel %vm703, %v696, %v700
    %v705 = vand.u32 2147483647, %v680
    %vm706 = vcmp.eq.f32.partialorder %v705, 8.507059e+37
    %v707 = vand.u32 %v680, 2147483648
    %v708 = vor.u32 1.1754944e-38, %v707
    %v709 = vsel %vm706, %v708, %v704
    %v710 = vmul.f32 1.0, %v709
    %v711 = vtanh.pop %v672
    %v713 = vrot.slane %v605, 6
    %v715 = vmul.f32 %v695, %v713
    %v716 = vmul.f32 %v695, %v711
    %718 = vrot.lane.b32.xlu0 %v716, 64
    %v719 = vpop.permute.xlu0 %718
    %v721 = vadd.f32 %v715, %v719
    %v722 = vtanh.pop %v721
    %v723 = vmul.f32 %v710, %v722
    %725 = vrot.lane.b32.xlu0 %v723, 64
    %v726 = vpop.permute.xlu0 %725
    %728 = vst.msk [vmem:[#allocation2 + $0x8] sm:$0x3] %vm267, %v726
    %729 = vst.msk [vmem:[#allocation2 + $0x16] sm:$0x3] %vm269, %v726
    %v730 = vrot.slane %v131, 2
    %v731 = vrot.slane %v132, 2
    %v734 = vadd.f32 %v125, %v730
    %v735 = vadd.f32 %v126, %v731
    %v736 = vsel %vm162, %v726, 0
    %738 = vmatpush.msra.mxu0 0.0
    %739 = vmatpush.msra.mxu0 0.0
    %740 = vmatpush.msra.mxu0 0.0
    %741 = vmatpush.msra.mxu0 0.0
    %742 = vmatpush.msra.mxu0 0.0
    %743 = vmatpush.msra.mxu0 0.0
    %744 = vmatpush.msra.mxu0 0.0
    %745 = vmatpush.msra.mxu0 0.0
    %746 = vmatpush.msra.mxu0 %v151
    %747 = vmatpush.msra.mxu0 %v149
    %748 = vmatpush.msra.mxu0 %v147
    %749 = vmatpush.msra.mxu0 %v145
    %750 = vmatpush.msra.mxu0 %v143
    %751 = vmatpush.msra.mxu0 %v141
    %752 = vmatpush.msra.mxu0 %v139
    %753 = vmatpush.msra.mxu0 %v137
    %754 = vmatmul.f32.gmra.mxu0 %v736
    %v755 = vpop.f32.mrf.mxu0
    %v756 = vadd.f32 0.0, %v755
    %757 = vdwg.mxu0
    %758 = vmatpush.msra.mxu0 0.0
    %759 = vmatpush.msra.mxu0 0.0
    %760 = vmatpush.msra.mxu0 0.0
    %761 = vmatpush.msra.mxu0 0.0
    %762 = vmatpush.msra.mxu0 0.0
    %763 = vmatpush.msra.mxu0 0.0
    %764 = vmatpush.msra.mxu0 0.0
    %765 = vmatpush.msra.mxu0 0.0
    %766 = vmatpush.msra.mxu0 %v152
    %767 = vmatpush.msra.mxu0 %v150
    %768 = vmatpush.msra.mxu0 %v148
    %769 = vmatpush.msra.mxu0 %v146
    %770 = vmatpush.msra.mxu0 %v144
    %771 = vmatpush.msra.mxu0 %v142
    %772 = vmatpush.msra.mxu0 %v140
    %773 = vmatpush.msra.mxu0 %v138
    %774 = vmatmul.f32.gmra.mxu0 %v736
    %v775 = vpop.f32.mrf.mxu0
    %v776 = vadd.f32 0.0, %v775
    %777 = vdwg.mxu0
    %v780 = vrot.slane %v756, 6
    %v781 = vrot.slane %v776, 6
    %v784 = vadd.f32 %v734, %v780
    %v785 = vadd.f32 %v735, %v781
    %v786 = vadd.f32 %v784, %v209
    %v787 = vadd.f32 %v785, %v210
    %v788 = vxor.u32 %v786, 2147483648
    %v789 = vxor.u32 %v787, 2147483648
    %v790 = vmul.f32 %v788, 1.442695
    %v791 = vpow.pop %v790
    %v792 = vmul.f32 %v789, 1.442695
    %v793 = vpow.pop %v792
    %v794 = vadd.f32 %v791, 1.0
    %v795 = vadd.f32 %v793, 1.0
    %v796 = vrcp.pop %v794
    %v797 = vmul.f32 %v794, %v796
    %v798 = vsub.f32 1.0, %v797
    %v799 = vmul.f32 %v796, %v798
    %v800 = vadd.f32 %v796, %v799
    %vm801 = vweird.f32 %v794
    %vm802 = vweird.f32 %v796
    %vm803 = vmor %vm801, %vm802
    %v804 = vsel %vm803, %v796, %v800
    %v805 = vand.u32 2147483647, %v794
    %vm806 = vcmp.eq.f32.partialorder %v805, 8.507059e+37
    %v807 = vand.u32 %v794, 2147483648
    %v808 = vor.u32 1.1754944e-38, %v807
    %v809 = vsel %vm806, %v808, %v804
    %v810 = vmul.f32 1.0, %v809
    %v811 = vrcp.pop %v795
    %v812 = vmul.f32 %v795, %v811
    %v813 = vsub.f32 1.0, %v812
    %v814 = vmul.f32 %v811, %v813
    %v815 = vadd.f32 %v811, %v814
    %vm816 = vweird.f32 %v795
    %vm817 = vweird.f32 %v811
    %vm818 = vmor %vm816, %vm817
    %v819 = vsel %vm818, %v811, %v815
    %v820 = vand.u32 2147483647, %v795
    %vm821 = vcmp.eq.f32.partialorder %v820, 8.507059e+37
    %v822 = vand.u32 %v795, 2147483648
    %v823 = vor.u32 1.1754944e-38, %v822
    %v824 = vsel %vm821, %v823, %v819
    %v825 = vmul.f32 1.0, %v824
    %v826 = vtanh.pop %v787
    %v828 = vrot.slane %v721, 6
    %v830 = vmul.f32 %v810, %v828
    %v831 = vmul.f32 %v810, %v826
    %833 = vrot.lane.b32.xlu0 %v831, 64
    %v834 = vpop.permute.xlu0 %833
    %v836 = vadd.f32 %v830, %v834
    %v837 = vtanh.pop %v836
    %v838 = vmul.f32 %v825, %v837
    %840 = vrot.lane.b32.xlu0 %v838, 64
    %v841 = vpop.permute.xlu0 %840
    %843 = vst.msk [vmem:[#allocation2 + $0x8] sm:$0xc] %vm384, %v841
    %844 = vst.msk [vmem:[#allocation2 + $0x12] sm:$0xc] %vm386, %v841
    %v845 = vrot.slane %v838, 2
    %846 = vrot.lane.b32.xlu0 %v845, 64
    %v847 = vpop.permute.xlu0 %846
    %v848 = vsel %vm162, %v847, 0
    %850 = vmatpush.msra.mxu0 0.0
    %851 = vmatpush.msra.mxu0 0.0
    %852 = vmatpush.msra.mxu0 0.0
    %853 = vmatpush.msra.mxu0 0.0
    %854 = vmatpush.msra.mxu0 0.0
    %855 = vmatpush.msra.mxu0 0.0
    %856 = vmatpush.msra.mxu0 0.0
    %857 = vmatpush.msra.mxu0 0.0
    %858 = vmatpush.msra.mxu0 %v151
    %859 = vmatpush.msra.mxu0 %v149
    %860 = vmatpush.msra.mxu0 %v147
    %861 = vmatpush.msra.mxu0 %v145
    %862 = vmatpush.msra.mxu0 %v143
    %863 = vmatpush.msra.mxu0 %v141
    %864 = vmatpush.msra.mxu0 %v139
    %865 = vmatpush.msra.mxu0 %v137
    %866 = vmatmul.f32.gmra.mxu0 %v848
    %v867 = vpop.f32.mrf.mxu0
    %v868 = vadd.f32 0.0, %v867
    %869 = vdwg.mxu0
    %870 = vmatpush.msra.mxu0 0.0
    %871 = vmatpush.msra.mxu0 0.0
    %872 = vmatpush.msra.mxu0 0.0
    %873 = vmatpush.msra.mxu0 0.0
    %874 = vmatpush.msra.mxu0 0.0
    %875 = vmatpush.msra.mxu0 0.0
    %876 = vmatpush.msra.mxu0 0.0
    %877 = vmatpush.msra.mxu0 0.0
    %878 = vmatpush.msra.mxu0 %v152
    %879 = vmatpush.msra.mxu0 %v150
    %880 = vmatpush.msra.mxu0 %v148
    %881 = vmatpush.msra.mxu0 %v146
    %882 = vmatpush.msra.mxu0 %v144
    %883 = vmatpush.msra.mxu0 %v142
    %884 = vmatpush.msra.mxu0 %v140
    %885 = vmatpush.msra.mxu0 %v138
    %886 = vmatmul.f32.gmra.mxu0 %v848
    %v887 = vpop.f32.mrf.mxu0
    %v888 = vadd.f32 0.0, %v887
    %889 = vdwg.mxu0
    %v892 = vrot.slane %v868, 4
    %v893 = vrot.slane %v888, 4
    %v896 = vadd.f32 %v622, %v892
    %v897 = vadd.f32 %v623, %v893
    %v898 = vadd.f32 %v896, %v209
    %v899 = vadd.f32 %v897, %v210
    %v900 = vxor.u32 %v898, 2147483648
    %v901 = vxor.u32 %v899, 2147483648
    %v902 = vmul.f32 %v900, 1.442695
    %v903 = vpow.pop %v902
    %v904 = vmul.f32 %v901, 1.442695
    %v905 = vpow.pop %v904
    %v906 = vadd.f32 %v903, 1.0
    %v907 = vadd.f32 %v905, 1.0
    %v908 = vrcp.pop %v906
    %v909 = vmul.f32 %v906, %v908
    %v910 = vsub.f32 1.0, %v909
    %v911 = vmul.f32 %v908, %v910
    %v912 = vadd.f32 %v908, %v911
    %vm913 = vweird.f32 %v906
    %vm914 = vweird.f32 %v908
    %vm915 = vmor %vm913, %vm914
    %v916 = vsel %vm915, %v908, %v912
    %v917 = vand.u32 2147483647, %v906
    %vm918 = vcmp.eq.f32.partialorder %v917, 8.507059e+37
    %v919 = vand.u32 %v906, 2147483648
    %v920 = vor.u32 1.1754944e-38, %v919
    %v921 = vsel %vm918, %v920, %v916
    %v922 = vmul.f32 1.0, %v921
    %v923 = vrcp.pop %v907
    %v924 = vmul.f32 %v907, %v923
    %v925 = vsub.f32 1.0, %v924
    %v926 = vmul.f32 %v923, %v925
    %v927 = vadd.f32 %v923, %v926
    %vm928 = vweird.f32 %v907
    %vm929 = vweird.f32 %v923
    %vm930 = vmor %vm928, %vm929
    %v931 = vsel %vm930, %v923, %v927
    %v932 = vand.u32 2147483647, %v907
    %vm933 = vcmp.eq.f32.partialorder %v932, 8.507059e+37
    %v934 = vand.u32 %v907, 2147483648
    %v935 = vor.u32 1.1754944e-38, %v934
    %v936 = vsel %vm933, %v935, %v931
    %v937 = vmul.f32 1.0, %v936
    %v938 = vtanh.pop %v899
    %v940 = vrot.slane %v836, 6
    %v942 = vmul.f32 %v922, %v940
    %v943 = vmul.f32 %v922, %v938
    %945 = vrot.lane.b32.xlu0 %v943, 64
    %v946 = vpop.permute.xlu0 %945
    %v948 = vadd.f32 %v942, %v946
    %v949 = vtanh.pop %v948
    %v950 = vmul.f32 %v937, %v949
    %952 = vrot.lane.b32.xlu0 %v950, 64
    %v953 = vpop.permute.xlu0 %952
    %955 = vst.msk [vmem:[#allocation2 + $0x8] sm:$0x30] %vm498, %v953
    %956 = vst.msk [vmem:[#allocation2 + $0xe] sm:$0x30] %vm500, %v953
    %v957 = vrot.slane %v950, 4
    %958 = vrot.lane.b32.xlu0 %v957, 64
    %v959 = vpop.permute.xlu0 %958
    %v960 = vsel %vm162, %v959, 0
    %962 = vmatpush.msra.mxu0 0.0
    %963 = vmatpush.msra.mxu0 0.0
    %964 = vmatpush.msra.mxu0 0.0
    %965 = vmatpush.msra.mxu0 0.0
    %966 = vmatpush.msra.mxu0 0.0
    %967 = vmatpush.msra.mxu0 0.0
    %968 = vmatpush.msra.mxu0 0.0
    %969 = vmatpush.msra.mxu0 0.0
    %970 = vmatpush.msra.mxu0 %v151
    %971 = vmatpush.msra.mxu0 %v149
    %972 = vmatpush.msra.mxu0 %v147
    %973 = vmatpush.msra.mxu0 %v145
    %974 = vmatpush.msra.mxu0 %v143
    %975 = vmatpush.msra.mxu0 %v141
    %976 = vmatpush.msra.mxu0 %v139
    %977 = vmatpush.msra.mxu0 %v137
    %978 = vmatmul.f32.gmra.mxu0 %v960
    %v979 = vpop.f32.mrf.mxu0
    %v980 = vadd.f32 0.0, %v979
    %981 = vdwg.mxu0
    %982 = vmatpush.msra.mxu0 0.0
    %983 = vmatpush.msra.mxu0 0.0
    %984 = vmatpush.msra.mxu0 0.0
    %985 = vmatpush.msra.mxu0 0.0
    %986 = vmatpush.msra.mxu0 0.0
    %987 = vmatpush.msra.mxu0 0.0
    %988 = vmatpush.msra.mxu0 0.0
    %989 = vmatpush.msra.mxu0 0.0
    %990 = vmatpush.msra.mxu0 %v152
    %991 = vmatpush.msra.mxu0 %v150
    %992 = vmatpush.msra.mxu0 %v148
    %993 = vmatpush.msra.mxu0 %v146
    %994 = vmatpush.msra.mxu0 %v144
    %995 = vmatpush.msra.mxu0 %v142
    %996 = vmatpush.msra.mxu0 %v140
    %997 = vmatpush.msra.mxu0 %v138
    %998 = vmatmul.f32.gmra.mxu0 %v960
    %v999 = vpop.f32.mrf.mxu0
    %v1000 = vadd.f32 0.0, %v999
    %1001 = vdwg.mxu0
    %v1004 = vrot.slane %v980, 2
    %v1005 = vrot.slane %v1000, 2
    %v1008 = vadd.f32 %v734, %v1004
    %v1009 = vadd.f32 %v735, %v1005
    %v1010 = vadd.f32 %v1008, %v209
    %v1011 = vadd.f32 %v1009, %v210
    %v1012 = vxor.u32 %v1010, 2147483648
    %v1013 = vxor.u32 %v1011, 2147483648
    %v1014 = vmul.f32 %v1012, 1.442695
    %v1015 = vpow.pop %v1014
    %v1016 = vmul.f32 %v1013, 1.442695
    %v1017 = vpow.pop %v1016
    %v1018 = vadd.f32 %v1015, 1.0
    %v1019 = vadd.f32 %v1017, 1.0
    %v1020 = vrcp.pop %v1018
    %v1021 = vmul.f32 %v1018, %v1020
    %v1022 = vsub.f32 1.0, %v1021
    %v1023 = vmul.f32 %v1020, %v1022
    %v1024 = vadd.f32 %v1020, %v1023
    %vm1025 = vweird.f32 %v1018
    %vm1026 = vweird.f32 %v1020
    %vm1027 = vmor %vm1025, %vm1026
    %v1028 = vsel %vm1027, %v1020, %v1024
    %v1029 = vand.u32 2147483647, %v1018
    %vm1030 = vcmp.eq.f32.partialorder %v1029, 8.507059e+37
    %v1031 = vand.u32 %v1018, 2147483648
    %v1032 = vor.u32 1.1754944e-38, %v1031
    %v1033 = vsel %vm1030, %v1032, %v1028
    %v1034 = vmul.f32 1.0, %v1033
    %v1035 = vrcp.pop %v1019
    %v1036 = vmul.f32 %v1019, %v1035
    %v1037 = vsub.f32 1.0, %v1036
    %v1038 = vmul.f32 %v1035, %v1037
    %v1039 = vadd.f32 %v1035, %v1038
    %vm1040 = vweird.f32 %v1019
    %vm1041 = vweird.f32 %v1035
    %vm1042 = vmor %vm1040, %vm1041
    %v1043 = vsel %vm1042, %v1035, %v1039
    %v1044 = vand.u32 2147483647, %v1019
    %vm1045 = vcmp.eq.f32.partialorder %v1044, 8.507059e+37
    %v1046 = vand.u32 %v1019, 2147483648
    %v1047 = vor.u32 1.1754944e-38, %v1046
    %v1048 = vsel %vm1045, %v1047, %v1043
    %v1049 = vmul.f32 1.0, %v1048
    %v1050 = vtanh.pop %v1011
    %v1052 = vrot.slane %v948, 6
    %v1054 = vmul.f32 %v1034, %v1052
    %v1055 = vmul.f32 %v1034, %v1050
    %1057 = vrot.lane.b32.xlu0 %v1055, 64
    %v1058 = vpop.permute.xlu0 %1057
    %v1060 = vadd.f32 %v1054, %v1058
    %v1061 = vtanh.pop %v1060
    %v1062 = vmul.f32 %v1049, %v1061
    %1064 = vrot.lane.b32.xlu0 %v1062, 64
    %v1065 = vpop.permute.xlu0 %1064
    %1067 = vst.msk [vmem:[#allocation2 + $0x8] sm:$0xc0] %vm612, %v1065
    %1068 = vst.msk [vmem:[#allocation2 + $0xa] sm:$0xc0] %vm614, %v1065
    %v1071 = vrot.slane %v127, 6
    %v1072 = vrot.slane %v128, 6
    %v1075 = vadd.f32 %v129, %v1071
    %v1076 = vadd.f32 %v130, %v1072
    %v1077 = vrot.slane %v1062, 6
    %1078 = vrot.lane.b32.xlu0 %v1077, 64
    %v1079 = vpop.permute.xlu0 %1078
    %v1080 = vsel %vm162, %v1079, 0
    %1082 = vmatpush.msra.mxu0 0.0
    %1083 = vmatpush.msra.mxu0 0.0
    %1084 = vmatpush.msra.mxu0 0.0
    %1085 = vmatpush.msra.mxu0 0.0
    %1086 = vmatpush.msra.mxu0 0.0
    %1087 = vmatpush.msra.mxu0 0.0
    %1088 = vmatpush.msra.mxu0 0.0
    %1089 = vmatpush.msra.mxu0 0.0
    %1090 = vmatpush.msra.mxu0 %v151
    %1091 = vmatpush.msra.mxu0 %v149
    %1092 = vmatpush.msra.mxu0 %v147
    %1093 = vmatpush.msra.mxu0 %v145
    %1094 = vmatpush.msra.mxu0 %v143
    %1095 = vmatpush.msra.mxu0 %v141
    %1096 = vmatpush.msra.mxu0 %v139
    %1097 = vmatpush.msra.mxu0 %v137
    %1098 = vmatmul.f32.gmra.mxu0 %v1080
    %v1099 = vpop.f32.mrf.mxu0
    %v1100 = vadd.f32 0.0, %v1099
    %1101 = vdwg.mxu0
    %1102 = vmatpush.msra.mxu0 0.0
    %1103 = vmatpush.msra.mxu0 0.0
    %1104 = vmatpush.msra.mxu0 0.0
    %1105 = vmatpush.msra.mxu0 0.0
    %1106 = vmatpush.msra.mxu0 0.0
    %1107 = vmatpush.msra.mxu0 0.0
    %1108 = vmatpush.msra.mxu0 0.0
    %1109 = vmatpush.msra.mxu0 0.0
    %1110 = vmatpush.msra.mxu0 %v152
    %1111 = vmatpush.msra.mxu0 %v150
    %1112 = vmatpush.msra.mxu0 %v148
    %1113 = vmatpush.msra.mxu0 %v146
    %1114 = vmatpush.msra.mxu0 %v144
    %1115 = vmatpush.msra.mxu0 %v142
    %1116 = vmatpush.msra.mxu0 %v140
    %1117 = vmatpush.msra.mxu0 %v138
    %1118 = vmatmul.f32.gmra.mxu0 %v1080
    %v1119 = vpop.f32.mrf.mxu0
    %v1120 = vadd.f32 0.0, %v1119
    %1121 = vdwg.mxu0
    %v1122 = vadd.f32 %v1075, %v1100
    %v1123 = vadd.f32 %v1076, %v1120
    %v1124 = vadd.f32 %v1122, %v209
    %v1125 = vadd.f32 %v1123, %v210
    %v1126 = vxor.u32 %v1124, 2147483648
    %v1127 = vxor.u32 %v1125, 2147483648
    %v1128 = vmul.f32 %v1126, 1.442695
    %v1129 = vpow.pop %v1128
    %v1130 = vmul.f32 %v1127, 1.442695
    %v1131 = vpow.pop %v1130
    %v1132 = vadd.f32 %v1129, 1.0
    %v1133 = vadd.f32 %v1131, 1.0
    %v1134 = vrcp.pop %v1132
    %v1135 = vmul.f32 %v1132, %v1134
    %v1136 = vsub.f32 1.0, %v1135
    %v1137 = vmul.f32 %v1134, %v1136
    %v1138 = vadd.f32 %v1134, %v1137
    %vm1139 = vweird.f32 %v1132
    %vm1140 = vweird.f32 %v1134
    %vm1141 = vmor %vm1139, %vm1140
    %v1142 = vsel %vm1141, %v1134, %v1138
    %v1143 = vand.u32 2147483647, %v1132
    %vm1144 = vcmp.eq.f32.partialorder %v1143, 8.507059e+37
    %v1145 = vand.u32 %v1132, 2147483648
    %v1146 = vor.u32 1.1754944e-38, %v1145
    %v1147 = vsel %vm1144, %v1146, %v1142
    %v1148 = vmul.f32 1.0, %v1147
    %v1149 = vrcp.pop %v1133
    %v1150 = vmul.f32 %v1133, %v1149
    %v1151 = vsub.f32 1.0, %v1150
    %v1152 = vmul.f32 %v1149, %v1151
    %v1153 = vadd.f32 %v1149, %v1152
    %vm1154 = vweird.f32 %v1133
    %vm1155 = vweird.f32 %v1149
    %vm1156 = vmor %vm1154, %vm1155
    %v1157 = vsel %vm1156, %v1149, %v1153
    %v1158 = vand.u32 2147483647, %v1133
    %vm1159 = vcmp.eq.f32.partialorder %v1158, 8.507059e+37
    %v1160 = vand.u32 %v1133, 2147483648
    %v1161 = vor.u32 1.1754944e-38, %v1160
    %v1162 = vsel %vm1159, %v1161, %v1157
    %v1163 = vmul.f32 1.0, %v1162
    %v1164 = vtanh.pop %v1125
    %v1166 = vrot.slane %v1060, 6
    %v1168 = vmul.f32 %v1148, %v1166
    %v1169 = vmul.f32 %v1148, %v1164
    %1171 = vrot.lane.b32.xlu0 %v1169, 64
    %v1172 = vpop.permute.xlu0 %1171
    %v1174 = vadd.f32 %v1168, %v1172
    %v1175 = vtanh.pop %v1174
    %v1176 = vmul.f32 %v1163, %v1175
    %1178 = vrot.lane.b32.xlu0 %v1176, 64
    %v1179 = vpop.permute.xlu0 %1178
    %1181 = vst.msk [vmem:[#allocation2 + $0x10] sm:$0x3] %vm267, %v1179
    %1182 = vst.msk [vmem:[#allocation2 + $0xe] sm:$0x3] %vm269, %v1179
    %v1183 = vrot.slane %v127, 2
    %v1184 = vrot.slane %v128, 2
    %v1187 = vadd.f32 %v129, %v1183
    %v1188 = vadd.f32 %v130, %v1184
    %v1189 = vsel %vm162, %v1179, 0
    %1191 = vmatpush.msra.mxu0 0.0
    %1192 = vmatpush.msra.mxu0 0.0
    %1193 = vmatpush.msra.mxu0 0.0
    %1194 = vmatpush.msra.mxu0 0.0
    %1195 = vmatpush.msra.mxu0 0.0
    %1196 = vmatpush.msra.mxu0 0.0
    %1197 = vmatpush.msra.mxu0 0.0
    %1198 = vmatpush.msra.mxu0 0.0
    %1199 = vmatpush.msra.mxu0 %v151
    %1200 = vmatpush.msra.mxu0 %v149
    %1201 = vmatpush.msra.mxu0 %v147
    %1202 = vmatpush.msra.mxu0 %v145
    %1203 = vmatpush.msra.mxu0 %v143
    %1204 = vmatpush.msra.mxu0 %v141
    %1205 = vmatpush.msra.mxu0 %v139
    %1206 = vmatpush.msra.mxu0 %v137
    %1207 = vmatmul.f32.gmra.mxu0 %v1189
    %v1208 = vpop.f32.mrf.mxu0
    %v1209 = vadd.f32 0.0, %v1208
    %1210 = vdwg.mxu0
    %1211 = vmatpush.msra.mxu0 0.0
    %1212 = vmatpush.msra.mxu0 0.0
    %1213 = vmatpush.msra.mxu0 0.0
    %1214 = vmatpush.msra.mxu0 0.0
    %1215 = vmatpush.msra.mxu0 0.0
    %1216 = vmatpush.msra.mxu0 0.0
    %1217 = vmatpush.msra.mxu0 0.0
    %1218 = vmatpush.msra.mxu0 0.0
    %1219 = vmatpush.msra.mxu0 %v152
    %1220 = vmatpush.msra.mxu0 %v150
    %1221 = vmatpush.msra.mxu0 %v148
    %1222 = vmatpush.msra.mxu0 %v146
    %1223 = vmatpush.msra.mxu0 %v144
    %1224 = vmatpush.msra.mxu0 %v142
    %1225 = vmatpush.msra.mxu0 %v140
    %1226 = vmatpush.msra.mxu0 %v138
    %1227 = vmatmul.f32.gmra.mxu0 %v1189
    %v1228 = vpop.f32.mrf.mxu0
    %v1229 = vadd.f32 0.0, %v1228
    %1230 = vdwg.mxu0
    %v1233 = vrot.slane %v1209, 6
    %v1234 = vrot.slane %v1229, 6
    %v1237 = vadd.f32 %v1187, %v1233
    %v1238 = vadd.f32 %v1188, %v1234
    %v1239 = vadd.f32 %v1237, %v209
    %v1240 = vadd.f32 %v1238, %v210
    %v1241 = vxor.u32 %v1239, 2147483648
    %v1242 = vxor.u32 %v1240, 2147483648
    %v1243 = vmul.f32 %v1241, 1.442695
    %v1244 = vpow.pop %v1243
    %v1245 = vmul.f32 %v1242, 1.442695
    %v1246 = vpow.pop %v1245
    %v1247 = vadd.f32 %v1244, 1.0
    %v1248 = vadd.f32 %v1246, 1.0
    %v1249 = vrcp.pop %v1247
    %v1250 = vmul.f32 %v1247, %v1249
    %v1251 = vsub.f32 1.0, %v1250
    %v1252 = vmul.f32 %v1249, %v1251
    %v1253 = vadd.f32 %v1249, %v1252
    %vm1254 = vweird.f32 %v1247
    %vm1255 = vweird.f32 %v1249
    %vm1256 = vmor %vm1254, %vm1255
    %v1257 = vsel %vm1256, %v1249, %v1253
    %v1258 = vand.u32 2147483647, %v1247
    %vm1259 = vcmp.eq.f32.partialorder %v1258, 8.507059e+37
    %v1260 = vand.u32 %v1247, 2147483648
    %v1261 = vor.u32 1.1754944e-38, %v1260
    %v1262 = vsel %vm1259, %v1261, %v1257
    %v1263 = vmul.f32 1.0, %v1262
    %v1264 = vrcp.pop %v1248
    %v1265 = vmul.f32 %v1248, %v1264
    %v1266 = vsub.f32 1.0, %v1265
    %v1267 = vmul.f32 %v1264, %v1266
    %v1268 = vadd.f32 %v1264, %v1267
    %vm1269 = vweird.f32 %v1248
    %vm1270 = vweird.f32 %v1264
    %vm1271 = vmor %vm1269, %vm1270
    %v1272 = vsel %vm1271, %v1264, %v1268
    %v1273 = vand.u32 2147483647, %v1248
    %vm1274 = vcmp.eq.f32.partialorder %v1273, 8.507059e+37
    %v1275 = vand.u32 %v1248, 2147483648
    %v1276 = vor.u32 1.1754944e-38, %v1275
    %v1277 = vsel %vm1274, %v1276, %v1272
    %v1278 = vmul.f32 1.0, %v1277
    %v1279 = vtanh.pop %v1240
    %v1281 = vrot.slane %v1174, 6
    %v1283 = vmul.f32 %v1263, %v1281
    %v1284 = vmul.f32 %v1263, %v1279
    %1286 = vrot.lane.b32.xlu0 %v1284, 64
    %v1287 = vpop.permute.xlu0 %1286
    %v1289 = vadd.f32 %v1283, %v1287
    %v1290 = vtanh.pop %v1289
    %v1291 = vmul.f32 %v1278, %v1290
    %1293 = vrot.lane.b32.xlu0 %v1291, 64
    %v1294 = vpop.permute.xlu0 %1293
    %1296 = vst.msk [vmem:[#allocation2 + $0x10] sm:$0xc] %vm384, %v1294
    %1297 = vst.msk [vmem:[#allocation2 + $0xa] sm:$0xc] %vm386, %v1294
    %v1298 = vrot.slane %v1291, 2
    %1299 = vrot.lane.b32.xlu0 %v1298, 64
    %v1300 = vpop.permute.xlu0 %1299
    %v1301 = vsel %vm162, %v1300, 0
    %1303 = vmatpush.msra.mxu0 0.0
    %1304 = vmatpush.msra.mxu0 0.0
    %1305 = vmatpush.msra.mxu0 0.0
    %1306 = vmatpush.msra.mxu0 0.0
    %1307 = vmatpush.msra.mxu0 0.0
    %1308 = vmatpush.msra.mxu0 0.0
    %1309 = vmatpush.msra.mxu0 0.0
    %1310 = vmatpush.msra.mxu0 0.0
    %1311 = vmatpush.msra.mxu0 %v151
    %1312 = vmatpush.msra.mxu0 %v149
    %1313 = vmatpush.msra.mxu0 %v147
    %1314 = vmatpush.msra.mxu0 %v145
    %1315 = vmatpush.msra.mxu0 %v143
    %1316 = vmatpush.msra.mxu0 %v141
    %1317 = vmatpush.msra.mxu0 %v139
    %1318 = vmatpush.msra.mxu0 %v137
    %1319 = vmatmul.f32.gmra.mxu0 %v1301
    %v1320 = vpop.f32.mrf.mxu0
    %v1321 = vadd.f32 0.0, %v1320
    %1322 = vdwg.mxu0
    %1323 = vmatpush.msra.mxu0 0.0
    %1324 = vmatpush.msra.mxu0 0.0
    %1325 = vmatpush.msra.mxu0 0.0
    %1326 = vmatpush.msra.mxu0 0.0
    %1327 = vmatpush.msra.mxu0 0.0
    %1328 = vmatpush.msra.mxu0 0.0
    %1329 = vmatpush.msra.mxu0 0.0
    %1330 = vmatpush.msra.mxu0 0.0
    %1331 = vmatpush.msra.mxu0 %v152
    %1332 = vmatpush.msra.mxu0 %v150
    %1333 = vmatpush.msra.mxu0 %v148
    %1334 = vmatpush.msra.mxu0 %v146
    %1335 = vmatpush.msra.mxu0 %v144
    %1336 = vmatpush.msra.mxu0 %v142
    %1337 = vmatpush.msra.mxu0 %v140
    %1338 = vmatpush.msra.mxu0 %v138
    %1339 = vmatmul.f32.gmra.mxu0 %v1301
    %v1340 = vpop.f32.mrf.mxu0
    %v1341 = vadd.f32 0.0, %v1340
    %1342 = vdwg.mxu0
    %v1345 = vrot.slane %v1321, 4
    %v1346 = vrot.slane %v1341, 4
    %v1349 = vadd.f32 %v1075, %v1345
    %v1350 = vadd.f32 %v1076, %v1346
    %v1351 = vadd.f32 %v1349, %v209
    %v1352 = vadd.f32 %v1350, %v210
    %v1353 = vxor.u32 %v1351, 2147483648
    %v1354 = vxor.u32 %v1352, 2147483648
    %v1355 = vmul.f32 %v1353, 1.442695
    %v1356 = vpow.pop %v1355
    %v1357 = vmul.f32 %v1354, 1.442695
    %v1358 = vpow.pop %v1357
    %v1359 = vadd.f32 %v1356, 1.0
    %v1360 = vadd.f32 %v1358, 1.0
    %v1361 = vrcp.pop %v1359
    %v1362 = vmul.f32 %v1359, %v1361
    %v1363 = vsub.f32 1.0, %v1362
    %v1364 = vmul.f32 %v1361, %v1363
    %v1365 = vadd.f32 %v1361, %v1364
    %vm1366 = vweird.f32 %v1359
    %vm1367 = vweird.f32 %v1361
    %vm1368 = vmor %vm1366, %vm1367
    %v1369 = vsel %vm1368, %v1361, %v1365
    %v1370 = vand.u32 2147483647, %v1359
    %vm1371 = vcmp.eq.f32.partialorder %v1370, 8.507059e+37
    %v1372 = vand.u32 %v1359, 2147483648
    %v1373 = vor.u32 1.1754944e-38, %v1372
    %v1374 = vsel %vm1371, %v1373, %v1369
    %v1375 = vmul.f32 1.0, %v1374
    %v1376 = vrcp.pop %v1360
    %v1377 = vmul.f32 %v1360, %v1376
    %v1378 = vsub.f32 1.0, %v1377
    %v1379 = vmul.f32 %v1376, %v1378
    %v1380 = vadd.f32 %v1376, %v1379
    %vm1381 = vweird.f32 %v1360
    %vm1382 = vweird.f32 %v1376
    %vm1383 = vmor %vm1381, %vm1382
    %v1384 = vsel %vm1383, %v1376, %v1380
    %v1385 = vand.u32 2147483647, %v1360
    %vm1386 = vcmp.eq.f32.partialorder %v1385, 8.507059e+37
    %v1387 = vand.u32 %v1360, 2147483648
    %v1388 = vor.u32 1.1754944e-38, %v1387
    %v1389 = vsel %vm1386, %v1388, %v1384
    %v1390 = vmul.f32 1.0, %v1389
    %v1391 = vtanh.pop %v1352
    %v1393 = vrot.slane %v1289, 6
    %v1395 = vmul.f32 %v1375, %v1393
    %v1396 = vmul.f32 %v1375, %v1391
    %1398 = vrot.lane.b32.xlu0 %v1396, 64
    %v1399 = vpop.permute.xlu0 %1398
    %v1401 = vadd.f32 %v1395, %v1399
    %v1402 = vtanh.pop %v1401
    %v1403 = vmul.f32 %v1390, %v1402
    %1405 = vrot.lane.b32.xlu0 %v1403, 64
    %v1406 = vpop.permute.xlu0 %1405
    %1408 = vst.msk [vmem:[#allocation2 + $0x10] sm:$0x30] %vm498, %v1406
    %1409 = vst.msk [vmem:[#allocation2 + $0x6] sm:$0x30] %vm500, %v1406
    %v1410 = vrot.slane %v1403, 4
    %1411 = vrot.lane.b32.xlu0 %v1410, 64
    %v1412 = vpop.permute.xlu0 %1411
    %v1413 = vsel %vm162, %v1412, 0
    %1415 = vmatpush.msra.mxu0 0.0
    %1416 = vmatpush.msra.mxu0 0.0
    %1417 = vmatpush.msra.mxu0 0.0
    %1418 = vmatpush.msra.mxu0 0.0
    %1419 = vmatpush.msra.mxu0 0.0
    %1420 = vmatpush.msra.mxu0 0.0
    %1421 = vmatpush.msra.mxu0 0.0
    %1422 = vmatpush.msra.mxu0 0.0
    %1423 = vmatpush.msra.mxu0 %v151
    %1424 = vmatpush.msra.mxu0 %v149
    %1425 = vmatpush.msra.mxu0 %v147
    %1426 = vmatpush.msra.mxu0 %v145
    %1427 = vmatpush.msra.mxu0 %v143
    %1428 = vmatpush.msra.mxu0 %v141
    %1429 = vmatpush.msra.mxu0 %v139
    %1430 = vmatpush.msra.mxu0 %v137
    %1431 = vmatmul.f32.gmra.mxu0 %v1413
    %v1432 = vpop.f32.mrf.mxu0
    %v1433 = vadd.f32 0.0, %v1432
    %1434 = vdwg.mxu0
    %1435 = vmatpush.msra.mxu0 0.0
    %1436 = vmatpush.msra.mxu0 0.0
    %1437 = vmatpush.msra.mxu0 0.0
    %1438 = vmatpush.msra.mxu0 0.0
    %1439 = vmatpush.msra.mxu0 0.0
    %1440 = vmatpush.msra.mxu0 0.0
    %1441 = vmatpush.msra.mxu0 0.0
    %1442 = vmatpush.msra.mxu0 0.0
    %1443 = vmatpush.msra.mxu0 %v152
    %1444 = vmatpush.msra.mxu0 %v150
    %1445 = vmatpush.msra.mxu0 %v148
    %1446 = vmatpush.msra.mxu0 %v146
    %1447 = vmatpush.msra.mxu0 %v144
    %1448 = vmatpush.msra.mxu0 %v142
    %1449 = vmatpush.msra.mxu0 %v140
    %1450 = vmatpush.msra.mxu0 %v138
    %1451 = vmatmul.f32.gmra.mxu0 %v1413
    %v1452 = vpop.f32.mrf.mxu0
    %v1453 = vadd.f32 0.0, %v1452
    %1454 = vdwg.mxu0
    %v1457 = vrot.slane %v1433, 2
    %v1458 = vrot.slane %v1453, 2
    %v1461 = vadd.f32 %v1187, %v1457
    %v1462 = vadd.f32 %v1188, %v1458
    %v1463 = vadd.f32 %v1461, %v209
    %v1464 = vadd.f32 %v1462, %v210
    %v1465 = vxor.u32 %v1463, 2147483648
    %v1466 = vxor.u32 %v1464, 2147483648
    %v1467 = vmul.f32 %v1465, 1.442695
    %v1468 = vpow.pop %v1467
    %v1469 = vmul.f32 %v1466, 1.442695
    %v1470 = vpow.pop %v1469
    %v1471 = vadd.f32 %v1468, 1.0
    %v1472 = vadd.f32 %v1470, 1.0
    %v1473 = vrcp.pop %v1471
    %v1474 = vmul.f32 %v1471, %v1473
    %v1475 = vsub.f32 1.0, %v1474
    %v1476 = vmul.f32 %v1473, %v1475
    %v1477 = vadd.f32 %v1473, %v1476
    %vm1478 = vweird.f32 %v1471
    %vm1479 = vweird.f32 %v1473
    %vm1480 = vmor %vm1478, %vm1479
    %v1481 = vsel %vm1480, %v1473, %v1477
    %v1482 = vand.u32 2147483647, %v1471
    %vm1483 = vcmp.eq.f32.partialorder %v1482, 8.507059e+37
    %v1484 = vand.u32 %v1471, 2147483648
    %v1485 = vor.u32 1.1754944e-38, %v1484
    %v1486 = vsel %vm1483, %v1485, %v1481
    %v1487 = vmul.f32 1.0, %v1486
    %v1488 = vrcp.pop %v1472
    %v1489 = vmul.f32 %v1472, %v1488
    %v1490 = vsub.f32 1.0, %v1489
    %v1491 = vmul.f32 %v1488, %v1490
    %v1492 = vadd.f32 %v1488, %v1491
    %vm1493 = vweird.f32 %v1472
    %vm1494 = vweird.f32 %v1488
    %vm1495 = vmor %vm1493, %vm1494
    %v1496 = vsel %vm1495, %v1488, %v1492
    %v1497 = vand.u32 2147483647, %v1472
    %vm1498 = vcmp.eq.f32.partialorder %v1497, 8.507059e+37
    %v1499 = vand.u32 %v1472, 2147483648
    %v1500 = vor.u32 1.1754944e-38, %v1499
    %v1501 = vsel %vm1498, %v1500, %v1496
    %v1502 = vmul.f32 1.0, %v1501
    %v1503 = vtanh.pop %v1464
    %v1505 = vrot.slane %v1401, 6
    %v1507 = vmul.f32 %v1487, %v1505
    %v1508 = vmul.f32 %v1487, %v1503
    %1510 = vrot.lane.b32.xlu0 %v1508, 64
    %v1511 = vpop.permute.xlu0 %1510
    %v1513 = vadd.f32 %v1507, %v1511
    %v1514 = vtanh.pop %v1513
    %v1515 = vmul.f32 %v1502, %v1514
    %1517 = vrot.lane.b32.xlu0 %v1515, 64
    %v1518 = vpop.permute.xlu0 %1517
    %1520 = vst.msk [vmem:[#allocation2 + $0x10] sm:$0xc0] %vm612, %v1518
    %1521 = vst.msk [vmem:[#allocation2 + $0x2] sm:$0xc0] %vm614, %v1518
    %v1524 = vrot.slane %v123, 6
    %v1525 = vrot.slane %v124, 6
    %v1528 = vadd.f32 %v133, %v1524
    %v1529 = vadd.f32 %v134, %v1525
    %v1530 = vrot.slane %v1515, 6
    %1531 = vrot.lane.b32.xlu0 %v1530, 64
    %v1532 = vpop.permute.xlu0 %1531
    %v1533 = vsel %vm162, %v1532, 0
    %1535 = vmatpush.msra.mxu0 0.0
    %1536 = vmatpush.msra.mxu0 0.0
    %1537 = vmatpush.msra.mxu0 0.0
    %1538 = vmatpush.msra.mxu0 0.0
    %1539 = vmatpush.msra.mxu0 0.0
    %1540 = vmatpush.msra.mxu0 0.0
    %1541 = vmatpush.msra.mxu0 0.0
    %1542 = vmatpush.msra.mxu0 0.0
    %1543 = vmatpush.msra.mxu0 %v151
    %1544 = vmatpush.msra.mxu0 %v149
    %1545 = vmatpush.msra.mxu0 %v147
    %1546 = vmatpush.msra.mxu0 %v145
    %1547 = vmatpush.msra.mxu0 %v143
    %1548 = vmatpush.msra.mxu0 %v141
    %1549 = vmatpush.msra.mxu0 %v139
    %1550 = vmatpush.msra.mxu0 %v137
    %1551 = vmatmul.f32.gmra.mxu0 %v1533
    %v1552 = vpop.f32.mrf.mxu0
    %v1553 = vadd.f32 0.0, %v1552
    %1554 = vdwg.mxu0
    %1555 = vmatpush.msra.mxu0 0.0
    %1556 = vmatpush.msra.mxu0 0.0
    %1557 = vmatpush.msra.mxu0 0.0
    %1558 = vmatpush.msra.mxu0 0.0
    %1559 = vmatpush.msra.mxu0 0.0
    %1560 = vmatpush.msra.mxu0 0.0
    %1561 = vmatpush.msra.mxu0 0.0
    %1562 = vmatpush.msra.mxu0 0.0
    %1563 = vmatpush.msra.mxu0 %v152
    %1564 = vmatpush.msra.mxu0 %v150
    %1565 = vmatpush.msra.mxu0 %v148
    %1566 = vmatpush.msra.mxu0 %v146
    %1567 = vmatpush.msra.mxu0 %v144
    %1568 = vmatpush.msra.mxu0 %v142
    %1569 = vmatpush.msra.mxu0 %v140
    %1570 = vmatpush.msra.mxu0 %v138
    %1571 = vmatmul.f32.gmra.mxu0 %v1533
    %v1572 = vpop.f32.mrf.mxu0
    %v1573 = vadd.f32 0.0, %v1572
    %1574 = vdwg.mxu0
    %v1575 = vadd.f32 %v1528, %v1553
    %v1576 = vadd.f32 %v1529, %v1573
    %v1577 = vadd.f32 %v1575, %v209
    %v1578 = vadd.f32 %v1576, %v210
    %v1579 = vxor.u32 %v1577, 2147483648
    %v1580 = vxor.u32 %v1578, 2147483648
    %v1581 = vmul.f32 %v1579, 1.442695
    %v1582 = vpow.pop %v1581
    %v1583 = vmul.f32 %v1580, 1.442695
    %v1584 = vpow.pop %v1583
    %v1585 = vadd.f32 %v1582, 1.0
    %v1586 = vadd.f32 %v1584, 1.0
    %v1587 = vrcp.pop %v1585
    %v1588 = vmul.f32 %v1585, %v1587
    %v1589 = vsub.f32 1.0, %v1588
    %v1590 = vmul.f32 %v1587, %v1589
    %v1591 = vadd.f32 %v1587, %v1590
    %vm1592 = vweird.f32 %v1585
    %vm1593 = vweird.f32 %v1587
    %vm1594 = vmor %vm1592, %vm1593
    %v1595 = vsel %vm1594, %v1587, %v1591
    %v1596 = vand.u32 2147483647, %v1585
    %vm1597 = vcmp.eq.f32.partialorder %v1596, 8.507059e+37
    %v1598 = vand.u32 %v1585, 2147483648
    %v1599 = vor.u32 1.1754944e-38, %v1598
    %v1600 = vsel %vm1597, %v1599, %v1595
    %v1601 = vmul.f32 1.0, %v1600
    %v1602 = vrcp.pop %v1586
    %v1603 = vmul.f32 %v1586, %v1602
    %v1604 = vsub.f32 1.0, %v1603
    %v1605 = vmul.f32 %v1602, %v1604
    %v1606 = vadd.f32 %v1602, %v1605
    %vm1607 = vweird.f32 %v1586
    %vm1608 = vweird.f32 %v1602
    %vm1609 = vmor %vm1607, %vm1608
    %v1610 = vsel %vm1609, %v1602, %v1606
    %v1611 = vand.u32 2147483647, %v1586
    %vm1612 = vcmp.eq.f32.partialorder %v1611, 8.507059e+37
    %v1613 = vand.u32 %v1586, 2147483648
    %v1614 = vor.u32 1.1754944e-38, %v1613
    %v1615 = vsel %vm1612, %v1614, %v1610
    %v1616 = vmul.f32 1.0, %v1615
    %v1617 = vtanh.pop %v1578
    %v1619 = vrot.slane %v1513, 6
    %v1621 = vmul.f32 %v1601, %v1619
    %v1622 = vmul.f32 %v1601, %v1617
    %1624 = vrot.lane.b32.xlu0 %v1622, 64
    %v1625 = vpop.permute.xlu0 %1624
    %v1627 = vadd.f32 %v1621, %v1625
    %v1628 = vtanh.pop %v1627
    %v1629 = vmul.f32 %v1616, %v1628
    %1631 = vrot.lane.b32.xlu0 %v1629, 64
    %v1632 = vpop.permute.xlu0 %1631
    %1634 = vst.msk [vmem:[#allocation2 + $0x18] sm:$0x3] %vm267, %v1632
    %1635 = vst.msk [vmem:[#allocation2 + $0x6] sm:$0x3] %vm269, %v1632
    %v1636 = vrot.slane %v123, 2
    %v1637 = vrot.slane %v124, 2
    %v1640 = vadd.f32 %v133, %v1636
    %v1641 = vadd.f32 %v134, %v1637
    %v1642 = vsel %vm162, %v1632, 0
    %1644 = vmatpush.msra.mxu0 0.0
    %1645 = vmatpush.msra.mxu0 0.0
    %1646 = vmatpush.msra.mxu0 0.0
    %1647 = vmatpush.msra.mxu0 0.0
    %1648 = vmatpush.msra.mxu0 0.0
    %1649 = vmatpush.msra.mxu0 0.0
    %1650 = vmatpush.msra.mxu0 0.0
    %1651 = vmatpush.msra.mxu0 0.0
    %1652 = vmatpush.msra.mxu0 %v151
    %1653 = vmatpush.msra.mxu0 %v149
    %1654 = vmatpush.msra.mxu0 %v147
    %1655 = vmatpush.msra.mxu0 %v145
    %1656 = vmatpush.msra.mxu0 %v143
    %1657 = vmatpush.msra.mxu0 %v141
    %1658 = vmatpush.msra.mxu0 %v139
    %1659 = vmatpush.msra.mxu0 %v137
    %1660 = vmatmul.f32.gmra.mxu0 %v1642
    %v1661 = vpop.f32.mrf.mxu0
    %v1662 = vadd.f32 0.0, %v1661
    %1663 = vdwg.mxu0
    %1664 = vmatpush.msra.mxu0 0.0
    %1665 = vmatpush.msra.mxu0 0.0
    %1666 = vmatpush.msra.mxu0 0.0
    %1667 = vmatpush.msra.mxu0 0.0
    %1668 = vmatpush.msra.mxu0 0.0
    %1669 = vmatpush.msra.mxu0 0.0
    %1670 = vmatpush.msra.mxu0 0.0
    %1671 = vmatpush.msra.mxu0 0.0
    %1672 = vmatpush.msra.mxu0 %v152
    %1673 = vmatpush.msra.mxu0 %v150
    %1674 = vmatpush.msra.mxu0 %v148
    %1675 = vmatpush.msra.mxu0 %v146
    %1676 = vmatpush.msra.mxu0 %v144
    %1677 = vmatpush.msra.mxu0 %v142
    %1678 = vmatpush.msra.mxu0 %v140
    %1679 = vmatpush.msra.mxu0 %v138
    %1680 = vmatmul.f32.gmra.mxu0 %v1642
    %v1681 = vpop.f32.mrf.mxu0
    %v1682 = vadd.f32 0.0, %v1681
    %1683 = vdwg.mxu0
    %v1686 = vrot.slane %v1662, 6
    %v1687 = vrot.slane %v1682, 6
    %v1690 = vadd.f32 %v1640, %v1686
    %v1691 = vadd.f32 %v1641, %v1687
    %v1692 = vadd.f32 %v1690, %v209
    %v1693 = vadd.f32 %v1691, %v210
    %v1694 = vxor.u32 %v1692, 2147483648
    %v1695 = vxor.u32 %v1693, 2147483648
    %v1696 = vmul.f32 %v1694, 1.442695
    %v1697 = vpow.pop %v1696
    %v1698 = vmul.f32 %v1695, 1.442695
    %v1699 = vpow.pop %v1698
    %v1700 = vadd.f32 %v1697, 1.0
    %v1701 = vadd.f32 %v1699, 1.0
    %v1702 = vrcp.pop %v1700
    %v1703 = vmul.f32 %v1700, %v1702
    %v1704 = vsub.f32 1.0, %v1703
    %v1705 = vmul.f32 %v1702, %v1704
    %v1706 = vadd.f32 %v1702, %v1705
    %vm1707 = vweird.f32 %v1700
    %vm1708 = vweird.f32 %v1702
    %vm1709 = vmor %vm1707, %vm1708
    %v1710 = vsel %vm1709, %v1702, %v1706
    %v1711 = vand.u32 2147483647, %v1700
    %vm1712 = vcmp.eq.f32.partialorder %v1711, 8.507059e+37
    %v1713 = vand.u32 %v1700, 2147483648
    %v1714 = vor.u32 1.1754944e-38, %v1713
    %v1715 = vsel %vm1712, %v1714, %v1710
    %v1716 = vmul.f32 1.0, %v1715
    %v1717 = vrcp.pop %v1701
    %v1718 = vmul.f32 %v1701, %v1717
    %v1719 = vsub.f32 1.0, %v1718
    %v1720 = vmul.f32 %v1717, %v1719
    %v1721 = vadd.f32 %v1717, %v1720
    %vm1722 = vweird.f32 %v1701
    %vm1723 = vweird.f32 %v1717
    %vm1724 = vmor %vm1722, %vm1723
    %v1725 = vsel %vm1724, %v1717, %v1721
    %v1726 = vand.u32 2147483647, %v1701
    %vm1727 = vcmp.eq.f32.partialorder %v1726, 8.507059e+37
    %v1728 = vand.u32 %v1701, 2147483648
    %v1729 = vor.u32 1.1754944e-38, %v1728
    %v1730 = vsel %vm1727, %v1729, %v1725
    %v1731 = vmul.f32 1.0, %v1730
    %v1732 = vtanh.pop %v1693
    %v1734 = vrot.slane %v1627, 6
    %v1736 = vmul.f32 %v1716, %v1734
    %v1737 = vmul.f32 %v1716, %v1732
    %1739 = vrot.lane.b32.xlu0 %v1737, 64
    %v1740 = vpop.permute.xlu0 %1739
    %v1742 = vadd.f32 %v1736, %v1740
    %v1743 = vtanh.pop %v1742
    %v1744 = vmul.f32 %v1731, %v1743
    %1746 = vrot.lane.b32.xlu0 %v1744, 64
    %v1747 = vpop.permute.xlu0 %1746
    %1749 = vst.msk [vmem:[#allocation2 + $0x18] sm:$0xc] %vm384, %v1747
    %1750 = vst.msk [vmem:[#allocation2 + $0x2] sm:$0xc] %vm386, %v1747
    %v1751 = vrot.slane %v1744, 2
    %1752 = vrot.lane.b32.xlu0 %v1751, 64
    %v1753 = vpop.permute.xlu0 %1752
    %v1754 = vsel %vm162, %v1753, 0
    %1756 = vmatpush.msra.mxu0 0.0
    %1757 = vmatpush.msra.mxu0 0.0
    %1758 = vmatpush.msra.mxu0 0.0
    %1759 = vmatpush.msra.mxu0 0.0
    %1760 = vmatpush.msra.mxu0 0.0
    %1761 = vmatpush.msra.mxu0 0.0
    %1762 = vmatpush.msra.mxu0 0.0
    %1763 = vmatpush.msra.mxu0 0.0
    %1764 = vmatpush.msra.mxu0 %v151
    %1765 = vmatpush.msra.mxu0 %v149
    %1766 = vmatpush.msra.mxu0 %v147
    %1767 = vmatpush.msra.mxu0 %v145
    %1768 = vmatpush.msra.mxu0 %v143
    %1769 = vmatpush.msra.mxu0 %v141
    %1770 = vmatpush.msra.mxu0 %v139
    %1771 = vmatpush.msra.mxu0 %v137
    %1772 = vmatmul.f32.gmra.mxu0 %v1754
    %v1773 = vpop.f32.mrf.mxu0
    %v1774 = vadd.f32 0.0, %v1773
    %1775 = vdwg.mxu0
    %1776 = vmatpush.msra.mxu0 0.0
    %1777 = vmatpush.msra.mxu0 0.0
    %1778 = vmatpush.msra.mxu0 0.0
    %1779 = vmatpush.msra.mxu0 0.0
    %1780 = vmatpush.msra.mxu0 0.0
    %1781 = vmatpush.msra.mxu0 0.0
    %1782 = vmatpush.msra.mxu0 0.0
    %1783 = vmatpush.msra.mxu0 0.0
    %1784 = vmatpush.msra.mxu0 %v152
    %1785 = vmatpush.msra.mxu0 %v150
    %1786 = vmatpush.msra.mxu0 %v148
    %1787 = vmatpush.msra.mxu0 %v146
    %1788 = vmatpush.msra.mxu0 %v144
    %1789 = vmatpush.msra.mxu0 %v142
    %1790 = vmatpush.msra.mxu0 %v140
    %1791 = vmatpush.msra.mxu0 %v138
    %1792 = vmatmul.f32.gmra.mxu0 %v1754
    %v1793 = vpop.f32.mrf.mxu0
    %v1794 = vadd.f32 0.0, %v1793
    %1795 = vdwg.mxu0
    %v1798 = vrot.slane %v1774, 4
    %v1799 = vrot.slane %v1794, 4
    %v1802 = vadd.f32 %v1528, %v1798
    %v1803 = vadd.f32 %v1529, %v1799
    %v1804 = vadd.f32 %v1802, %v209
    %v1805 = vadd.f32 %v1803, %v210
    %v1806 = vxor.u32 %v1804, 2147483648
    %v1807 = vxor.u32 %v1805, 2147483648
    %v1808 = vmul.f32 %v1806, 1.442695
    %v1809 = vpow.pop %v1808
    %v1810 = vmul.f32 %v1807, 1.442695
    %v1811 = vpow.pop %v1810
    %v1812 = vadd.f32 %v1809, 1.0
    %v1813 = vadd.f32 %v1811, 1.0
    %v1814 = vrcp.pop %v1812
    %v1815 = vmul.f32 %v1812, %v1814
    %v1816 = vsub.f32 1.0, %v1815
    %v1817 = vmul.f32 %v1814, %v1816
    %v1818 = vadd.f32 %v1814, %v1817
    %vm1819 = vweird.f32 %v1812
    %vm1820 = vweird.f32 %v1814
    %vm1821 = vmor %vm1819, %vm1820
    %v1822 = vsel %vm1821, %v1814, %v1818
    %v1823 = vand.u32 2147483647, %v1812
    %vm1824 = vcmp.eq.f32.partialorder %v1823, 8.507059e+37
    %v1825 = vand.u32 %v1812, 2147483648
    %v1826 = vor.u32 1.1754944e-38, %v1825
    %v1827 = vsel %vm1824, %v1826, %v1822
    %v1828 = vmul.f32 1.0, %v1827
    %v1829 = vrcp.pop %v1813
    %v1830 = vmul.f32 %v1813, %v1829
    %v1831 = vsub.f32 1.0, %v1830
    %v1832 = vmul.f32 %v1829, %v1831
    %v1833 = vadd.f32 %v1829, %v1832
    %vm1834 = vweird.f32 %v1813
    %vm1835 = vweird.f32 %v1829
    %vm1836 = vmor %vm1834, %vm1835
    %v1837 = vsel %vm1836, %v1829, %v1833
    %v1838 = vand.u32 2147483647, %v1813
    %vm1839 = vcmp.eq.f32.partialorder %v1838, 8.507059e+37
    %v1840 = vand.u32 %v1813, 2147483648
    %v1841 = vor.u32 1.1754944e-38, %v1840
    %v1842 = vsel %vm1839, %v1841, %v1837
    %v1843 = vmul.f32 1.0, %v1842
    %v1844 = vtanh.pop %v1805
    %v1846 = vrot.slane %v1742, 6
    %v1848 = vmul.f32 %v1828, %v1846
    %v1849 = vmul.f32 %v1828, %v1844
    %1851 = vrot.lane.b32.xlu0 %v1849, 64
    %v1852 = vpop.permute.xlu0 %1851
    %v1854 = vadd.f32 %v1848, %v1852
    %v1855 = vtanh.pop %v1854
    %v1856 = vmul.f32 %v1843, %v1855
    %1858 = vrot.lane.b32.xlu0 %v1856, 64
    %v1859 = vpop.permute.xlu0 %1858
    %1861 = vst.msk [vmem:[#allocation2 + $0x18] sm:$0x30] %vm498, %v1859
    %1862 = vst.msk [vmem:[#allocation2 - $0x2] sm:$0x30] %vm500, %v1859
    %v1863 = vrot.slane %v1856, 4
    %1864 = vrot.lane.b32.xlu0 %v1863, 64
    %v1865 = vpop.permute.xlu0 %1864
    %v1866 = vsel %vm162, %v1865, 0
    %1868 = vmatpush.msra.mxu0 0.0
    %1869 = vmatpush.msra.mxu0 0.0
    %1870 = vmatpush.msra.mxu0 0.0
    %1871 = vmatpush.msra.mxu0 0.0
    %1872 = vmatpush.msra.mxu0 0.0
    %1873 = vmatpush.msra.mxu0 0.0
    %1874 = vmatpush.msra.mxu0 0.0
    %1875 = vmatpush.msra.mxu0 0.0
    %1876 = vmatpush.msra.mxu0 %v151
    %1877 = vmatpush.msra.mxu0 %v149
    %1878 = vmatpush.msra.mxu0 %v147
    %1879 = vmatpush.msra.mxu0 %v145
    %1880 = vmatpush.msra.mxu0 %v143
    %1881 = vmatpush.msra.mxu0 %v141
    %1882 = vmatpush.msra.mxu0 %v139
    %1883 = vmatpush.msra.mxu0 %v137
    %1884 = vmatmul.f32.gmra.mxu0 %v1866
    %v1885 = vpop.f32.mrf.mxu0
    %v1886 = vadd.f32 0.0, %v1885
    %1887 = vdwg.mxu0
    %1888 = vmatpush.msra.mxu0 0.0
    %1889 = vmatpush.msra.mxu0 0.0
    %1890 = vmatpush.msra.mxu0 0.0
    %1891 = vmatpush.msra.mxu0 0.0
    %1892 = vmatpush.msra.mxu0 0.0
    %1893 = vmatpush.msra.mxu0 0.0
    %1894 = vmatpush.msra.mxu0 0.0
    %1895 = vmatpush.msra.mxu0 0.0
    %1896 = vmatpush.msra.mxu0 %v152
    %1897 = vmatpush.msra.mxu0 %v150
    %1898 = vmatpush.msra.mxu0 %v148
    %1899 = vmatpush.msra.mxu0 %v146
    %1900 = vmatpush.msra.mxu0 %v144
    %1901 = vmatpush.msra.mxu0 %v142
    %1902 = vmatpush.msra.mxu0 %v140
    %1903 = vmatpush.msra.mxu0 %v138
    %1904 = vmatmul.f32.gmra.mxu0 %v1866
    %v1905 = vpop.f32.mrf.mxu0
    %v1906 = vadd.f32 0.0, %v1905
    %1907 = vdwg.mxu0
    %v1910 = vrot.slane %v1886, 2
    %v1911 = vrot.slane %v1906, 2
    %v1914 = vadd.f32 %v1640, %v1910
    %v1915 = vadd.f32 %v1641, %v1911
    %v1916 = vadd.f32 %v1914, %v209
    %v1917 = vadd.f32 %v1915, %v210
    %v1918 = vxor.u32 %v1916, 2147483648
    %v1919 = vxor.u32 %v1917, 2147483648
    %v1920 = vmul.f32 %v1918, 1.442695
    %v1921 = vpow.pop %v1920
    %v1922 = vmul.f32 %v1919, 1.442695
    %v1923 = vpow.pop %v1922
    %v1924 = vadd.f32 %v1921, 1.0
    %v1925 = vadd.f32 %v1923, 1.0
    %v1926 = vrcp.pop %v1924
    %v1927 = vmul.f32 %v1924, %v1926
    %v1928 = vsub.f32 1.0, %v1927
    %v1929 = vmul.f32 %v1926, %v1928
    %v1930 = vadd.f32 %v1926, %v1929
    %vm1931 = vweird.f32 %v1924
    %vm1932 = vweird.f32 %v1926
    %vm1933 = vmor %vm1931, %vm1932
    %v1934 = vsel %vm1933, %v1926, %v1930
    %v1935 = vand.u32 2147483647, %v1924
    %vm1936 = vcmp.eq.f32.partialorder %v1935, 8.507059e+37
    %v1937 = vand.u32 %v1924, 2147483648
    %v1938 = vor.u32 1.1754944e-38, %v1937
    %v1939 = vsel %vm1936, %v1938, %v1934
    %v1940 = vmul.f32 1.0, %v1939
    %v1941 = vrcp.pop %v1925
    %v1942 = vmul.f32 %v1925, %v1941
    %v1943 = vsub.f32 1.0, %v1942
    %v1944 = vmul.f32 %v1941, %v1943
    %v1945 = vadd.f32 %v1941, %v1944
    %vm1946 = vweird.f32 %v1925
    %vm1947 = vweird.f32 %v1941
    %vm1948 = vmor %vm1946, %vm1947
    %v1949 = vsel %vm1948, %v1941, %v1945
    %v1950 = vand.u32 2147483647, %v1925
    %vm1951 = vcmp.eq.f32.partialorder %v1950, 8.507059e+37
    %v1952 = vand.u32 %v1925, 2147483648
    %v1953 = vor.u32 1.1754944e-38, %v1952
    %v1954 = vsel %vm1951, %v1953, %v1949
    %v1955 = vmul.f32 1.0, %v1954
    %v1956 = vtanh.pop %v1917
    %v1958 = vrot.slane %v1854, 6
    %v1960 = vmul.f32 %v1940, %v1958
    %v1961 = vmul.f32 %v1940, %v1956
    %1963 = vrot.lane.b32.xlu0 %v1961, 64
    %v1964 = vpop.permute.xlu0 %1963
    %v1966 = vadd.f32 %v1960, %v1964
    %v1967 = vtanh.pop %v1966
    %v1968 = vmul.f32 %v1955, %v1967
    %1970 = vrot.lane.b32.xlu0 %v1968, 64
    %v1971 = vpop.permute.xlu0 %1970
    %1973 = vst.msk [vmem:[#allocation2 + $0x18] sm:$0xc0] %vm612, %v1971
    %1974 = vst.msk [vmem:[#allocation2 - $0x6] sm:$0xc0] %vm614, %v1971
    %v1975 = vld [vmem:[#allocation2] sm:$0xff]
    %v1976 = vld [vmem:[#allocation2 + $0x8] sm:$0xff]
    %v1977 = vld [vmem:[#allocation2 + $0x10] sm:$0xff]
    %v1978 = vld [vmem:[#allocation2 + $0x18] sm:$0xff]
    %v1979 = vld [vmem:[#allocation6] sm:$0xff]
    %v1980 = vld [vmem:[#allocation6 + $0x8] sm:$0xff]
    %v1981 = vld [vmem:[#allocation6 + $0x10] sm:$0xff]
    %v1982 = vld [vmem:[#allocation6 + $0x18] sm:$0xff]
    %v1983 = vld [vmem:[#allocation6 + $0x20] sm:$0xff]
    %v1984 = vld [vmem:[#allocation6 + $0x28] sm:$0xff]
    %v1985 = vld [vmem:[#allocation6 + $0x30] sm:$0xff]
    %v1986 = vld [vmem:[#allocation6 + $0x38] sm:$0xff]
    %v1987 = vld [vmem:[#allocation6 + $0x40] sm:$0xff]
    %v1988 = vld [vmem:[#allocation6 + $0x48] sm:$0xff]
    %v1989 = vld [vmem:[#allocation6 + $0x50] sm:$0xff]
    %v1990 = vld [vmem:[#allocation6 + $0x58] sm:$0xff]
    %v1991 = vld [vmem:[#allocation6 + $0x60] sm:$0xff]
    %v1992 = vld [vmem:[#allocation6 + $0x68] sm:$0xff]
    %v1993 = vld [vmem:[#allocation6 + $0x70] sm:$0xff]
    %v1994 = vld [vmem:[#allocation6 + $0x78] sm:$0xff]
    %v1995 = vld [vmem:[#allocation6 + $0x80] sm:$0xff]
    %v1996 = vld [vmem:[#allocation6 + $0x88] sm:$0xff]
    %v1997 = vld [vmem:[#allocation6 + $0x90] sm:$0xff]
    %v1998 = vld [vmem:[#allocation6 + $0x98] sm:$0xff]
    %v1999 = vld [vmem:[#allocation6 + $0xa0] sm:$0xff]
    %v2000 = vld [vmem:[#allocation6 + $0xa8] sm:$0xff]
    %v2001 = vld [vmem:[#allocation6 + $0xb0] sm:$0xff]
    %v2002 = vld [vmem:[#allocation6 + $0xb8] sm:$0xff]
    %v2003 = vld [vmem:[#allocation6 + $0xc0] sm:$0xff]
    %v2004 = vld [vmem:[#allocation6 + $0xc8] sm:$0xff]
    %v2005 = vld [vmem:[#allocation6 + $0xd0] sm:$0xff]
    %v2006 = vld [vmem:[#allocation6 + $0xd8] sm:$0xff]
    %v2007 = vld [vmem:[#allocation6 + $0xe0] sm:$0xff]
    %v2008 = vld [vmem:[#allocation6 + $0xe8] sm:$0xff]
    %v2009 = vld [vmem:[#allocation6 + $0xf0] sm:$0xff]
    %v2010 = vld [vmem:[#allocation6 + $0xf8] sm:$0xff]
    %v2012 = vsel %vm162, %v1975, 0
    %v2015 = vsel %vm162, %v1976, 0
    %v2018 = vsel %vm162, %v1977, 0
    %v2021 = vsel %vm162, %v1978, 0
    %2023 = vmatpush.msra.mxu0 0.0
    %2024 = vmatpush.msra.mxu0 0.0
    %2025 = vmatpush.msra.mxu0 0.0
    %2026 = vmatpush.msra.mxu0 0.0
    %2027 = vmatpush.msra.mxu0 0.0
    %2028 = vmatpush.msra.mxu0 0.0
    %2029 = vmatpush.msra.mxu0 0.0
    %2030 = vmatpush.msra.mxu0 0.0
    %2031 = vmatpush.msra.mxu0 %v2007
    %2032 = vmatpush.msra.mxu0 %v2003
    %2033 = vmatpush.msra.mxu0 %v1999
    %2034 = vmatpush.msra.mxu0 %v1995
    %2035 = vmatpush.msra.mxu0 %v1991
    %2036 = vmatpush.msra.mxu0 %v1987
    %2037 = vmatpush.msra.mxu0 %v1983
    %2038 = vmatpush.msra.mxu0 %v1979
    %2039 = vmatmul.f32.gmra.mxu0 %v2012
    %v2040 = vpop.f32.mrf.mxu0
    %v2041 = vadd.f32 0.0, %v2040
    %2042 = vmatmul.f32.gmra.mxu0 %v2015
    %v2043 = vpop.f32.mrf.mxu0
    %v2044 = vadd.f32 0.0, %v2043
    %2045 = vmatmul.f32.gmra.mxu0 %v2018
    %v2046 = vpop.f32.mrf.mxu0
    %v2047 = vadd.f32 0.0, %v2046
    %2048 = vmatmul.f32.gmra.mxu0 %v2021
    %v2049 = vpop.f32.mrf.mxu0
    %v2050 = vadd.f32 0.0, %v2049
    %2051 = vdwg.mxu0
    %2052 = vmatpush.msra.mxu0 0.0
    %2053 = vmatpush.msra.mxu0 0.0
    %2054 = vmatpush.msra.mxu0 0.0
    %2055 = vmatpush.msra.mxu0 0.0
    %2056 = vmatpush.msra.mxu0 0.0
    %2057 = vmatpush.msra.mxu0 0.0
    %2058 = vmatpush.msra.mxu0 0.0
    %2059 = vmatpush.msra.mxu0 0.0
    %2060 = vmatpush.msra.mxu0 %v2008
    %2061 = vmatpush.msra.mxu0 %v2004
    %2062 = vmatpush.msra.mxu0 %v2000
    %2063 = vmatpush.msra.mxu0 %v1996
    %2064 = vmatpush.msra.mxu0 %v1992
    %2065 = vmatpush.msra.mxu0 %v1988
    %2066 = vmatpush.msra.mxu0 %v1984
    %2067 = vmatpush.msra.mxu0 %v1980
    %2068 = vmatmul.f32.gmra.mxu0 %v2012
    %v2069 = vpop.f32.mrf.mxu0
    %v2070 = vadd.f32 0.0, %v2069
    %2071 = vmatmul.f32.gmra.mxu0 %v2015
    %v2072 = vpop.f32.mrf.mxu0
    %v2073 = vadd.f32 0.0, %v2072
    %2074 = vmatmul.f32.gmra.mxu0 %v2018
    %v2075 = vpop.f32.mrf.mxu0
    %v2076 = vadd.f32 0.0, %v2075
    %2077 = vmatmul.f32.gmra.mxu0 %v2021
    %v2078 = vpop.f32.mrf.mxu0
    %v2079 = vadd.f32 0.0, %v2078
    %2080 = vdwg.mxu0
    %2081 = vmatpush.msra.mxu0 0.0
    %2082 = vmatpush.msra.mxu0 0.0
    %2083 = vmatpush.msra.mxu0 0.0
    %2084 = vmatpush.msra.mxu0 0.0
    %2085 = vmatpush.msra.mxu0 0.0
    %2086 = vmatpush.msra.mxu0 0.0
    %2087 = vmatpush.msra.mxu0 0.0
    %2088 = vmatpush.msra.mxu0 0.0
    %2089 = vmatpush.msra.mxu0 %v2009
    %2090 = vmatpush.msra.mxu0 %v2005
    %2091 = vmatpush.msra.mxu0 %v2001
    %2092 = vmatpush.msra.mxu0 %v1997
    %2093 = vmatpush.msra.mxu0 %v1993
    %2094 = vmatpush.msra.mxu0 %v1989
    %2095 = vmatpush.msra.mxu0 %v1985
    %2096 = vmatpush.msra.mxu0 %v1981
    %2097 = vmatmul.f32.gmra.mxu0 %v2012
    %v2098 = vpop.f32.mrf.mxu0
    %v2099 = vadd.f32 0.0, %v2098
    %2100 = vmatmul.f32.gmra.mxu0 %v2015
    %v2101 = vpop.f32.mrf.mxu0
    %v2102 = vadd.f32 0.0, %v2101
    %2103 = vmatmul.f32.gmra.mxu0 %v2018
    %v2104 = vpop.f32.mrf.mxu0
    %v2105 = vadd.f32 0.0, %v2104
    %2106 = vmatmul.f32.gmra.mxu0 %v2021
    %v2107 = vpop.f32.mrf.mxu0
    %v2108 = vadd.f32 0.0, %v2107
    %2109 = vdwg.mxu0
    %2110 = vmatpush.msra.mxu0 0.0
    %2111 = vmatpush.msra.mxu0 0.0
    %2112 = vmatpush.msra.mxu0 0.0
    %2113 = vmatpush.msra.mxu0 0.0
    %2114 = vmatpush.msra.mxu0 0.0
    %2115 = vmatpush.msra.mxu0 0.0
    %2116 = vmatpush.msra.mxu0 0.0
    %2117 = vmatpush.msra.mxu0 0.0
    %2118 = vmatpush.msra.mxu0 %v2010
    %2119 = vmatpush.msra.mxu0 %v2006
    %2120 = vmatpush.msra.mxu0 %v2002
    %2121 = vmatpush.msra.mxu0 %v1998
    %2122 = vmatpush.msra.mxu0 %v1994
    %2123 = vmatpush.msra.mxu0 %v1990
    %2124 = vmatpush.msra.mxu0 %v1986
    %2125 = vmatpush.msra.mxu0 %v1982
    %2126 = vmatmul.f32.gmra.mxu0 %v2012
    %v2127 = vpop.f32.mrf.mxu0
    %v2128 = vadd.f32 0.0, %v2127
    %2129 = vmatmul.f32.gmra.mxu0 %v2015
    %v2130 = vpop.f32.mrf.mxu0
    %v2131 = vadd.f32 0.0, %v2130
    %2132 = vmatmul.f32.gmra.mxu0 %v2018
    %v2133 = vpop.f32.mrf.mxu0
    %v2134 = vadd.f32 0.0, %v2133
    %2135 = vmatmul.f32.gmra.mxu0 %v2021
    %v2136 = vpop.f32.mrf.mxu0
    %v2137 = vadd.f32 0.0, %v2136
    %2138 = vdwg.mxu0
    %v2139 = vld [vmem:[#allocation8] sm:$0xff]
    %v2140 = vld [vmem:[#allocation8 + $0x8] sm:$0xff]
    %v2141 = vld [vmem:[#allocation8 + $0x10] sm:$0xff]
    %v2142 = vld [vmem:[#allocation8 + $0x18] sm:$0xff]
    %v2143 = vld [vmem:[#allocation8 + $0x20] sm:$0xff]
    %v2144 = vld [vmem:[#allocation8 + $0x28] sm:$0xff]
    %v2145 = vld [vmem:[#allocation8 + $0x30] sm:$0xff]
    %v2146 = vld [vmem:[#allocation8 + $0x38] sm:$0xff]
    %v2147 = vld [vmem:[#allocation8 + $0x40] sm:$0xff]
    %v2148 = vld [vmem:[#allocation8 + $0x48] sm:$0xff]
    %v2149 = vld [vmem:[#allocation8 + $0x50] sm:$0xff]
    %v2150 = vld [vmem:[#allocation8 + $0x58] sm:$0xff]
    %v2151 = vld [vmem:[#allocation8 + $0x60] sm:$0xff]
    %v2152 = vld [vmem:[#allocation8 + $0x68] sm:$0xff]
    %v2153 = vld [vmem:[#allocation8 + $0x70] sm:$0xff]
    %v2154 = vld [vmem:[#allocation8 + $0x78] sm:$0xff]
    %v2155 = vld [vmem:[%s6] sm:$0x3]
    %v2158 = vrot.slane %v2108, 6
    %v2159 = vrot.slane %v2137, 6
    %v2162 = vadd.f32 %v2041, %v2158
    %v2163 = vadd.f32 %v2070, %v2159
    %2164 = vmatpush.msra.mxu0 0.0
    %2165 = vmatpush.msra.mxu0 0.0
    %2166 = vmatpush.msra.mxu0 0.0
    %2167 = vmatpush.msra.mxu0 0.0
    %2168 = vmatpush.msra.mxu0 0.0
    %2169 = vmatpush.msra.mxu0 0.0
    %2170 = vmatpush.msra.mxu0 0.0
    %2171 = vmatpush.msra.mxu0 0.0
    %2172 = vmatpush.msra.mxu0 %v2153
    %2173 = vmatpush.msra.mxu0 %v2151
    %2174 = vmatpush.msra.mxu0 %v2149
    %2175 = vmatpush.msra.mxu0 %v2147
    %2176 = vmatpush.msra.mxu0 %v2145
    %2177 = vmatpush.msra.mxu0 %v2143
    %2178 = vmatpush.msra.mxu0 %v2141
    %2179 = vmatpush.msra.mxu0 %v2139
    %2180 = vmatmul.f32.gmra.mxu0 %v164
    %v2181 = vpop.f32.mrf.mxu0
    %v2182 = vadd.f32 0.0, %v2181
    %2183 = vdwg.mxu0
    %2184 = vmatpush.msra.mxu0 0.0
    %2185 = vmatpush.msra.mxu0 0.0
    %2186 = vmatpush.msra.mxu0 0.0
    %2187 = vmatpush.msra.mxu0 0.0
    %2188 = vmatpush.msra.mxu0 0.0
    %2189 = vmatpush.msra.mxu0 0.0
    %2190 = vmatpush.msra.mxu0 0.0
    %2191 = vmatpush.msra.mxu0 0.0
    %2192 = vmatpush.msra.mxu0 %v2154
    %2193 = vmatpush.msra.mxu0 %v2152
    %2194 = vmatpush.msra.mxu0 %v2150
    %2195 = vmatpush.msra.mxu0 %v2148
    %2196 = vmatpush.msra.mxu0 %v2146
    %2197 = vmatpush.msra.mxu0 %v2144
    %2198 = vmatpush.msra.mxu0 %v2142
    %2199 = vmatpush.msra.mxu0 %v2140
    %2200 = vmatmul.f32.gmra.mxu0 %v164
    %v2201 = vpop.f32.mrf.mxu0
    %v2202 = vadd.f32 0.0, %v2201
    %2203 = vdwg.mxu0
    %v2204 = vadd.f32 %v2162, %v2182
    %v2205 = vadd.f32 %v2163, %v2202
    %v2207 = vperm.slane %v2155, 0
    %v2208 = vperm.slane %v2155, 1
    %v2211 = vadd.f32 %v2204, %v2207
    %v2212 = vadd.f32 %v2205, %v2208
    %v2213 = vxor.u32 %v2211, 2147483648
    %v2214 = vxor.u32 %v2212, 2147483648
    %v2215 = vmul.f32 %v2213, 1.442695
    %v2216 = vpow.pop %v2215
    %v2217 = vmul.f32 %v2214, 1.442695
    %v2218 = vpow.pop %v2217
    %v2219 = vadd.f32 %v2216, 1.0
    %v2220 = vadd.f32 %v2218, 1.0
    %v2221 = vrcp.pop %v2219
    %v2222 = vmul.f32 %v2219, %v2221
    %v2223 = vsub.f32 1.0, %v2222
    %v2224 = vmul.f32 %v2221, %v2223
    %v2225 = vadd.f32 %v2221, %v2224
    %vm2226 = vweird.f32 %v2219
    %vm2227 = vweird.f32 %v2221
    %vm2228 = vmor %vm2226, %vm2227
    %v2229 = vsel %vm2228, %v2221, %v2225
    %v2230 = vand.u32 2147483647, %v2219
    %vm2231 = vcmp.eq.f32.partialorder %v2230, 8.507059e+37
    %v2232 = vand.u32 %v2219, 2147483648
    %v2233 = vor.u32 1.1754944e-38, %v2232
    %v2234 = vsel %vm2231, %v2233, %v2229
    %v2235 = vmul.f32 1.0, %v2234
    %v2236 = vrcp.pop %v2220
    %v2237 = vmul.f32 %v2220, %v2236
    %v2238 = vsub.f32 1.0, %v2237
    %v2239 = vmul.f32 %v2236, %v2238
    %v2240 = vadd.f32 %v2236, %v2239
    %vm2241 = vweird.f32 %v2220
    %vm2242 = vweird.f32 %v2236
    %vm2243 = vmor %vm2241, %vm2242
    %v2244 = vsel %vm2243, %v2236, %v2240
    %v2245 = vand.u32 2147483647, %v2220
    %vm2246 = vcmp.eq.f32.partialorder %v2245, 8.507059e+37
    %v2247 = vand.u32 %v2220, 2147483648
    %v2248 = vor.u32 1.1754944e-38, %v2247
    %v2249 = vsel %vm2246, %v2248, %v2244
    %v2250 = vmul.f32 1.0, %v2249
    %v2251 = vtanh.pop %v2212
    %v2252 = vmul.f32 %v2235, 0.0
    %v2253 = vmul.f32 %v2235, %v2251
    %2255 = vrot.lane.b32.xlu0 %v2253, 64
    %v2256 = vpop.permute.xlu0 %2255
    %v2258 = vadd.f32 %v2252, %v2256
    %v2259 = vtanh.pop %v2258
    %v2260 = vmul.f32 %v2250, %v2259
    %v2261 = vrot.slane %v2108, 2
    %v2262 = vrot.slane %v2137, 2
    %v2265 = vadd.f32 %v2041, %v2261
    %v2266 = vadd.f32 %v2070, %v2262
    %2268 = vrot.lane.b32.xlu0 %v2260, 64
    %v2269 = vpop.permute.xlu0 %2268
    %v2270 = vsel %vm162, %v2269, 0
    %2272 = vmatpush.msra.mxu0 0.0
    %2273 = vmatpush.msra.mxu0 0.0
    %2274 = vmatpush.msra.mxu0 0.0
    %2275 = vmatpush.msra.mxu0 0.0
    %2276 = vmatpush.msra.mxu0 0.0
    %2277 = vmatpush.msra.mxu0 0.0
    %2278 = vmatpush.msra.mxu0 0.0
    %2279 = vmatpush.msra.mxu0 0.0
    %2280 = vmatpush.msra.mxu0 %v2153
    %2281 = vmatpush.msra.mxu0 %v2151
    %2282 = vmatpush.msra.mxu0 %v2149
    %2283 = vmatpush.msra.mxu0 %v2147
    %2284 = vmatpush.msra.mxu0 %v2145
    %2285 = vmatpush.msra.mxu0 %v2143
    %2286 = vmatpush.msra.mxu0 %v2141
    %2287 = vmatpush.msra.mxu0 %v2139
    %2288 = vmatmul.f32.gmra.mxu0 %v2270
    %v2289 = vpop.f32.mrf.mxu0
    %v2290 = vadd.f32 0.0, %v2289
    %2291 = vdwg.mxu0
    %2292 = vmatpush.msra.mxu0 0.0
    %2293 = vmatpush.msra.mxu0 0.0
    %2294 = vmatpush.msra.mxu0 0.0
    %2295 = vmatpush.msra.mxu0 0.0
    %2296 = vmatpush.msra.mxu0 0.0
    %2297 = vmatpush.msra.mxu0 0.0
    %2298 = vmatpush.msra.mxu0 0.0
    %2299 = vmatpush.msra.mxu0 0.0
    %2300 = vmatpush.msra.mxu0 %v2154
    %2301 = vmatpush.msra.mxu0 %v2152
    %2302 = vmatpush.msra.mxu0 %v2150
    %2303 = vmatpush.msra.mxu0 %v2148
    %2304 = vmatpush.msra.mxu0 %v2146
    %2305 = vmatpush.msra.mxu0 %v2144
    %2306 = vmatpush.msra.mxu0 %v2142
    %2307 = vmatpush.msra.mxu0 %v2140
    %2308 = vmatmul.f32.gmra.mxu0 %v2270
    %v2309 = vpop.f32.mrf.mxu0
    %v2310 = vadd.f32 0.0, %v2309
    %2311 = vdwg.mxu0
    %v2314 = vrot.slane %v2290, 6
    %v2315 = vrot.slane %v2310, 6
    %v2318 = vadd.f32 %v2265, %v2314
    %v2319 = vadd.f32 %v2266, %v2315
    %v2320 = vadd.f32 %v2318, %v2207
    %v2321 = vadd.f32 %v2319, %v2208
    %v2322 = vxor.u32 %v2320, 2147483648
    %v2323 = vxor.u32 %v2321, 2147483648
    %v2324 = vmul.f32 %v2322, 1.442695
    %v2325 = vpow.pop %v2324
    %v2326 = vmul.f32 %v2323, 1.442695
    %v2327 = vpow.pop %v2326
    %v2328 = vadd.f32 %v2325, 1.0
    %v2329 = vadd.f32 %v2327, 1.0
    %v2330 = vrcp.pop %v2328
    %v2331 = vmul.f32 %v2328, %v2330
    %v2332 = vsub.f32 1.0, %v2331
    %v2333 = vmul.f32 %v2330, %v2332
    %v2334 = vadd.f32 %v2330, %v2333
    %vm2335 = vweird.f32 %v2328
    %vm2336 = vweird.f32 %v2330
    %vm2337 = vmor %vm2335, %vm2336
    %v2338 = vsel %vm2337, %v2330, %v2334
    %v2339 = vand.u32 2147483647, %v2328
    %vm2340 = vcmp.eq.f32.partialorder %v2339, 8.507059e+37
    %v2341 = vand.u32 %v2328, 2147483648
    %v2342 = vor.u32 1.1754944e-38, %v2341
    %v2343 = vsel %vm2340, %v2342, %v2338
    %v2344 = vmul.f32 1.0, %v2343
    %v2345 = vrcp.pop %v2329
    %v2346 = vmul.f32 %v2329, %v2345
    %v2347 = vsub.f32 1.0, %v2346
    %v2348 = vmul.f32 %v2345, %v2347
    %v2349 = vadd.f32 %v2345, %v2348
    %vm2350 = vweird.f32 %v2329
    %vm2351 = vweird.f32 %v2345
    %vm2352 = vmor %vm2350, %vm2351
    %v2353 = vsel %vm2352, %v2345, %v2349
    %v2354 = vand.u32 2147483647, %v2329
    %vm2355 = vcmp.eq.f32.partialorder %v2354, 8.507059e+37
    %v2356 = vand.u32 %v2329, 2147483648
    %v2357 = vor.u32 1.1754944e-38, %v2356
    %v2358 = vsel %vm2355, %v2357, %v2353
    %v2359 = vmul.f32 1.0, %v2358
    %v2360 = vtanh.pop %v2321
    %v2362 = vrot.slane %v2258, 6
    %v2364 = vmul.f32 %v2344, %v2362
    %v2365 = vmul.f32 %v2344, %v2360
    %2367 = vrot.lane.b32.xlu0 %v2365, 64
    %v2368 = vpop.permute.xlu0 %2367
    %v2370 = vadd.f32 %v2364, %v2368
    %v2371 = vtanh.pop %v2370
    %v2372 = vmul.f32 %v2359, %v2371
    %v2374 = vrot.slane %v2372, 2
    %2375 = vrot.lane.b32.xlu0 %v2374, 64
    %v2376 = vpop.permute.xlu0 %2375
    %v2377 = vsel %vm162, %v2376, 0
    %2379 = vmatpush.msra.mxu0 0.0
    %2380 = vmatpush.msra.mxu0 0.0
    %2381 = vmatpush.msra.mxu0 0.0
    %2382 = vmatpush.msra.mxu0 0.0
    %2383 = vmatpush.msra.mxu0 0.0
    %2384 = vmatpush.msra.mxu0 0.0
    %2385 = vmatpush.msra.mxu0 0.0
    %2386 = vmatpush.msra.mxu0 0.0
    %2387 = vmatpush.msra.mxu0 %v2153
    %2388 = vmatpush.msra.mxu0 %v2151
    %2389 = vmatpush.msra.mxu0 %v2149
    %2390 = vmatpush.msra.mxu0 %v2147
    %2391 = vmatpush.msra.mxu0 %v2145
    %2392 = vmatpush.msra.mxu0 %v2143
    %2393 = vmatpush.msra.mxu0 %v2141
    %2394 = vmatpush.msra.mxu0 %v2139
    %2395 = vmatmul.f32.gmra.mxu0 %v2377
    %v2396 = vpop.f32.mrf.mxu0
    %v2397 = vadd.f32 0.0, %v2396
    %2398 = vdwg.mxu0
    %2399 = vmatpush.msra.mxu0 0.0
    %2400 = vmatpush.msra.mxu0 0.0
    %2401 = vmatpush.msra.mxu0 0.0
    %2402 = vmatpush.msra.mxu0 0.0
    %2403 = vmatpush.msra.mxu0 0.0
    %2404 = vmatpush.msra.mxu0 0.0
    %2405 = vmatpush.msra.mxu0 0.0
    %2406 = vmatpush.msra.mxu0 0.0
    %2407 = vmatpush.msra.mxu0 %v2154
    %2408 = vmatpush.msra.mxu0 %v2152
    %2409 = vmatpush.msra.mxu0 %v2150
    %2410 = vmatpush.msra.mxu0 %v2148
    %2411 = vmatpush.msra.mxu0 %v2146
    %2412 = vmatpush.msra.mxu0 %v2144
    %2413 = vmatpush.msra.mxu0 %v2142
    %2414 = vmatpush.msra.mxu0 %v2140
    %2415 = vmatmul.f32.gmra.mxu0 %v2377
    %v2416 = vpop.f32.mrf.mxu0
    %v2417 = vadd.f32 0.0, %v2416
    %2418 = vdwg.mxu0
    %v2421 = vrot.slane %v2397, 4
    %v2422 = vrot.slane %v2417, 4
    %v2425 = vadd.f32 %v2162, %v2421
    %v2426 = vadd.f32 %v2163, %v2422
    %v2427 = vadd.f32 %v2425, %v2207
    %v2428 = vadd.f32 %v2426, %v2208
    %v2429 = vxor.u32 %v2427, 2147483648
    %v2430 = vxor.u32 %v2428, 2147483648
    %v2431 = vmul.f32 %v2429, 1.442695
    %v2432 = vpow.pop %v2431
    %v2433 = vmul.f32 %v2430, 1.442695
    %v2434 = vpow.pop %v2433
    %v2435 = vadd.f32 %v2432, 1.0
    %v2436 = vadd.f32 %v2434, 1.0
    %v2437 = vrcp.pop %v2435
    %v2438 = vmul.f32 %v2435, %v2437
    %v2439 = vsub.f32 1.0, %v2438
    %v2440 = vmul.f32 %v2437, %v2439
    %v2441 = vadd.f32 %v2437, %v2440
    %vm2442 = vweird.f32 %v2435
    %vm2443 = vweird.f32 %v2437
    %vm2444 = vmor %vm2442, %vm2443
    %v2445 = vsel %vm2444, %v2437, %v2441
    %v2446 = vand.u32 2147483647, %v2435
    %vm2447 = vcmp.eq.f32.partialorder %v2446, 8.507059e+37
    %v2448 = vand.u32 %v2435, 2147483648
    %v2449 = vor.u32 1.1754944e-38, %v2448
    %v2450 = vsel %vm2447, %v2449, %v2445
    %v2451 = vmul.f32 1.0, %v2450
    %v2452 = vrcp.pop %v2436
    %v2453 = vmul.f32 %v2436, %v2452
    %v2454 = vsub.f32 1.0, %v2453
    %v2455 = vmul.f32 %v2452, %v2454
    %v2456 = vadd.f32 %v2452, %v2455
    %vm2457 = vweird.f32 %v2436
    %vm2458 = vweird.f32 %v2452
    %vm2459 = vmor %vm2457, %vm2458
    %v2460 = vsel %vm2459, %v2452, %v2456
    %v2461 = vand.u32 2147483647, %v2436
    %vm2462 = vcmp.eq.f32.partialorder %v2461, 8.507059e+37
    %v2463 = vand.u32 %v2436, 2147483648
    %v2464 = vor.u32 1.1754944e-38, %v2463
    %v2465 = vsel %vm2462, %v2464, %v2460
    %v2466 = vmul.f32 1.0, %v2465
    %v2467 = vtanh.pop %v2428
    %v2469 = vrot.slane %v2370, 6
    %v2471 = vmul.f32 %v2451, %v2469
    %v2472 = vmul.f32 %v2451, %v2467
    %2474 = vrot.lane.b32.xlu0 %v2472, 64
    %v2475 = vpop.permute.xlu0 %2474
    %v2477 = vadd.f32 %v2471, %v2475
    %v2478 = vtanh.pop %v2477
    %v2479 = vmul.f32 %v2466, %v2478
    %v2481 = vrot.slane %v2479, 4
    %2482 = vrot.lane.b32.xlu0 %v2481, 64
    %v2483 = vpop.permute.xlu0 %2482
    %v2484 = vsel %vm162, %v2483, 0
    %2486 = vmatpush.msra.mxu0 0.0
    %2487 = vmatpush.msra.mxu0 0.0
    %2488 = vmatpush.msra.mxu0 0.0
    %2489 = vmatpush.msra.mxu0 0.0
    %2490 = vmatpush.msra.mxu0 0.0
    %2491 = vmatpush.msra.mxu0 0.0
    %2492 = vmatpush.msra.mxu0 0.0
    %2493 = vmatpush.msra.mxu0 0.0
    %2494 = vmatpush.msra.mxu0 %v2153
    %2495 = vmatpush.msra.mxu0 %v2151
    %2496 = vmatpush.msra.mxu0 %v2149
    %2497 = vmatpush.msra.mxu0 %v2147
    %2498 = vmatpush.msra.mxu0 %v2145
    %2499 = vmatpush.msra.mxu0 %v2143
    %2500 = vmatpush.msra.mxu0 %v2141
    %2501 = vmatpush.msra.mxu0 %v2139
    %2502 = vmatmul.f32.gmra.mxu0 %v2484
    %v2503 = vpop.f32.mrf.mxu0
    %v2504 = vadd.f32 0.0, %v2503
    %2505 = vdwg.mxu0
    %2506 = vmatpush.msra.mxu0 0.0
    %2507 = vmatpush.msra.mxu0 0.0
    %2508 = vmatpush.msra.mxu0 0.0
    %2509 = vmatpush.msra.mxu0 0.0
    %2510 = vmatpush.msra.mxu0 0.0
    %2511 = vmatpush.msra.mxu0 0.0
    %2512 = vmatpush.msra.mxu0 0.0
    %2513 = vmatpush.msra.mxu0 0.0
    %2514 = vmatpush.msra.mxu0 %v2154
    %2515 = vmatpush.msra.mxu0 %v2152
    %2516 = vmatpush.msra.mxu0 %v2150
    %2517 = vmatpush.msra.mxu0 %v2148
    %2518 = vmatpush.msra.mxu0 %v2146
    %2519 = vmatpush.msra.mxu0 %v2144
    %2520 = vmatpush.msra.mxu0 %v2142
    %2521 = vmatpush.msra.mxu0 %v2140
    %2522 = vmatmul.f32.gmra.mxu0 %v2484
    %v2523 = vpop.f32.mrf.mxu0
    %v2524 = vadd.f32 0.0, %v2523
    %2525 = vdwg.mxu0
    %v2528 = vrot.slane %v2504, 2
    %v2529 = vrot.slane %v2524, 2
    %v2532 = vadd.f32 %v2265, %v2528
    %v2533 = vadd.f32 %v2266, %v2529
    %v2534 = vadd.f32 %v2532, %v2207
    %v2535 = vadd.f32 %v2533, %v2208
    %v2536 = vxor.u32 %v2534, 2147483648
    %v2537 = vxor.u32 %v2535, 2147483648
    %v2538 = vmul.f32 %v2536, 1.442695
    %v2539 = vpow.pop %v2538
    %v2540 = vmul.f32 %v2537, 1.442695
    %v2541 = vpow.pop %v2540
    %v2542 = vadd.f32 %v2539, 1.0
    %v2543 = vadd.f32 %v2541, 1.0
    %v2544 = vrcp.pop %v2542
    %v2545 = vmul.f32 %v2542, %v2544
    %v2546 = vsub.f32 1.0, %v2545
    %v2547 = vmul.f32 %v2544, %v2546
    %v2548 = vadd.f32 %v2544, %v2547
    %vm2549 = vweird.f32 %v2542
    %vm2550 = vweird.f32 %v2544
    %vm2551 = vmor %vm2549, %vm2550
    %v2552 = vsel %vm2551, %v2544, %v2548
    %v2553 = vand.u32 2147483647, %v2542
    %vm2554 = vcmp.eq.f32.partialorder %v2553, 8.507059e+37
    %v2555 = vand.u32 %v2542, 2147483648
    %v2556 = vor.u32 1.1754944e-38, %v2555
    %v2557 = vsel %vm2554, %v2556, %v2552
    %v2558 = vmul.f32 1.0, %v2557
    %v2559 = vrcp.pop %v2543
    %v2560 = vmul.f32 %v2543, %v2559
    %v2561 = vsub.f32 1.0, %v2560
    %v2562 = vmul.f32 %v2559, %v2561
    %v2563 = vadd.f32 %v2559, %v2562
    %vm2564 = vweird.f32 %v2543
    %vm2565 = vweird.f32 %v2559
    %vm2566 = vmor %vm2564, %vm2565
    %v2567 = vsel %vm2566, %v2559, %v2563
    %v2568 = vand.u32 2147483647, %v2543
    %vm2569 = vcmp.eq.f32.partialorder %v2568, 8.507059e+37
    %v2570 = vand.u32 %v2543, 2147483648
    %v2571 = vor.u32 1.1754944e-38, %v2570
    %v2572 = vsel %vm2569, %v2571, %v2567
    %v2573 = vmul.f32 1.0, %v2572
    %v2574 = vtanh.pop %v2535
    %v2576 = vrot.slane %v2477, 6
    %v2578 = vmul.f32 %v2558, %v2576
    %v2579 = vmul.f32 %v2558, %v2574
    %2581 = vrot.lane.b32.xlu0 %v2579, 64
    %v2582 = vpop.permute.xlu0 %2581
    %v2584 = vadd.f32 %v2578, %v2582
    %v2585 = vtanh.pop %v2584
    %v2586 = vmul.f32 %v2573, %v2585
    %v2589 = vrot.slane %v2105, 6
    %v2590 = vrot.slane %v2134, 6
    %v2593 = vadd.f32 %v2044, %v2589
    %v2594 = vadd.f32 %v2073, %v2590
    %v2596 = vrot.slane %v2586, 6
    %2597 = vrot.lane.b32.xlu0 %v2596, 64
    %v2598 = vpop.permute.xlu0 %2597
    %v2599 = vsel %vm162, %v2598, 0
    %2601 = vmatpush.msra.mxu0 0.0
    %2602 = vmatpush.msra.mxu0 0.0
    %2603 = vmatpush.msra.mxu0 0.0
    %2604 = vmatpush.msra.mxu0 0.0
    %2605 = vmatpush.msra.mxu0 0.0
    %2606 = vmatpush.msra.mxu0 0.0
    %2607 = vmatpush.msra.mxu0 0.0
    %2608 = vmatpush.msra.mxu0 0.0
    %2609 = vmatpush.msra.mxu0 %v2153
    %2610 = vmatpush.msra.mxu0 %v2151
    %2611 = vmatpush.msra.mxu0 %v2149
    %2612 = vmatpush.msra.mxu0 %v2147
    %2613 = vmatpush.msra.mxu0 %v2145
    %2614 = vmatpush.msra.mxu0 %v2143
    %2615 = vmatpush.msra.mxu0 %v2141
    %2616 = vmatpush.msra.mxu0 %v2139
    %2617 = vmatmul.f32.gmra.mxu0 %v2599
    %v2618 = vpop.f32.mrf.mxu0
    %v2619 = vadd.f32 0.0, %v2618
    %2620 = vdwg.mxu0
    %2621 = vmatpush.msra.mxu0 0.0
    %2622 = vmatpush.msra.mxu0 0.0
    %2623 = vmatpush.msra.mxu0 0.0
    %2624 = vmatpush.msra.mxu0 0.0
    %2625 = vmatpush.msra.mxu0 0.0
    %2626 = vmatpush.msra.mxu0 0.0
    %2627 = vmatpush.msra.mxu0 0.0
    %2628 = vmatpush.msra.mxu0 0.0
    %2629 = vmatpush.msra.mxu0 %v2154
    %2630 = vmatpush.msra.mxu0 %v2152
    %2631 = vmatpush.msra.mxu0 %v2150
    %2632 = vmatpush.msra.mxu0 %v2148
    %2633 = vmatpush.msra.mxu0 %v2146
    %2634 = vmatpush.msra.mxu0 %v2144
    %2635 = vmatpush.msra.mxu0 %v2142
    %2636 = vmatpush.msra.mxu0 %v2140
    %2637 = vmatmul.f32.gmra.mxu0 %v2599
    %v2638 = vpop.f32.mrf.mxu0
    %v2639 = vadd.f32 0.0, %v2638
    %2640 = vdwg.mxu0
    %v2641 = vadd.f32 %v2593, %v2619
    %v2642 = vadd.f32 %v2594, %v2639
    %v2643 = vadd.f32 %v2641, %v2207
    %v2644 = vadd.f32 %v2642, %v2208
    %v2645 = vxor.u32 %v2643, 2147483648
    %v2646 = vxor.u32 %v2644, 2147483648
    %v2647 = vmul.f32 %v2645, 1.442695
    %v2648 = vpow.pop %v2647
    %v2649 = vmul.f32 %v2646, 1.442695
    %v2650 = vpow.pop %v2649
    %v2651 = vadd.f32 %v2648, 1.0
    %v2652 = vadd.f32 %v2650, 1.0
    %v2653 = vrcp.pop %v2651
    %v2654 = vmul.f32 %v2651, %v2653
    %v2655 = vsub.f32 1.0, %v2654
    %v2656 = vmul.f32 %v2653, %v2655
    %v2657 = vadd.f32 %v2653, %v2656
    %vm2658 = vweird.f32 %v2651
    %vm2659 = vweird.f32 %v2653
    %vm2660 = vmor %vm2658, %vm2659
    %v2661 = vsel %vm2660, %v2653, %v2657
    %v2662 = vand.u32 2147483647, %v2651
    %vm2663 = vcmp.eq.f32.partialorder %v2662, 8.507059e+37
    %v2664 = vand.u32 %v2651, 2147483648
    %v2665 = vor.u32 1.1754944e-38, %v2664
    %v2666 = vsel %vm2663, %v2665, %v2661
    %v2667 = vmul.f32 1.0, %v2666
    %v2668 = vrcp.pop %v2652
    %v2669 = vmul.f32 %v2652, %v2668
    %v2670 = vsub.f32 1.0, %v2669
    %v2671 = vmul.f32 %v2668, %v2670
    %v2672 = vadd.f32 %v2668, %v2671
    %vm2673 = vweird.f32 %v2652
    %vm2674 = vweird.f32 %v2668
    %vm2675 = vmor %vm2673, %vm2674
    %v2676 = vsel %vm2675, %v2668, %v2672
    %v2677 = vand.u32 2147483647, %v2652
    %vm2678 = vcmp.eq.f32.partialorder %v2677, 8.507059e+37
    %v2679 = vand.u32 %v2652, 2147483648
    %v2680 = vor.u32 1.1754944e-38, %v2679
    %v2681 = vsel %vm2678, %v2680, %v2676
    %v2682 = vmul.f32 1.0, %v2681
    %v2683 = vtanh.pop %v2644
    %v2685 = vrot.slane %v2584, 6
    %v2687 = vmul.f32 %v2667, %v2685
    %v2688 = vmul.f32 %v2667, %v2683
    %2690 = vrot.lane.b32.xlu0 %v2688, 64
    %v2691 = vpop.permute.xlu0 %2690
    %v2693 = vadd.f32 %v2687, %v2691
    %v2694 = vtanh.pop %v2693
    %v2695 = vmul.f32 %v2682, %v2694
    %v2696 = vrot.slane %v2105, 2
    %v2697 = vrot.slane %v2134, 2
    %v2700 = vadd.f32 %v2044, %v2696
    %v2701 = vadd.f32 %v2073, %v2697
    %2703 = vrot.lane.b32.xlu0 %v2695, 64
    %v2704 = vpop.permute.xlu0 %2703
    %v2705 = vsel %vm162, %v2704, 0
    %2707 = vmatpush.msra.mxu0 0.0
    %2708 = vmatpush.msra.mxu0 0.0
    %2709 = vmatpush.msra.mxu0 0.0
    %2710 = vmatpush.msra.mxu0 0.0
    %2711 = vmatpush.msra.mxu0 0.0
    %2712 = vmatpush.msra.mxu0 0.0
    %2713 = vmatpush.msra.mxu0 0.0
    %2714 = vmatpush.msra.mxu0 0.0
    %2715 = vmatpush.msra.mxu0 %v2153
    %2716 = vmatpush.msra.mxu0 %v2151
    %2717 = vmatpush.msra.mxu0 %v2149
    %2718 = vmatpush.msra.mxu0 %v2147
    %2719 = vmatpush.msra.mxu0 %v2145
    %2720 = vmatpush.msra.mxu0 %v2143
    %2721 = vmatpush.msra.mxu0 %v2141
    %2722 = vmatpush.msra.mxu0 %v2139
    %2723 = vmatmul.f32.gmra.mxu0 %v2705
    %v2724 = vpop.f32.mrf.mxu0
    %v2725 = vadd.f32 0.0, %v2724
    %2726 = vdwg.mxu0
    %2727 = vmatpush.msra.mxu0 0.0
    %2728 = vmatpush.msra.mxu0 0.0
    %2729 = vmatpush.msra.mxu0 0.0
    %2730 = vmatpush.msra.mxu0 0.0
    %2731 = vmatpush.msra.mxu0 0.0
    %2732 = vmatpush.msra.mxu0 0.0
    %2733 = vmatpush.msra.mxu0 0.0
    %2734 = vmatpush.msra.mxu0 0.0
    %2735 = vmatpush.msra.mxu0 %v2154
    %2736 = vmatpush.msra.mxu0 %v2152
    %2737 = vmatpush.msra.mxu0 %v2150
    %2738 = vmatpush.msra.mxu0 %v2148
    %2739 = vmatpush.msra.mxu0 %v2146
    %2740 = vmatpush.msra.mxu0 %v2144
    %2741 = vmatpush.msra.mxu0 %v2142
    %2742 = vmatpush.msra.mxu0 %v2140
    %2743 = vmatmul.f32.gmra.mxu0 %v2705
    %v2744 = vpop.f32.mrf.mxu0
    %v2745 = vadd.f32 0.0, %v2744
    %2746 = vdwg.mxu0
    %v2749 = vrot.slane %v2725, 6
    %v2750 = vrot.slane %v2745, 6
    %v2753 = vadd.f32 %v2700, %v2749
    %v2754 = vadd.f32 %v2701, %v2750
    %v2755 = vadd.f32 %v2753, %v2207
    %v2756 = vadd.f32 %v2754, %v2208
    %v2757 = vxor.u32 %v2755, 2147483648
    %v2758 = vxor.u32 %v2756, 2147483648
    %v2759 = vmul.f32 %v2757, 1.442695
    %v2760 = vpow.pop %v2759
    %v2761 = vmul.f32 %v2758, 1.442695
    %v2762 = vpow.pop %v2761
    %v2763 = vadd.f32 %v2760, 1.0
    %v2764 = vadd.f32 %v2762, 1.0
    %v2765 = vrcp.pop %v2763
    %v2766 = vmul.f32 %v2763, %v2765
    %v2767 = vsub.f32 1.0, %v2766
    %v2768 = vmul.f32 %v2765, %v2767
    %v2769 = vadd.f32 %v2765, %v2768
    %vm2770 = vweird.f32 %v2763
    %vm2771 = vweird.f32 %v2765
    %vm2772 = vmor %vm2770, %vm2771
    %v2773 = vsel %vm2772, %v2765, %v2769
    %v2774 = vand.u32 2147483647, %v2763
    %vm2775 = vcmp.eq.f32.partialorder %v2774, 8.507059e+37
    %v2776 = vand.u32 %v2763, 2147483648
    %v2777 = vor.u32 1.1754944e-38, %v2776
    %v2778 = vsel %vm2775, %v2777, %v2773
    %v2779 = vmul.f32 1.0, %v2778
    %v2780 = vrcp.pop %v2764
    %v2781 = vmul.f32 %v2764, %v2780
    %v2782 = vsub.f32 1.0, %v2781
    %v2783 = vmul.f32 %v2780, %v2782
    %v2784 = vadd.f32 %v2780, %v2783
    %vm2785 = vweird.f32 %v2764
    %vm2786 = vweird.f32 %v2780
    %vm2787 = vmor %vm2785, %vm2786
    %v2788 = vsel %vm2787, %v2780, %v2784
    %v2789 = vand.u32 2147483647, %v2764
    %vm2790 = vcmp.eq.f32.partialorder %v2789, 8.507059e+37
    %v2791 = vand.u32 %v2764, 2147483648
    %v2792 = vor.u32 1.1754944e-38, %v2791
    %v2793 = vsel %vm2790, %v2792, %v2788
    %v2794 = vmul.f32 1.0, %v2793
    %v2795 = vtanh.pop %v2756
    %v2797 = vrot.slane %v2693, 6
    %v2799 = vmul.f32 %v2779, %v2797
    %v2800 = vmul.f32 %v2779, %v2795
    %2802 = vrot.lane.b32.xlu0 %v2800, 64
    %v2803 = vpop.permute.xlu0 %2802
    %v2805 = vadd.f32 %v2799, %v2803
    %v2806 = vtanh.pop %v2805
    %v2807 = vmul.f32 %v2794, %v2806
    %v2809 = vrot.slane %v2807, 2
    %2810 = vrot.lane.b32.xlu0 %v2809, 64
    %v2811 = vpop.permute.xlu0 %2810
    %v2812 = vsel %vm162, %v2811, 0
    %2814 = vmatpush.msra.mxu0 0.0
    %2815 = vmatpush.msra.mxu0 0.0
    %2816 = vmatpush.msra.mxu0 0.0
    %2817 = vmatpush.msra.mxu0 0.0
    %2818 = vmatpush.msra.mxu0 0.0
    %2819 = vmatpush.msra.mxu0 0.0
    %2820 = vmatpush.msra.mxu0 0.0
    %2821 = vmatpush.msra.mxu0 0.0
    %2822 = vmatpush.msra.mxu0 %v2153
    %2823 = vmatpush.msra.mxu0 %v2151
    %2824 = vmatpush.msra.mxu0 %v2149
    %2825 = vmatpush.msra.mxu0 %v2147
    %2826 = vmatpush.msra.mxu0 %v2145
    %2827 = vmatpush.msra.mxu0 %v2143
    %2828 = vmatpush.msra.mxu0 %v2141
    %2829 = vmatpush.msra.mxu0 %v2139
    %2830 = vmatmul.f32.gmra.mxu0 %v2812
    %v2831 = vpop.f32.mrf.mxu0
    %v2832 = vadd.f32 0.0, %v2831
    %2833 = vdwg.mxu0
    %2834 = vmatpush.msra.mxu0 0.0
    %2835 = vmatpush.msra.mxu0 0.0
    %2836 = vmatpush.msra.mxu0 0.0
    %2837 = vmatpush.msra.mxu0 0.0
    %2838 = vmatpush.msra.mxu0 0.0
    %2839 = vmatpush.msra.mxu0 0.0
    %2840 = vmatpush.msra.mxu0 0.0
    %2841 = vmatpush.msra.mxu0 0.0
    %2842 = vmatpush.msra.mxu0 %v2154
    %2843 = vmatpush.msra.mxu0 %v2152
    %2844 = vmatpush.msra.mxu0 %v2150
    %2845 = vmatpush.msra.mxu0 %v2148
    %2846 = vmatpush.msra.mxu0 %v2146
    %2847 = vmatpush.msra.mxu0 %v2144
    %2848 = vmatpush.msra.mxu0 %v2142
    %2849 = vmatpush.msra.mxu0 %v2140
    %2850 = vmatmul.f32.gmra.mxu0 %v2812
    %v2851 = vpop.f32.mrf.mxu0
    %v2852 = vadd.f32 0.0, %v2851
    %2853 = vdwg.mxu0
    %v2856 = vrot.slane %v2832, 4
    %v2857 = vrot.slane %v2852, 4
    %v2860 = vadd.f32 %v2593, %v2856
    %v2861 = vadd.f32 %v2594, %v2857
    %v2862 = vadd.f32 %v2860, %v2207
    %v2863 = vadd.f32 %v2861, %v2208
    %v2864 = vxor.u32 %v2862, 2147483648
    %v2865 = vxor.u32 %v2863, 2147483648
    %v2866 = vmul.f32 %v2864, 1.442695
    %v2867 = vpow.pop %v2866
    %v2868 = vmul.f32 %v2865, 1.442695
    %v2869 = vpow.pop %v2868
    %v2870 = vadd.f32 %v2867, 1.0
    %v2871 = vadd.f32 %v2869, 1.0
    %v2872 = vrcp.pop %v2870
    %v2873 = vmul.f32 %v2870, %v2872
    %v2874 = vsub.f32 1.0, %v2873
    %v2875 = vmul.f32 %v2872, %v2874
    %v2876 = vadd.f32 %v2872, %v2875
    %vm2877 = vweird.f32 %v2870
    %vm2878 = vweird.f32 %v2872
    %vm2879 = vmor %vm2877, %vm2878
    %v2880 = vsel %vm2879, %v2872, %v2876
    %v2881 = vand.u32 2147483647, %v2870
    %vm2882 = vcmp.eq.f32.partialorder %v2881, 8.507059e+37
    %v2883 = vand.u32 %v2870, 2147483648
    %v2884 = vor.u32 1.1754944e-38, %v2883
    %v2885 = vsel %vm2882, %v2884, %v2880
    %v2886 = vmul.f32 1.0, %v2885
    %v2887 = vrcp.pop %v2871
    %v2888 = vmul.f32 %v2871, %v2887
    %v2889 = vsub.f32 1.0, %v2888
    %v2890 = vmul.f32 %v2887, %v2889
    %v2891 = vadd.f32 %v2887, %v2890
    %vm2892 = vweird.f32 %v2871
    %vm2893 = vweird.f32 %v2887
    %vm2894 = vmor %vm2892, %vm2893
    %v2895 = vsel %vm2894, %v2887, %v2891
    %v2896 = vand.u32 2147483647, %v2871
    %vm2897 = vcmp.eq.f32.partialorder %v2896, 8.507059e+37
    %v2898 = vand.u32 %v2871, 2147483648
    %v2899 = vor.u32 1.1754944e-38, %v2898
    %v2900 = vsel %vm2897, %v2899, %v2895
    %v2901 = vmul.f32 1.0, %v2900
    %v2902 = vtanh.pop %v2863
    %v2904 = vrot.slane %v2805, 6
    %v2906 = vmul.f32 %v2886, %v2904
    %v2907 = vmul.f32 %v2886, %v2902
    %2909 = vrot.lane.b32.xlu0 %v2907, 64
    %v2910 = vpop.permute.xlu0 %2909
    %v2912 = vadd.f32 %v2906, %v2910
    %v2913 = vtanh.pop %v2912
    %v2914 = vmul.f32 %v2901, %v2913
    %v2916 = vrot.slane %v2914, 4
    %2917 = vrot.lane.b32.xlu0 %v2916, 64
    %v2918 = vpop.permute.xlu0 %2917
    %v2919 = vsel %vm162, %v2918, 0
    %2921 = vmatpush.msra.mxu0 0.0
    %2922 = vmatpush.msra.mxu0 0.0
    %2923 = vmatpush.msra.mxu0 0.0
    %2924 = vmatpush.msra.mxu0 0.0
    %2925 = vmatpush.msra.mxu0 0.0
    %2926 = vmatpush.msra.mxu0 0.0
    %2927 = vmatpush.msra.mxu0 0.0
    %2928 = vmatpush.msra.mxu0 0.0
    %2929 = vmatpush.msra.mxu0 %v2153
    %2930 = vmatpush.msra.mxu0 %v2151
    %2931 = vmatpush.msra.mxu0 %v2149
    %2932 = vmatpush.msra.mxu0 %v2147
    %2933 = vmatpush.msra.mxu0 %v2145
    %2934 = vmatpush.msra.mxu0 %v2143
    %2935 = vmatpush.msra.mxu0 %v2141
    %2936 = vmatpush.msra.mxu0 %v2139
    %2937 = vmatmul.f32.gmra.mxu0 %v2919
    %v2938 = vpop.f32.mrf.mxu0
    %v2939 = vadd.f32 0.0, %v2938
    %2940 = vdwg.mxu0
    %2941 = vmatpush.msra.mxu0 0.0
    %2942 = vmatpush.msra.mxu0 0.0
    %2943 = vmatpush.msra.mxu0 0.0
    %2944 = vmatpush.msra.mxu0 0.0
    %2945 = vmatpush.msra.mxu0 0.0
    %2946 = vmatpush.msra.mxu0 0.0
    %2947 = vmatpush.msra.mxu0 0.0
    %2948 = vmatpush.msra.mxu0 0.0
    %2949 = vmatpush.msra.mxu0 %v2154
    %2950 = vmatpush.msra.mxu0 %v2152
    %2951 = vmatpush.msra.mxu0 %v2150
    %2952 = vmatpush.msra.mxu0 %v2148
    %2953 = vmatpush.msra.mxu0 %v2146
    %2954 = vmatpush.msra.mxu0 %v2144
    %2955 = vmatpush.msra.mxu0 %v2142
    %2956 = vmatpush.msra.mxu0 %v2140
    %2957 = vmatmul.f32.gmra.mxu0 %v2919
    %v2958 = vpop.f32.mrf.mxu0
    %v2959 = vadd.f32 0.0, %v2958
    %2960 = vdwg.mxu0
    %v2963 = vrot.slane %v2939, 2
    %v2964 = vrot.slane %v2959, 2
    %v2967 = vadd.f32 %v2700, %v2963
    %v2968 = vadd.f32 %v2701, %v2964
    %v2969 = vadd.f32 %v2967, %v2207
    %v2970 = vadd.f32 %v2968, %v2208
    %v2971 = vxor.u32 %v2969, 2147483648
    %v2972 = vxor.u32 %v2970, 2147483648
    %v2973 = vmul.f32 %v2971, 1.442695
    %v2974 = vpow.pop %v2973
    %v2975 = vmul.f32 %v2972, 1.442695
    %v2976 = vpow.pop %v2975
    %v2977 = vadd.f32 %v2974, 1.0
    %v2978 = vadd.f32 %v2976, 1.0
    %v2979 = vrcp.pop %v2977
    %v2980 = vmul.f32 %v2977, %v2979
    %v2981 = vsub.f32 1.0, %v2980
    %v2982 = vmul.f32 %v2979, %v2981
    %v2983 = vadd.f32 %v2979, %v2982
    %vm2984 = vweird.f32 %v2977
    %vm2985 = vweird.f32 %v2979
    %vm2986 = vmor %vm2984, %vm2985
    %v2987 = vsel %vm2986, %v2979, %v2983
    %v2988 = vand.u32 2147483647, %v2977
    %vm2989 = vcmp.eq.f32.partialorder %v2988, 8.507059e+37
    %v2990 = vand.u32 %v2977, 2147483648
    %v2991 = vor.u32 1.1754944e-38, %v2990
    %v2992 = vsel %vm2989, %v2991, %v2987
    %v2993 = vmul.f32 1.0, %v2992
    %v2994 = vrcp.pop %v2978
    %v2995 = vmul.f32 %v2978, %v2994
    %v2996 = vsub.f32 1.0, %v2995
    %v2997 = vmul.f32 %v2994, %v2996
    %v2998 = vadd.f32 %v2994, %v2997
    %vm2999 = vweird.f32 %v2978
    %vm3000 = vweird.f32 %v2994
    %vm3001 = vmor %vm2999, %vm3000
    %v3002 = vsel %vm3001, %v2994, %v2998
    %v3003 = vand.u32 2147483647, %v2978
    %vm3004 = vcmp.eq.f32.partialorder %v3003, 8.507059e+37
    %v3005 = vand.u32 %v2978, 2147483648
    %v3006 = vor.u32 1.1754944e-38, %v3005
    %v3007 = vsel %vm3004, %v3006, %v3002
    %v3008 = vmul.f32 1.0, %v3007
    %v3009 = vtanh.pop %v2970
    %v3011 = vrot.slane %v2912, 6
    %v3013 = vmul.f32 %v2993, %v3011
    %v3014 = vmul.f32 %v2993, %v3009
    %3016 = vrot.lane.b32.xlu0 %v3014, 64
    %v3017 = vpop.permute.xlu0 %3016
    %v3019 = vadd.f32 %v3013, %v3017
    %v3020 = vtanh.pop %v3019
    %v3021 = vmul.f32 %v3008, %v3020
    %v3024 = vrot.slane %v2102, 6
    %v3025 = vrot.slane %v2131, 6
    %v3028 = vadd.f32 %v2047, %v3024
    %v3029 = vadd.f32 %v2076, %v3025
    %v3031 = vrot.slane %v3021, 6
    %3032 = vrot.lane.b32.xlu0 %v3031, 64
    %v3033 = vpop.permute.xlu0 %3032
    %v3034 = vsel %vm162, %v3033, 0
    %3036 = vmatpush.msra.mxu0 0.0
    %3037 = vmatpush.msra.mxu0 0.0
    %3038 = vmatpush.msra.mxu0 0.0
    %3039 = vmatpush.msra.mxu0 0.0
    %3040 = vmatpush.msra.mxu0 0.0
    %3041 = vmatpush.msra.mxu0 0.0
    %3042 = vmatpush.msra.mxu0 0.0
    %3043 = vmatpush.msra.mxu0 0.0
    %3044 = vmatpush.msra.mxu0 %v2153
    %3045 = vmatpush.msra.mxu0 %v2151
    %3046 = vmatpush.msra.mxu0 %v2149
    %3047 = vmatpush.msra.mxu0 %v2147
    %3048 = vmatpush.msra.mxu0 %v2145
    %3049 = vmatpush.msra.mxu0 %v2143
    %3050 = vmatpush.msra.mxu0 %v2141
    %3051 = vmatpush.msra.mxu0 %v2139
    %3052 = vmatmul.f32.gmra.mxu0 %v3034
    %v3053 = vpop.f32.mrf.mxu0
    %v3054 = vadd.f32 0.0, %v3053
    %3055 = vdwg.mxu0
    %3056 = vmatpush.msra.mxu0 0.0
    %3057 = vmatpush.msra.mxu0 0.0
    %3058 = vmatpush.msra.mxu0 0.0
    %3059 = vmatpush.msra.mxu0 0.0
    %3060 = vmatpush.msra.mxu0 0.0
    %3061 = vmatpush.msra.mxu0 0.0
    %3062 = vmatpush.msra.mxu0 0.0
    %3063 = vmatpush.msra.mxu0 0.0
    %3064 = vmatpush.msra.mxu0 %v2154
    %3065 = vmatpush.msra.mxu0 %v2152
    %3066 = vmatpush.msra.mxu0 %v2150
    %3067 = vmatpush.msra.mxu0 %v2148
    %3068 = vmatpush.msra.mxu0 %v2146
    %3069 = vmatpush.msra.mxu0 %v2144
    %3070 = vmatpush.msra.mxu0 %v2142
    %3071 = vmatpush.msra.mxu0 %v2140
    %3072 = vmatmul.f32.gmra.mxu0 %v3034
    %v3073 = vpop.f32.mrf.mxu0
    %v3074 = vadd.f32 0.0, %v3073
    %3075 = vdwg.mxu0
    %v3076 = vadd.f32 %v3028, %v3054
    %v3077 = vadd.f32 %v3029, %v3074
    %v3078 = vadd.f32 %v3076, %v2207
    %v3079 = vadd.f32 %v3077, %v2208
    %v3080 = vxor.u32 %v3078, 2147483648
    %v3081 = vxor.u32 %v3079, 2147483648
    %v3082 = vmul.f32 %v3080, 1.442695
    %v3083 = vpow.pop %v3082
    %v3084 = vmul.f32 %v3081, 1.442695
    %v3085 = vpow.pop %v3084
    %v3086 = vadd.f32 %v3083, 1.0
    %v3087 = vadd.f32 %v3085, 1.0
    %v3088 = vrcp.pop %v3086
    %v3089 = vmul.f32 %v3086, %v3088
    %v3090 = vsub.f32 1.0, %v3089
    %v3091 = vmul.f32 %v3088, %v3090
    %v3092 = vadd.f32 %v3088, %v3091
    %vm3093 = vweird.f32 %v3086
    %vm3094 = vweird.f32 %v3088
    %vm3095 = vmor %vm3093, %vm3094
    %v3096 = vsel %vm3095, %v3088, %v3092
    %v3097 = vand.u32 2147483647, %v3086
    %vm3098 = vcmp.eq.f32.partialorder %v3097, 8.507059e+37
    %v3099 = vand.u32 %v3086, 2147483648
    %v3100 = vor.u32 1.1754944e-38, %v3099
    %v3101 = vsel %vm3098, %v3100, %v3096
    %v3102 = vmul.f32 1.0, %v3101
    %v3103 = vrcp.pop %v3087
    %v3104 = vmul.f32 %v3087, %v3103
    %v3105 = vsub.f32 1.0, %v3104
    %v3106 = vmul.f32 %v3103, %v3105
    %v3107 = vadd.f32 %v3103, %v3106
    %vm3108 = vweird.f32 %v3087
    %vm3109 = vweird.f32 %v3103
    %vm3110 = vmor %vm3108, %vm3109
    %v3111 = vsel %vm3110, %v3103, %v3107
    %v3112 = vand.u32 2147483647, %v3087
    %vm3113 = vcmp.eq.f32.partialorder %v3112, 8.507059e+37
    %v3114 = vand.u32 %v3087, 2147483648
    %v3115 = vor.u32 1.1754944e-38, %v3114
    %v3116 = vsel %vm3113, %v3115, %v3111
    %v3117 = vmul.f32 1.0, %v3116
    %v3118 = vtanh.pop %v3079
    %v3120 = vrot.slane %v3019, 6
    %v3122 = vmul.f32 %v3102, %v3120
    %v3123 = vmul.f32 %v3102, %v3118
    %3125 = vrot.lane.b32.xlu0 %v3123, 64
    %v3126 = vpop.permute.xlu0 %3125
    %v3128 = vadd.f32 %v3122, %v3126
    %v3129 = vtanh.pop %v3128
    %v3130 = vmul.f32 %v3117, %v3129
    %v3131 = vrot.slane %v2102, 2
    %v3132 = vrot.slane %v2131, 2
    %v3135 = vadd.f32 %v2047, %v3131
    %v3136 = vadd.f32 %v2076, %v3132
    %3138 = vrot.lane.b32.xlu0 %v3130, 64
    %v3139 = vpop.permute.xlu0 %3138
    %v3140 = vsel %vm162, %v3139, 0
    %3142 = vmatpush.msra.mxu0 0.0
    %3143 = vmatpush.msra.mxu0 0.0
    %3144 = vmatpush.msra.mxu0 0.0
    %3145 = vmatpush.msra.mxu0 0.0
    %3146 = vmatpush.msra.mxu0 0.0
    %3147 = vmatpush.msra.mxu0 0.0
    %3148 = vmatpush.msra.mxu0 0.0
    %3149 = vmatpush.msra.mxu0 0.0
    %3150 = vmatpush.msra.mxu0 %v2153
    %3151 = vmatpush.msra.mxu0 %v2151
    %3152 = vmatpush.msra.mxu0 %v2149
    %3153 = vmatpush.msra.mxu0 %v2147
    %3154 = vmatpush.msra.mxu0 %v2145
    %3155 = vmatpush.msra.mxu0 %v2143
    %3156 = vmatpush.msra.mxu0 %v2141
    %3157 = vmatpush.msra.mxu0 %v2139
    %3158 = vmatmul.f32.gmra.mxu0 %v3140
    %v3159 = vpop.f32.mrf.mxu0
    %v3160 = vadd.f32 0.0, %v3159
    %3161 = vdwg.mxu0
    %3162 = vmatpush.msra.mxu0 0.0
    %3163 = vmatpush.msra.mxu0 0.0
    %3164 = vmatpush.msra.mxu0 0.0
    %3165 = vmatpush.msra.mxu0 0.0
    %3166 = vmatpush.msra.mxu0 0.0
    %3167 = vmatpush.msra.mxu0 0.0
    %3168 = vmatpush.msra.mxu0 0.0
    %3169 = vmatpush.msra.mxu0 0.0
    %3170 = vmatpush.msra.mxu0 %v2154
    %3171 = vmatpush.msra.mxu0 %v2152
    %3172 = vmatpush.msra.mxu0 %v2150
    %3173 = vmatpush.msra.mxu0 %v2148
    %3174 = vmatpush.msra.mxu0 %v2146
    %3175 = vmatpush.msra.mxu0 %v2144
    %3176 = vmatpush.msra.mxu0 %v2142
    %3177 = vmatpush.msra.mxu0 %v2140
    %3178 = vmatmul.f32.gmra.mxu0 %v3140
    %v3179 = vpop.f32.mrf.mxu0
    %v3180 = vadd.f32 0.0, %v3179
    %3181 = vdwg.mxu0
    %v3184 = vrot.slane %v3160, 6
    %v3185 = vrot.slane %v3180, 6
    %v3188 = vadd.f32 %v3135, %v3184
    %v3189 = vadd.f32 %v3136, %v3185
    %v3190 = vadd.f32 %v3188, %v2207
    %v3191 = vadd.f32 %v3189, %v2208
    %v3192 = vxor.u32 %v3190, 2147483648
    %v3193 = vxor.u32 %v3191, 2147483648
    %v3194 = vmul.f32 %v3192, 1.442695
    %v3195 = vpow.pop %v3194
    %v3196 = vmul.f32 %v3193, 1.442695
    %v3197 = vpow.pop %v3196
    %v3198 = vadd.f32 %v3195, 1.0
    %v3199 = vadd.f32 %v3197, 1.0
    %v3200 = vrcp.pop %v3198
    %v3201 = vmul.f32 %v3198, %v3200
    %v3202 = vsub.f32 1.0, %v3201
    %v3203 = vmul.f32 %v3200, %v3202
    %v3204 = vadd.f32 %v3200, %v3203
    %vm3205 = vweird.f32 %v3198
    %vm3206 = vweird.f32 %v3200
    %vm3207 = vmor %vm3205, %vm3206
    %v3208 = vsel %vm3207, %v3200, %v3204
    %v3209 = vand.u32 2147483647, %v3198
    %vm3210 = vcmp.eq.f32.partialorder %v3209, 8.507059e+37
    %v3211 = vand.u32 %v3198, 2147483648
    %v3212 = vor.u32 1.1754944e-38, %v3211
    %v3213 = vsel %vm3210, %v3212, %v3208
    %v3214 = vmul.f32 1.0, %v3213
    %v3215 = vrcp.pop %v3199
    %v3216 = vmul.f32 %v3199, %v3215
    %v3217 = vsub.f32 1.0, %v3216
    %v3218 = vmul.f32 %v3215, %v3217
    %v3219 = vadd.f32 %v3215, %v3218
    %vm3220 = vweird.f32 %v3199
    %vm3221 = vweird.f32 %v3215
    %vm3222 = vmor %vm3220, %vm3221
    %v3223 = vsel %vm3222, %v3215, %v3219
    %v3224 = vand.u32 2147483647, %v3199
    %vm3225 = vcmp.eq.f32.partialorder %v3224, 8.507059e+37
    %v3226 = vand.u32 %v3199, 2147483648
    %v3227 = vor.u32 1.1754944e-38, %v3226
    %v3228 = vsel %vm3225, %v3227, %v3223
    %v3229 = vmul.f32 1.0, %v3228
    %v3230 = vtanh.pop %v3191
    %v3232 = vrot.slane %v3128, 6
    %v3234 = vmul.f32 %v3214, %v3232
    %v3235 = vmul.f32 %v3214, %v3230
    %3237 = vrot.lane.b32.xlu0 %v3235, 64
    %v3238 = vpop.permute.xlu0 %3237
    %v3240 = vadd.f32 %v3234, %v3238
    %v3241 = vtanh.pop %v3240
    %v3242 = vmul.f32 %v3229, %v3241
    %v3244 = vrot.slane %v3242, 2
    %3245 = vrot.lane.b32.xlu0 %v3244, 64
    %v3246 = vpop.permute.xlu0 %3245
    %v3247 = vsel %vm162, %v3246, 0
    %3249 = vmatpush.msra.mxu0 0.0
    %3250 = vmatpush.msra.mxu0 0.0
    %3251 = vmatpush.msra.mxu0 0.0
    %3252 = vmatpush.msra.mxu0 0.0
    %3253 = vmatpush.msra.mxu0 0.0
    %3254 = vmatpush.msra.mxu0 0.0
    %3255 = vmatpush.msra.mxu0 0.0
    %3256 = vmatpush.msra.mxu0 0.0
    %3257 = vmatpush.msra.mxu0 %v2153
    %3258 = vmatpush.msra.mxu0 %v2151
    %3259 = vmatpush.msra.mxu0 %v2149
    %3260 = vmatpush.msra.mxu0 %v2147
    %3261 = vmatpush.msra.mxu0 %v2145
    %3262 = vmatpush.msra.mxu0 %v2143
    %3263 = vmatpush.msra.mxu0 %v2141
    %3264 = vmatpush.msra.mxu0 %v2139
    %3265 = vmatmul.f32.gmra.mxu0 %v3247
    %v3266 = vpop.f32.mrf.mxu0
    %v3267 = vadd.f32 0.0, %v3266
    %3268 = vdwg.mxu0
    %3269 = vmatpush.msra.mxu0 0.0
    %3270 = vmatpush.msra.mxu0 0.0
    %3271 = vmatpush.msra.mxu0 0.0
    %3272 = vmatpush.msra.mxu0 0.0
    %3273 = vmatpush.msra.mxu0 0.0
    %3274 = vmatpush.msra.mxu0 0.0
    %3275 = vmatpush.msra.mxu0 0.0
    %3276 = vmatpush.msra.mxu0 0.0
    %3277 = vmatpush.msra.mxu0 %v2154
    %3278 = vmatpush.msra.mxu0 %v2152
    %3279 = vmatpush.msra.mxu0 %v2150
    %3280 = vmatpush.msra.mxu0 %v2148
    %3281 = vmatpush.msra.mxu0 %v2146
    %3282 = vmatpush.msra.mxu0 %v2144
    %3283 = vmatpush.msra.mxu0 %v2142
    %3284 = vmatpush.msra.mxu0 %v2140
    %3285 = vmatmul.f32.gmra.mxu0 %v3247
    %v3286 = vpop.f32.mrf.mxu0
    %v3287 = vadd.f32 0.0, %v3286
    %3288 = vdwg.mxu0
    %v3291 = vrot.slane %v3267, 4
    %v3292 = vrot.slane %v3287, 4
    %v3295 = vadd.f32 %v3028, %v3291
    %v3296 = vadd.f32 %v3029, %v3292
    %v3297 = vadd.f32 %v3295, %v2207
    %v3298 = vadd.f32 %v3296, %v2208
    %v3299 = vxor.u32 %v3297, 2147483648
    %v3300 = vxor.u32 %v3298, 2147483648
    %v3301 = vmul.f32 %v3299, 1.442695
    %v3302 = vpow.pop %v3301
    %v3303 = vmul.f32 %v3300, 1.442695
    %v3304 = vpow.pop %v3303
    %v3305 = vadd.f32 %v3302, 1.0
    %v3306 = vadd.f32 %v3304, 1.0
    %v3307 = vrcp.pop %v3305
    %v3308 = vmul.f32 %v3305, %v3307
    %v3309 = vsub.f32 1.0, %v3308
    %v3310 = vmul.f32 %v3307, %v3309
    %v3311 = vadd.f32 %v3307, %v3310
    %vm3312 = vweird.f32 %v3305
    %vm3313 = vweird.f32 %v3307
    %vm3314 = vmor %vm3312, %vm3313
    %v3315 = vsel %vm3314, %v3307, %v3311
    %v3316 = vand.u32 2147483647, %v3305
    %vm3317 = vcmp.eq.f32.partialorder %v3316, 8.507059e+37
    %v3318 = vand.u32 %v3305, 2147483648
    %v3319 = vor.u32 1.1754944e-38, %v3318
    %v3320 = vsel %vm3317, %v3319, %v3315
    %v3321 = vmul.f32 1.0, %v3320
    %v3322 = vrcp.pop %v3306
    %v3323 = vmul.f32 %v3306, %v3322
    %v3324 = vsub.f32 1.0, %v3323
    %v3325 = vmul.f32 %v3322, %v3324
    %v3326 = vadd.f32 %v3322, %v3325
    %vm3327 = vweird.f32 %v3306
    %vm3328 = vweird.f32 %v3322
    %vm3329 = vmor %vm3327, %vm3328
    %v3330 = vsel %vm3329, %v3322, %v3326
    %v3331 = vand.u32 2147483647, %v3306
    %vm3332 = vcmp.eq.f32.partialorder %v3331, 8.507059e+37
    %v3333 = vand.u32 %v3306, 2147483648
    %v3334 = vor.u32 1.1754944e-38, %v3333
    %v3335 = vsel %vm3332, %v3334, %v3330
    %v3336 = vmul.f32 1.0, %v3335
    %v3337 = vtanh.pop %v3298
    %v3339 = vrot.slane %v3240, 6
    %v3341 = vmul.f32 %v3321, %v3339
    %v3342 = vmul.f32 %v3321, %v3337
    %3344 = vrot.lane.b32.xlu0 %v3342, 64
    %v3345 = vpop.permute.xlu0 %3344
    %v3347 = vadd.f32 %v3341, %v3345
    %v3348 = vtanh.pop %v3347
    %v3349 = vmul.f32 %v3336, %v3348
    %v3351 = vrot.slane %v3349, 4
    %3352 = vrot.lane.b32.xlu0 %v3351, 64
    %v3353 = vpop.permute.xlu0 %3352
    %v3354 = vsel %vm162, %v3353, 0
    %3356 = vmatpush.msra.mxu0 0.0
    %3357 = vmatpush.msra.mxu0 0.0
    %3358 = vmatpush.msra.mxu0 0.0
    %3359 = vmatpush.msra.mxu0 0.0
    %3360 = vmatpush.msra.mxu0 0.0
    %3361 = vmatpush.msra.mxu0 0.0
    %3362 = vmatpush.msra.mxu0 0.0
    %3363 = vmatpush.msra.mxu0 0.0
    %3364 = vmatpush.msra.mxu0 %v2153
    %3365 = vmatpush.msra.mxu0 %v2151
    %3366 = vmatpush.msra.mxu0 %v2149
    %3367 = vmatpush.msra.mxu0 %v2147
    %3368 = vmatpush.msra.mxu0 %v2145
    %3369 = vmatpush.msra.mxu0 %v2143
    %3370 = vmatpush.msra.mxu0 %v2141
    %3371 = vmatpush.msra.mxu0 %v2139
    %3372 = vmatmul.f32.gmra.mxu0 %v3354
    %v3373 = vpop.f32.mrf.mxu0
    %v3374 = vadd.f32 0.0, %v3373
    %3375 = vdwg.mxu0
    %3376 = vmatpush.msra.mxu0 0.0
    %3377 = vmatpush.msra.mxu0 0.0
    %3378 = vmatpush.msra.mxu0 0.0
    %3379 = vmatpush.msra.mxu0 0.0
    %3380 = vmatpush.msra.mxu0 0.0
    %3381 = vmatpush.msra.mxu0 0.0
    %3382 = vmatpush.msra.mxu0 0.0
    %3383 = vmatpush.msra.mxu0 0.0
    %3384 = vmatpush.msra.mxu0 %v2154
    %3385 = vmatpush.msra.mxu0 %v2152
    %3386 = vmatpush.msra.mxu0 %v2150
    %3387 = vmatpush.msra.mxu0 %v2148
    %3388 = vmatpush.msra.mxu0 %v2146
    %3389 = vmatpush.msra.mxu0 %v2144
    %3390 = vmatpush.msra.mxu0 %v2142
    %3391 = vmatpush.msra.mxu0 %v2140
    %3392 = vmatmul.f32.gmra.mxu0 %v3354
    %v3393 = vpop.f32.mrf.mxu0
    %v3394 = vadd.f32 0.0, %v3393
    %3395 = vdwg.mxu0
    %v3398 = vrot.slane %v3374, 2
    %v3399 = vrot.slane %v3394, 2
    %v3402 = vadd.f32 %v3135, %v3398
    %v3403 = vadd.f32 %v3136, %v3399
    %v3404 = vadd.f32 %v3402, %v2207
    %v3405 = vadd.f32 %v3403, %v2208
    %v3406 = vxor.u32 %v3404, 2147483648
    %v3407 = vxor.u32 %v3405, 2147483648
    %v3408 = vmul.f32 %v3406, 1.442695
    %v3409 = vpow.pop %v3408
    %v3410 = vmul.f32 %v3407, 1.442695
    %v3411 = vpow.pop %v3410
    %v3412 = vadd.f32 %v3409, 1.0
    %v3413 = vadd.f32 %v3411, 1.0
    %v3414 = vrcp.pop %v3412
    %v3415 = vmul.f32 %v3412, %v3414
    %v3416 = vsub.f32 1.0, %v3415
    %v3417 = vmul.f32 %v3414, %v3416
    %v3418 = vadd.f32 %v3414, %v3417
    %vm3419 = vweird.f32 %v3412
    %vm3420 = vweird.f32 %v3414
    %vm3421 = vmor %vm3419, %vm3420
    %v3422 = vsel %vm3421, %v3414, %v3418
    %v3423 = vand.u32 2147483647, %v3412
    %vm3424 = vcmp.eq.f32.partialorder %v3423, 8.507059e+37
    %v3425 = vand.u32 %v3412, 2147483648
    %v3426 = vor.u32 1.1754944e-38, %v3425
    %v3427 = vsel %vm3424, %v3426, %v3422
    %v3428 = vmul.f32 1.0, %v3427
    %v3429 = vrcp.pop %v3413
    %v3430 = vmul.f32 %v3413, %v3429
    %v3431 = vsub.f32 1.0, %v3430
    %v3432 = vmul.f32 %v3429, %v3431
    %v3433 = vadd.f32 %v3429, %v3432
    %vm3434 = vweird.f32 %v3413
    %vm3435 = vweird.f32 %v3429
    %vm3436 = vmor %vm3434, %vm3435
    %v3437 = vsel %vm3436, %v3429, %v3433
    %v3438 = vand.u32 2147483647, %v3413
    %vm3439 = vcmp.eq.f32.partialorder %v3438, 8.507059e+37
    %v3440 = vand.u32 %v3413, 2147483648
    %v3441 = vor.u32 1.1754944e-38, %v3440
    %v3442 = vsel %vm3439, %v3441, %v3437
    %v3443 = vmul.f32 1.0, %v3442
    %v3444 = vtanh.pop %v3405
    %v3446 = vrot.slane %v3347, 6
    %v3448 = vmul.f32 %v3428, %v3446
    %v3449 = vmul.f32 %v3428, %v3444
    %3451 = vrot.lane.b32.xlu0 %v3449, 64
    %v3452 = vpop.permute.xlu0 %3451
    %v3454 = vadd.f32 %v3448, %v3452
    %v3455 = vtanh.pop %v3454
    %v3456 = vmul.f32 %v3443, %v3455
    %v3459 = vrot.slane %v2099, 6
    %v3460 = vrot.slane %v2128, 6
    %v3463 = vadd.f32 %v2050, %v3459
    %v3464 = vadd.f32 %v2079, %v3460
    %v3466 = vrot.slane %v3456, 6
    %3467 = vrot.lane.b32.xlu0 %v3466, 64
    %v3468 = vpop.permute.xlu0 %3467
    %v3469 = vsel %vm162, %v3468, 0
    %3471 = vmatpush.msra.mxu0 0.0
    %3472 = vmatpush.msra.mxu0 0.0
    %3473 = vmatpush.msra.mxu0 0.0
    %3474 = vmatpush.msra.mxu0 0.0
    %3475 = vmatpush.msra.mxu0 0.0
    %3476 = vmatpush.msra.mxu0 0.0
    %3477 = vmatpush.msra.mxu0 0.0
    %3478 = vmatpush.msra.mxu0 0.0
    %3479 = vmatpush.msra.mxu0 %v2153
    %3480 = vmatpush.msra.mxu0 %v2151
    %3481 = vmatpush.msra.mxu0 %v2149
    %3482 = vmatpush.msra.mxu0 %v2147
    %3483 = vmatpush.msra.mxu0 %v2145
    %3484 = vmatpush.msra.mxu0 %v2143
    %3485 = vmatpush.msra.mxu0 %v2141
    %3486 = vmatpush.msra.mxu0 %v2139
    %3487 = vmatmul.f32.gmra.mxu0 %v3469
    %v3488 = vpop.f32.mrf.mxu0
    %v3489 = vadd.f32 0.0, %v3488
    %3490 = vdwg.mxu0
    %3491 = vmatpush.msra.mxu0 0.0
    %3492 = vmatpush.msra.mxu0 0.0
    %3493 = vmatpush.msra.mxu0 0.0
    %3494 = vmatpush.msra.mxu0 0.0
    %3495 = vmatpush.msra.mxu0 0.0
    %3496 = vmatpush.msra.mxu0 0.0
    %3497 = vmatpush.msra.mxu0 0.0
    %3498 = vmatpush.msra.mxu0 0.0
    %3499 = vmatpush.msra.mxu0 %v2154
    %3500 = vmatpush.msra.mxu0 %v2152
    %3501 = vmatpush.msra.mxu0 %v2150
    %3502 = vmatpush.msra.mxu0 %v2148
    %3503 = vmatpush.msra.mxu0 %v2146
    %3504 = vmatpush.msra.mxu0 %v2144
    %3505 = vmatpush.msra.mxu0 %v2142
    %3506 = vmatpush.msra.mxu0 %v2140
    %3507 = vmatmul.f32.gmra.mxu0 %v3469
    %v3508 = vpop.f32.mrf.mxu0
    %v3509 = vadd.f32 0.0, %v3508
    %3510 = vdwg.mxu0
    %v3511 = vadd.f32 %v3463, %v3489
    %v3512 = vadd.f32 %v3464, %v3509
    %v3513 = vadd.f32 %v3511, %v2207
    %v3514 = vadd.f32 %v3512, %v2208
    %v3515 = vxor.u32 %v3513, 2147483648
    %v3516 = vxor.u32 %v3514, 2147483648
    %v3517 = vmul.f32 %v3515, 1.442695
    %v3518 = vpow.pop %v3517
    %v3519 = vmul.f32 %v3516, 1.442695
    %v3520 = vpow.pop %v3519
    %v3521 = vadd.f32 %v3518, 1.0
    %v3522 = vadd.f32 %v3520, 1.0
    %v3523 = vrcp.pop %v3521
    %v3524 = vmul.f32 %v3521, %v3523
    %v3525 = vsub.f32 1.0, %v3524
    %v3526 = vmul.f32 %v3523, %v3525
    %v3527 = vadd.f32 %v3523, %v3526
    %vm3528 = vweird.f32 %v3521
    %vm3529 = vweird.f32 %v3523
    %vm3530 = vmor %vm3528, %vm3529
    %v3531 = vsel %vm3530, %v3523, %v3527
    %v3532 = vand.u32 2147483647, %v3521
    %vm3533 = vcmp.eq.f32.partialorder %v3532, 8.507059e+37
    %v3534 = vand.u32 %v3521, 2147483648
    %v3535 = vor.u32 1.1754944e-38, %v3534
    %v3536 = vsel %vm3533, %v3535, %v3531
    %v3537 = vmul.f32 1.0, %v3536
    %v3538 = vrcp.pop %v3522
    %v3539 = vmul.f32 %v3522, %v3538
    %v3540 = vsub.f32 1.0, %v3539
    %v3541 = vmul.f32 %v3538, %v3540
    %v3542 = vadd.f32 %v3538, %v3541
    %vm3543 = vweird.f32 %v3522
    %vm3544 = vweird.f32 %v3538
    %vm3545 = vmor %vm3543, %vm3544
    %v3546 = vsel %vm3545, %v3538, %v3542
    %v3547 = vand.u32 2147483647, %v3522
    %vm3548 = vcmp.eq.f32.partialorder %v3547, 8.507059e+37
    %v3549 = vand.u32 %v3522, 2147483648
    %v3550 = vor.u32 1.1754944e-38, %v3549
    %v3551 = vsel %vm3548, %v3550, %v3546
    %v3552 = vmul.f32 1.0, %v3551
    %v3553 = vtanh.pop %v3514
    %v3555 = vrot.slane %v3454, 6
    %v3557 = vmul.f32 %v3537, %v3555
    %v3558 = vmul.f32 %v3537, %v3553
    %3560 = vrot.lane.b32.xlu0 %v3558, 64
    %v3561 = vpop.permute.xlu0 %3560
    %v3563 = vadd.f32 %v3557, %v3561
    %v3564 = vtanh.pop %v3563
    %v3565 = vmul.f32 %v3552, %v3564
    %v3566 = vrot.slane %v2099, 2
    %v3567 = vrot.slane %v2128, 2
    %v3570 = vadd.f32 %v2050, %v3566
    %v3571 = vadd.f32 %v2079, %v3567
    %3573 = vrot.lane.b32.xlu0 %v3565, 64
    %v3574 = vpop.permute.xlu0 %3573
    %v3575 = vsel %vm162, %v3574, 0
    %3577 = vmatpush.msra.mxu0 0.0
    %3578 = vmatpush.msra.mxu0 0.0
    %3579 = vmatpush.msra.mxu0 0.0
    %3580 = vmatpush.msra.mxu0 0.0
    %3581 = vmatpush.msra.mxu0 0.0
    %3582 = vmatpush.msra.mxu0 0.0
    %3583 = vmatpush.msra.mxu0 0.0
    %3584 = vmatpush.msra.mxu0 0.0
    %3585 = vmatpush.msra.mxu0 %v2153
    %3586 = vmatpush.msra.mxu0 %v2151
    %3587 = vmatpush.msra.mxu0 %v2149
    %3588 = vmatpush.msra.mxu0 %v2147
    %3589 = vmatpush.msra.mxu0 %v2145
    %3590 = vmatpush.msra.mxu0 %v2143
    %3591 = vmatpush.msra.mxu0 %v2141
    %3592 = vmatpush.msra.mxu0 %v2139
    %3593 = vmatmul.f32.gmra.mxu0 %v3575
    %v3594 = vpop.f32.mrf.mxu0
    %v3595 = vadd.f32 0.0, %v3594
    %3596 = vdwg.mxu0
    %3597 = vmatpush.msra.mxu0 0.0
    %3598 = vmatpush.msra.mxu0 0.0
    %3599 = vmatpush.msra.mxu0 0.0
    %3600 = vmatpush.msra.mxu0 0.0
    %3601 = vmatpush.msra.mxu0 0.0
    %3602 = vmatpush.msra.mxu0 0.0
    %3603 = vmatpush.msra.mxu0 0.0
    %3604 = vmatpush.msra.mxu0 0.0
    %3605 = vmatpush.msra.mxu0 %v2154
    %3606 = vmatpush.msra.mxu0 %v2152
    %3607 = vmatpush.msra.mxu0 %v2150
    %3608 = vmatpush.msra.mxu0 %v2148
    %3609 = vmatpush.msra.mxu0 %v2146
    %3610 = vmatpush.msra.mxu0 %v2144
    %3611 = vmatpush.msra.mxu0 %v2142
    %3612 = vmatpush.msra.mxu0 %v2140
    %3613 = vmatmul.f32.gmra.mxu0 %v3575
    %v3614 = vpop.f32.mrf.mxu0
    %v3615 = vadd.f32 0.0, %v3614
    %3616 = vdwg.mxu0
    %v3619 = vrot.slane %v3595, 6
    %v3620 = vrot.slane %v3615, 6
    %v3623 = vadd.f32 %v3570, %v3619
    %v3624 = vadd.f32 %v3571, %v3620
    %v3625 = vadd.f32 %v3623, %v2207
    %v3626 = vadd.f32 %v3624, %v2208
    %v3627 = vxor.u32 %v3625, 2147483648
    %v3628 = vxor.u32 %v3626, 2147483648
    %v3629 = vmul.f32 %v3627, 1.442695
    %v3630 = vpow.pop %v3629
    %v3631 = vmul.f32 %v3628, 1.442695
    %v3632 = vpow.pop %v3631
    %v3633 = vadd.f32 %v3630, 1.0
    %v3634 = vadd.f32 %v3632, 1.0
    %v3635 = vrcp.pop %v3633
    %v3636 = vmul.f32 %v3633, %v3635
    %v3637 = vsub.f32 1.0, %v3636
    %v3638 = vmul.f32 %v3635, %v3637
    %v3639 = vadd.f32 %v3635, %v3638
    %vm3640 = vweird.f32 %v3633
    %vm3641 = vweird.f32 %v3635
    %vm3642 = vmor %vm3640, %vm3641
    %v3643 = vsel %vm3642, %v3635, %v3639
    %v3644 = vand.u32 2147483647, %v3633
    %vm3645 = vcmp.eq.f32.partialorder %v3644, 8.507059e+37
    %v3646 = vand.u32 %v3633, 2147483648
    %v3647 = vor.u32 1.1754944e-38, %v3646
    %v3648 = vsel %vm3645, %v3647, %v3643
    %v3649 = vmul.f32 1.0, %v3648
    %v3650 = vrcp.pop %v3634
    %v3651 = vmul.f32 %v3634, %v3650
    %v3652 = vsub.f32 1.0, %v3651
    %v3653 = vmul.f32 %v3650, %v3652
    %v3654 = vadd.f32 %v3650, %v3653
    %vm3655 = vweird.f32 %v3634
    %vm3656 = vweird.f32 %v3650
    %vm3657 = vmor %vm3655, %vm3656
    %v3658 = vsel %vm3657, %v3650, %v3654
    %v3659 = vand.u32 2147483647, %v3634
    %vm3660 = vcmp.eq.f32.partialorder %v3659, 8.507059e+37
    %v3661 = vand.u32 %v3634, 2147483648
    %v3662 = vor.u32 1.1754944e-38, %v3661
    %v3663 = vsel %vm3660, %v3662, %v3658
    %v3664 = vmul.f32 1.0, %v3663
    %v3665 = vtanh.pop %v3626
    %v3667 = vrot.slane %v3563, 6
    %v3669 = vmul.f32 %v3649, %v3667
    %v3670 = vmul.f32 %v3649, %v3665
    %3672 = vrot.lane.b32.xlu0 %v3670, 64
    %v3673 = vpop.permute.xlu0 %3672
    %v3675 = vadd.f32 %v3669, %v3673
    %v3676 = vtanh.pop %v3675
    %v3677 = vmul.f32 %v3664, %v3676
    %v3679 = vrot.slane %v3677, 2
    %3680 = vrot.lane.b32.xlu0 %v3679, 64
    %v3681 = vpop.permute.xlu0 %3680
    %v3682 = vsel %vm162, %v3681, 0
    %3684 = vmatpush.msra.mxu0 0.0
    %3685 = vmatpush.msra.mxu0 0.0
    %3686 = vmatpush.msra.mxu0 0.0
    %3687 = vmatpush.msra.mxu0 0.0
    %3688 = vmatpush.msra.mxu0 0.0
    %3689 = vmatpush.msra.mxu0 0.0
    %3690 = vmatpush.msra.mxu0 0.0
    %3691 = vmatpush.msra.mxu0 0.0
    %3692 = vmatpush.msra.mxu0 %v2153
    %3693 = vmatpush.msra.mxu0 %v2151
    %3694 = vmatpush.msra.mxu0 %v2149
    %3695 = vmatpush.msra.mxu0 %v2147
    %3696 = vmatpush.msra.mxu0 %v2145
    %3697 = vmatpush.msra.mxu0 %v2143
    %3698 = vmatpush.msra.mxu0 %v2141
    %3699 = vmatpush.msra.mxu0 %v2139
    %3700 = vmatmul.f32.gmra.mxu0 %v3682
    %v3701 = vpop.f32.mrf.mxu0
    %v3702 = vadd.f32 0.0, %v3701
    %3703 = vdwg.mxu0
    %3704 = vmatpush.msra.mxu0 0.0
    %3705 = vmatpush.msra.mxu0 0.0
    %3706 = vmatpush.msra.mxu0 0.0
    %3707 = vmatpush.msra.mxu0 0.0
    %3708 = vmatpush.msra.mxu0 0.0
    %3709 = vmatpush.msra.mxu0 0.0
    %3710 = vmatpush.msra.mxu0 0.0
    %3711 = vmatpush.msra.mxu0 0.0
    %3712 = vmatpush.msra.mxu0 %v2154
    %3713 = vmatpush.msra.mxu0 %v2152
    %3714 = vmatpush.msra.mxu0 %v2150
    %3715 = vmatpush.msra.mxu0 %v2148
    %3716 = vmatpush.msra.mxu0 %v2146
    %3717 = vmatpush.msra.mxu0 %v2144
    %3718 = vmatpush.msra.mxu0 %v2142
    %3719 = vmatpush.msra.mxu0 %v2140
    %3720 = vmatmul.f32.gmra.mxu0 %v3682
    %v3721 = vpop.f32.mrf.mxu0
    %v3722 = vadd.f32 0.0, %v3721
    %3723 = vdwg.mxu0
    %v3726 = vrot.slane %v3702, 4
    %v3727 = vrot.slane %v3722, 4
    %v3730 = vadd.f32 %v3463, %v3726
    %v3731 = vadd.f32 %v3464, %v3727
    %v3732 = vadd.f32 %v3730, %v2207
    %v3733 = vadd.f32 %v3731, %v2208
    %v3734 = vxor.u32 %v3732, 2147483648
    %v3735 = vxor.u32 %v3733, 2147483648
    %v3736 = vmul.f32 %v3734, 1.442695
    %v3737 = vpow.pop %v3736
    %v3738 = vmul.f32 %v3735, 1.442695
    %v3739 = vpow.pop %v3738
    %v3740 = vadd.f32 %v3737, 1.0
    %v3741 = vadd.f32 %v3739, 1.0
    %v3742 = vrcp.pop %v3740
    %v3743 = vmul.f32 %v3740, %v3742
    %v3744 = vsub.f32 1.0, %v3743
    %v3745 = vmul.f32 %v3742, %v3744
    %v3746 = vadd.f32 %v3742, %v3745
    %vm3747 = vweird.f32 %v3740
    %vm3748 = vweird.f32 %v3742
    %vm3749 = vmor %vm3747, %vm3748
    %v3750 = vsel %vm3749, %v3742, %v3746
    %v3751 = vand.u32 2147483647, %v3740
    %vm3752 = vcmp.eq.f32.partialorder %v3751, 8.507059e+37
    %v3753 = vand.u32 %v3740, 2147483648
    %v3754 = vor.u32 1.1754944e-38, %v3753
    %v3755 = vsel %vm3752, %v3754, %v3750
    %v3756 = vmul.f32 1.0, %v3755
    %v3757 = vrcp.pop %v3741
    %v3758 = vmul.f32 %v3741, %v3757
    %v3759 = vsub.f32 1.0, %v3758
    %v3760 = vmul.f32 %v3757, %v3759
    %v3761 = vadd.f32 %v3757, %v3760
    %vm3762 = vweird.f32 %v3741
    %vm3763 = vweird.f32 %v3757
    %vm3764 = vmor %vm3762, %vm3763
    %v3765 = vsel %vm3764, %v3757, %v3761
    %v3766 = vand.u32 2147483647, %v3741
    %vm3767 = vcmp.eq.f32.partialorder %v3766, 8.507059e+37
    %v3768 = vand.u32 %v3741, 2147483648
    %v3769 = vor.u32 1.1754944e-38, %v3768
    %v3770 = vsel %vm3767, %v3769, %v3765
    %v3771 = vmul.f32 1.0, %v3770
    %v3772 = vtanh.pop %v3733
    %v3774 = vrot.slane %v3675, 6
    %v3776 = vmul.f32 %v3756, %v3774
    %v3777 = vmul.f32 %v3756, %v3772
    %3779 = vrot.lane.b32.xlu0 %v3777, 64
    %v3780 = vpop.permute.xlu0 %3779
    %v3782 = vadd.f32 %v3776, %v3780
    %v3783 = vtanh.pop %v3782
    %v3784 = vmul.f32 %v3771, %v3783
    %v3786 = vrot.slane %v3784, 4
    %3787 = vrot.lane.b32.xlu0 %v3786, 64
    %v3788 = vpop.permute.xlu0 %3787
    %v3789 = vsel %vm162, %v3788, 0
    %3791 = vmatpush.msra.mxu0 0.0
    %3792 = vmatpush.msra.mxu0 0.0
    %3793 = vmatpush.msra.mxu0 0.0
    %3794 = vmatpush.msra.mxu0 0.0
    %3795 = vmatpush.msra.mxu0 0.0
    %3796 = vmatpush.msra.mxu0 0.0
    %3797 = vmatpush.msra.mxu0 0.0
    %3798 = vmatpush.msra.mxu0 0.0
    %3799 = vmatpush.msra.mxu0 %v2153
    %3800 = vmatpush.msra.mxu0 %v2151
    %3801 = vmatpush.msra.mxu0 %v2149
    %3802 = vmatpush.msra.mxu0 %v2147
    %3803 = vmatpush.msra.mxu0 %v2145
    %3804 = vmatpush.msra.mxu0 %v2143
    %3805 = vmatpush.msra.mxu0 %v2141
    %3806 = vmatpush.msra.mxu0 %v2139
    %3807 = vmatmul.f32.gmra.mxu0 %v3789
    %v3808 = vpop.f32.mrf.mxu0
    %v3809 = vadd.f32 0.0, %v3808
    %3810 = vdwg.mxu0
    %3811 = vmatpush.msra.mxu0 0.0
    %3812 = vmatpush.msra.mxu0 0.0
    %3813 = vmatpush.msra.mxu0 0.0
    %3814 = vmatpush.msra.mxu0 0.0
    %3815 = vmatpush.msra.mxu0 0.0
    %3816 = vmatpush.msra.mxu0 0.0
    %3817 = vmatpush.msra.mxu0 0.0
    %3818 = vmatpush.msra.mxu0 0.0
    %3819 = vmatpush.msra.mxu0 %v2154
    %3820 = vmatpush.msra.mxu0 %v2152
    %3821 = vmatpush.msra.mxu0 %v2150
    %3822 = vmatpush.msra.mxu0 %v2148
    %3823 = vmatpush.msra.mxu0 %v2146
    %3824 = vmatpush.msra.mxu0 %v2144
    %3825 = vmatpush.msra.mxu0 %v2142
    %3826 = vmatpush.msra.mxu0 %v2140
    %3827 = vmatmul.f32.gmra.mxu0 %v3789
    %v3828 = vpop.f32.mrf.mxu0
    %v3829 = vadd.f32 0.0, %v3828
    %3830 = vdwg.mxu0
    %v3833 = vrot.slane %v3809, 2
    %v3834 = vrot.slane %v3829, 2
    %v3837 = vadd.f32 %v3570, %v3833
    %v3838 = vadd.f32 %v3571, %v3834
    %v3839 = vadd.f32 %v3837, %v2207
    %v3840 = vadd.f32 %v3838, %v2208
    %v3841 = vxor.u32 %v3839, 2147483648
    %v3842 = vxor.u32 %v3840, 2147483648
    %v3843 = vmul.f32 %v3841, 1.442695
    %v3844 = vpow.pop %v3843
    %v3845 = vmul.f32 %v3842, 1.442695
    %v3846 = vpow.pop %v3845
    %v3847 = vadd.f32 %v3844, 1.0
    %v3848 = vadd.f32 %v3846, 1.0
    %v3849 = vrcp.pop %v3847
    %v3850 = vmul.f32 %v3847, %v3849
    %v3851 = vsub.f32 1.0, %v3850
    %v3852 = vmul.f32 %v3849, %v3851
    %v3853 = vadd.f32 %v3849, %v3852
    %vm3854 = vweird.f32 %v3847
    %vm3855 = vweird.f32 %v3849
    %vm3856 = vmor %vm3854, %vm3855
    %v3857 = vsel %vm3856, %v3849, %v3853
    %v3858 = vand.u32 2147483647, %v3847
    %vm3859 = vcmp.eq.f32.partialorder %v3858, 8.507059e+37
    %v3860 = vand.u32 %v3847, 2147483648
    %v3861 = vor.u32 1.1754944e-38, %v3860
    %v3862 = vsel %vm3859, %v3861, %v3857
    %v3863 = vmul.f32 1.0, %v3862
    %v3864 = vrcp.pop %v3848
    %v3865 = vmul.f32 %v3848, %v3864
    %v3866 = vsub.f32 1.0, %v3865
    %v3867 = vmul.f32 %v3864, %v3866
    %v3868 = vadd.f32 %v3864, %v3867
    %vm3869 = vweird.f32 %v3848
    %vm3870 = vweird.f32 %v3864
    %vm3871 = vmor %vm3869, %vm3870
    %v3872 = vsel %vm3871, %v3864, %v3868
    %v3873 = vand.u32 2147483647, %v3848
    %vm3874 = vcmp.eq.f32.partialorder %v3873, 8.507059e+37
    %v3875 = vand.u32 %v3848, 2147483648
    %v3876 = vor.u32 1.1754944e-38, %v3875
    %v3877 = vsel %vm3874, %v3876, %v3872
    %v3878 = vmul.f32 1.0, %v3877
    %v3879 = vtanh.pop %v3840
    %v3881 = vrot.slane %v3782, 6
    %v3883 = vmul.f32 %v3863, %v3881
    %v3884 = vmul.f32 %v3863, %v3879
    %3886 = vrot.lane.b32.xlu0 %v3884, 64
    %v3887 = vpop.permute.xlu0 %3886
    %v3889 = vadd.f32 %v3883, %v3887
    %v3890 = vtanh.pop %v3889
    %v3891 = vmul.f32 %v3878, %v3890
    %v3892 = vld [vmem:[%s7] sm:$0xff]
    %v3893 = vld [vmem:[%s7 + $0x8] sm:$0xff]
    %v3894 = vld [vmem:[%s7 + $0x10] sm:$0xff]
    %v3895 = vld [vmem:[%s7 + $0x18] sm:$0xff]
    %v3896 = vld [vmem:[%s7 + $0x20] sm:$0xff]
    %v3897 = vld [vmem:[%s7 + $0x28] sm:$0xff]
    %v3898 = vld [vmem:[%s7 + $0x30] sm:$0xff]
    %v3899 = vld [vmem:[%s7 + $0x38] sm:$0xff]
    %v3900 = vld [vmem:[%s8] sm:$0x1]
    %v3902 = vperm.slane %v3900, 0
    %v3905 = vrot.slane %v3891, 6
    %3906 = vrot.lane.b32.xlu0 %v3905, 64
    %v3907 = vpop.permute.xlu0 %3906
    %v3908 = vsel %vm162, %v3907, 0
    %3910 = vmatpush.msra.mxu0 0.0
    %3911 = vmatpush.msra.mxu0 0.0
    %3912 = vmatpush.msra.mxu0 0.0
    %3913 = vmatpush.msra.mxu0 0.0
    %3914 = vmatpush.msra.mxu0 0.0
    %3915 = vmatpush.msra.mxu0 0.0
    %3916 = vmatpush.msra.mxu0 0.0
    %3917 = vmatpush.msra.mxu0 0.0
    %3918 = vmatpush.msra.mxu0 %v3899
    %3919 = vmatpush.msra.mxu0 %v3898
    %3920 = vmatpush.msra.mxu0 %v3897
    %3921 = vmatpush.msra.mxu0 %v3896
    %3922 = vmatpush.msra.mxu0 %v3895
    %3923 = vmatpush.msra.mxu0 %v3894
    %3924 = vmatpush.msra.mxu0 %v3893
    %3925 = vmatpush.msra.mxu0 %v3892
    %3926 = vmatmul.f32.gmra.mxu0 %v3908
    %v3927 = vpop.f32.mrf.mxu0
    %v3928 = vadd.f32 %v3902, %v3927
    %3929 = vdwg.mxu0
    %v3930 = vmax.f32 %v3928, 0.0
    %v3931 = vld [vmem:[%s9] sm:$0xff]
    %v3932 = vld [vmem:[%s9 + $0x8] sm:$0xff]
    %v3933 = vld [vmem:[%s9 + $0x10] sm:$0xff]
    %v3934 = vld [vmem:[%s9 + $0x18] sm:$0xff]
    %v3935 = vld [vmem:[%s9 + $0x20] sm:$0xff]
    %v3936 = vld [vmem:[%s9 + $0x28] sm:$0xff]
    %v3937 = vld [vmem:[%s9 + $0x30] sm:$0xff]
    %v3938 = vld [vmem:[%s9 + $0x38] sm:$0xff]
    %v3939 = vld [vmem:[#allocation3] sm:$0x1]
    %v3941 = vperm.slane %v3939, 0
    %v3944 = vsel %vm162, %v3930, 0
    %3946 = vmatpush.msra.mxu0 0.0
    %3947 = vmatpush.msra.mxu0 0.0
    %3948 = vmatpush.msra.mxu0 0.0
    %3949 = vmatpush.msra.mxu0 0.0
    %3950 = vmatpush.msra.mxu0 0.0
    %3951 = vmatpush.msra.mxu0 0.0
    %3952 = vmatpush.msra.mxu0 0.0
    %3953 = vmatpush.msra.mxu0 0.0
    %3954 = vmatpush.msra.mxu0 %v3938
    %3955 = vmatpush.msra.mxu0 %v3937
    %3956 = vmatpush.msra.mxu0 %v3936
    %3957 = vmatpush.msra.mxu0 %v3935
    %3958 = vmatpush.msra.mxu0 %v3934
    %3959 = vmatpush.msra.mxu0 %v3933
    %3960 = vmatpush.msra.mxu0 %v3932
    %3961 = vmatpush.msra.mxu0 %v3931
    %3962 = vmatmul.f32.gmra.mxu0 %v3944
    %v3963 = vpop.f32.mrf.mxu0
    %v3964 = vadd.f32 %v3941, %v3963
    %3965 = vdwg.mxu0
    %vm3966 = vcmask 1024
    %3967 = vst.msk [vmem:[%s11] sm:$0x3] %vm3966, %v3964
    // Predicated region
    $region58: #{tpu_custom_call.1} parent=1 // pred_check
      _
    $region59: #{tpu_custom_call.1} parent=1 // pred_check_branch
      %3969 = sbr.rel (0) target = $region61
    $region60: #{tpu_custom_call.1} parent=1 // pred_region
      _
    $region61: #{tpu_custom_call.1} parent=1 // pred_fallthru
      _
    // Predicated region
    $region62: #{tpu_custom_call.1} parent=1 // pred_check
      _
    $region63: #{tpu_custom_call.1} parent=1 // pred_check_branch
      %3971 = sbr.rel (0) target = $region65
    $region64: #{tpu_custom_call.1} parent=1 // pred_region
      _
    $region65: #{tpu_custom_call.1} parent=1 // pred_fallthru
      _
    %3972 = vsyncpa [#allocation5], 1
    %3973 = vsyncpa [#allocation7], 1

</llo_original>
